<compile_context>
chip_gen: v7x
topology: tpu7x:2x2x1
jax: 0.10.0
libtpu: 0.0.40
codegen_flags: <defaults>
</compile_context>

<pallas_src>
import functools
import math

import jax
import jax.numpy as jnp
import numpy as np
from jax.experimental import pallas as pl
from jax.experimental.pallas import tpu as pltpu

LN_EPS = 1e-5            # torch.nn.LayerNorm default
BF16 = jnp.bfloat16

WEIGHT_ORDER = (
    "ln1_w", "ln1_b",
    "p1_wt", "p1_b", "p2_wt", "p2_b",
    "q1_wt", "k1_wt", "v1_wt", "q2_wt", "k2_wt", "v2_wt",
    "out_wt", "out_b", "oln_w", "oln_b",
    "ln2_w", "ln2_b",
    "m1_wt", "m1_b", "m2_wt", "m2_b",
)


# --------------------------------------------------------------------------- #
# small numerics helpers (usable both inside the kernel and in the reference)
# --------------------------------------------------------------------------- #
def _layernorm(x, w, b):
    mu = jnp.mean(x, axis=-1, keepdims=True)
    var = jnp.mean((x - mu) ** 2, axis=-1, keepdims=True)
    return (x - mu) * jax.lax.rsqrt(var + LN_EPS) * w + b


def _softmax(s):
    # exact divide (see review: the result feeds softmax(s1) - softmax(s2))
    e = jnp.exp(s - jnp.max(s, axis=-1, keepdims=True))
    return e / jnp.sum(e, axis=-1, keepdims=True)


def _erf_poly(x):
    # Abramowitz & Stegun 7.1.26, max abs error ~1.5e-7.  Uses only exp / mul /
    # add / divide / select, all of which have guaranteed Mosaic lowerings.
    p = 0.3275911
    a1, a2, a3, a4, a5 = (0.254829592, -0.284496736, 1.421413741,
                          -1.453152027, 1.061405429)
    ax = jnp.where(x >= 0.0, x, -x)
    t = 1.0 / (1.0 + p * ax)
    poly = ((((a5 * t + a4) * t + a3) * t + a2) * t + a1) * t
    y = 1.0 - poly * jnp.exp(-ax * ax)
    return jnp.where(x >= 0.0, y, -y)


def _gelu_exact(x):
    # torch.nn.GELU() default (exact erf form)
    return 0.5 * x * (1.0 + _erf_poly(x * np.float32(1.0 / math.sqrt(2.0))))


# --------------------------------------------------------------------------- #
# kernel
# --------------------------------------------------------------------------- #
def transformer_layer_kernel(
    x_ref,
    ln1_w, ln1_b,
    p1_wt, p1_b, p2_wt, p2_b,
    q1_wt, k1_wt, v1_wt, q2_wt, k2_wt, v2_wt,
    out_wt, out_b, oln_w, oln_b,
    ln2_w, ln2_b,
    m1_wt, m1_b, m2_wt, m2_b,
    o_ref,
    heads_ref,                       # (S, D) bf16 VMEM scratch: staged head outputs
    *, num_heads,
):
    xb = x_ref[0]                    # (S, D) f32 slice for this batch element
    S, D = xb.shape
    dh = D // num_heads
    half = D // 2

    def dot(a, w):                   # bf16 x bf16 inputs, f32 MXU accumulation
        return jnp.dot(a, w, preferred_element_type=jnp.float32)

    # ---- norm1 (SVD-adaptation bias pre-folded into ln1_b — exact, see header) ----
    ax = _layernorm(xb, ln1_w[...], ln1_b[...])
    axb = ax.astype(BF16)

    # ---- proj1 / proj2 on the two halves ----
    x1 = (dot(axb[:, :half], p1_wt[...]) + p1_b[...]).astype(BF16)
    x2 = (dot(axb[:, half:], p2_wt[...]) + p2_b[...]).astype(BF16)

    # ---- q/k/v projections (no bias; 1/sqrt(dh) scale folded into q weights) ----
    q1 = dot(x1, q1_wt[...]).astype(BF16)
    k1 = dot(x1, k1_wt[...]).astype(BF16)
    v1 = dot(x1, v1_wt[...])
    q2 = dot(x2, q2_wt[...]).astype(BF16)
    k2 = dot(x2, k2_wt[...]).astype(BF16)
    v2 = dot(x2, v2_wt[...])
    v_avg = (0.5 * (v1 + v2)).astype(BF16)    # diff_attn @ mean(v1,v2) — exact refactor

    # ---- differential attention, head by head; stage results in VMEM scratch ----
    # (static unroll is fine for num_heads <= 4; see TODO(synk) for larger H)
    for hh in range(num_heads):
        sl = slice(hh * dh, (hh + 1) * dh)
        s1 = jnp.einsum("qd,kd->qk", q1[:, sl], k1[:, sl],
                        preferred_element_type=jnp.float32)
        s2 = jnp.einsum("qd,kd->qk", q2[:, sl], k2[:, sl],
                        preferred_element_type=jnp.float32)
        diff = (_softmax(s1) - _softmax(s2)).astype(BF16)   # dropout = identity (eval)
        heads_ref[:, sl] = dot(diff, v_avg[:, sl]).astype(BF16)

    # ---- ONE full-contraction output projection + bias + LayerNorm (to_out) ----
    acc = dot(heads_ref[...], out_wt[...])
    o = _layernorm(acc + out_b[...], oln_w[...], oln_b[...])

    # ---- residual 1 ----
    x_mid = xb + o

    # ---- MLP: LN -> Linear -> exact GELU -> Linear (dropouts = identity) ----
    h2 = _layernorm(x_mid, ln2_w[...], ln2_b[...])
    m = dot(h2.astype(BF16), m1_wt[...]) + m1_b[...]
    m = _gelu_exact(m)
    m = dot(m.astype(BF16), m2_wt[...]) + m2_b[...]

    o_ref[0] = (x_mid + m).astype(o_ref.dtype)


# --------------------------------------------------------------------------- #
# parameters
# --------------------------------------------------------------------------- #
def make_params(key, dim, num_heads, rank, mlp_ratio):
    """Deterministic synthetic parameters (shapes per the module's __init__).
    Linear weights are stored already transposed to (in, out) for kernel use."""
    ks = jax.random.split(key, 16)
    n = lambda k, shape, s=0.05: s * jax.random.normal(k, shape, dtype=jnp.float32)
    half, hid = dim // 2, dim * mlp_ratio
    return dict(
        sigma=jnp.float32(0.1),
        U=jax.random.normal(ks[0], (dim, rank), dtype=jnp.float32),
        V=jax.random.normal(ks[1], (rank, dim), dtype=jnp.float32),
        ln1_w=jnp.ones((1, dim), jnp.float32), ln1_b=jnp.zeros((1, dim), jnp.float32),
        p1_wt=n(ks[2], (half, dim)), p1_b=n(ks[3], (1, dim)),
        p2_wt=n(ks[4], (half, dim)), p2_b=n(ks[5], (1, dim)),
        qkv1_wt=n(ks[6], (dim, 3 * dim)),
        qkv2_wt=n(ks[7], (dim, 3 * dim)),
        out_wt=n(ks[8], (dim, dim)), out_b=n(ks[9], (1, dim)),
        oln_w=jnp.ones((1, dim), jnp.float32), oln_b=jnp.zeros((1, dim), jnp.float32),
        ln2_w=jnp.ones((1, dim), jnp.float32), ln2_b=jnp.zeros((1, dim), jnp.float32),
        m1_wt=n(ks[10], (dim, hid)), m1_b=n(ks[11], (1, hid)),
        m2_wt=n(ks[12], (hid, dim)), m2_b=n(ks[13], (1, dim)),
    )


def svd_adapt_bias(P, rank, z_vector=None):
    """The (1, D) SVD-adaptation vector added to every token (module semantics)."""
    sigma, U, V = P["sigma"], P["U"], P["V"]
    if z_vector is None:
        svd = sigma * (U @ V)                        # (D, D)
    else:
        z = z_vector[:rank] if z_vector.shape[0] > rank else z_vector
        svd = U @ ((sigma * z)[:, None] * V)         # (D, D)
    return svd.sum(axis=-1).reshape(1, -1)           # (1, D)


def prepare_params(P, num_heads, rank, z_vector=None):
    """Fold constant parameter math once, cast matmul weights to bf16."""
    D = P["ln1_w"].shape[-1]
    dh = D // num_heads
    scale = jnp.float32(1.0 / math.sqrt(dh))
    svd_b = svd_adapt_bias(P, rank, z_vector)
    bf = lambda w: w.astype(BF16)
    return dict(
        ln1_w=P["ln1_w"], ln1_b=P["ln1_b"] + svd_b,
        p1_wt=bf(P["p1_wt"]), p1_b=P["p1_b"],
        p2_wt=bf(P["p2_wt"]), p2_b=P["p2_b"],
        q1_wt=bf(P["qkv1_wt"][:, :D] * scale),
        k1_wt=bf(P["qkv1_wt"][:, D:2 * D]),
        v1_wt=bf(P["qkv1_wt"][:, 2 * D:]),
        q2_wt=bf(P["qkv2_wt"][:, :D] * scale),
        k2_wt=bf(P["qkv2_wt"][:, D:2 * D]),
        v2_wt=bf(P["qkv2_wt"][:, 2 * D:]),
        out_wt=bf(P["out_wt"]), out_b=P["out_b"],
        oln_w=P["oln_w"], oln_b=P["oln_b"],
        ln2_w=P["ln2_w"], ln2_b=P["ln2_b"],
        m1_wt=bf(P["m1_wt"]), m1_b=P["m1_b"],
        m2_wt=bf(P["m2_wt"]), m2_b=P["m2_b"],
    )


# --------------------------------------------------------------------------- #
# wrapper
# --------------------------------------------------------------------------- #
def _weight_spec(shape):
    """Grid-invariant weight block: single-buffered if this build supports it."""
    index_map = lambda b: (0,) * len(shape)
    buffered = getattr(pl, "Buffered", None)
    if buffered is not None:
        try:
            return pl.BlockSpec(shape, index_map, pipeline_mode=buffered(1))
        except TypeError:   # older BlockSpec without pipeline_mode
            pass
    return pl.BlockSpec(shape, index_map)


def _vmem_limit_bytes(weights, S, D, hid):
    wbytes = sum(int(np.prod(w.shape)) * w.dtype.itemsize for w in weights)
    io = 2 * S * D * 4 + 2 * S * D * 2                       # pipelined x / out blocks
    act = 4 * S * (14 * D + hid) + 4 * 2 * S * S + 2 * S * D  # f32 temps + scores + scratch
    budget = wbytes + io + act
    return int(min(64 << 20, max(2 * budget + (4 << 20), 32 << 20)))


def transformer_layer_svd(x, P, num_heads, rank, z_vector=None, out_dtype=BF16):
    """Mirrors TransformerLayerSVD.forward (eval mode). Returns (out, None)."""
    B, S, D = x.shape
    W = prepare_params(P, num_heads, rank, z_vector)
    weights = [W[k] for k in WEIGHT_ORDER]
    hid = W["m1_wt"].shape[1]

    in_specs = [pl.BlockSpec((1, S, D), lambda b: (b, 0, 0))]
    in_specs += [_weight_spec(w.shape) for w in weights]

    wbytes = sum(int(np.prod(w.shape)) * w.dtype.itemsize for w in weights)
    cost = pl.CostEstimate(
        flops=int(B * (32 * S * D * D + 6 * S * S * D)),
        transcendentals=int(B * S * (2 * num_heads * S + hid)),
        bytes_accessed=int(x.size * x.dtype.itemsize
                           + B * S * D * np.dtype(out_dtype).itemsize + wbytes),
    )

    kernel = functools.partial(transformer_layer_kernel, num_heads=num_heads)
    out = pl.pallas_call(
        kernel,
        out_shape=jax.ShapeDtypeStruct((B, S, D), out_dtype),
        grid=(B,),
        in_specs=in_specs,
        out_specs=pl.BlockSpec((1, S, D), lambda b: (b, 0, 0)),
        scratch_shapes=[pltpu.VMEM((S, D), BF16)],
        compiler_params=pltpu.CompilerParams(
            dimension_semantics=("parallel",),
            vmem_limit_bytes=_vmem_limit_bytes(weights, S, D, hid),
        ),
        cost_estimate=cost,
    )(x, *weights)
    return out, None            # attn_maps is always None in the reference module


# --------------------------------------------------------------------------- #
# pure-JAX reference (same folded params, same bf16-input / f32-acc matmuls)
# --------------------------------------------------------------------------- #
def reference_jax(x, W, num_heads):
    B, S, D = x.shape
    dh = D // num_heads
    bf = lambda t: t.astype(BF16)
    mm = lambda a, w: jnp.einsum("bsk,kn->bsn", bf(a), w,
                                 preferred_element_type=jnp.float32)

    def ln(v, w, b):
        mu = v.mean(-1, keepdims=True)
        var = ((v - mu) ** 2).mean(-1, keepdims=True)
        return (v - mu) * jax.lax.rsqrt(var + LN_EPS) * w + b

    h = ln(x, W["ln1_w"][0], W["ln1_b"][0])
    x1 = mm(h[..., : D // 2], W["p1_wt"]) + W["p1_b"][0]
    x2 = mm(h[..., D // 2:], W["p2_wt"]) + W["p2_b"][0]
    q1 = mm(x1, W["q1_wt"]); k1 = mm(x1, W["k1_wt"]); v1 = mm(x1, W["v1_wt"])
    q2 = mm(x2, W["q2_wt"]); k2 = mm(x2, W["k2_wt"]); v2 = mm(x2, W["v2_wt"])
    sh = lambda t: t.reshape(B, S, num_heads, dh).transpose(0, 2, 1, 3)
    q1, k1, q2, k2 = map(sh, (q1, k1, q2, k2))
    v_avg = sh(0.5 * (v1 + v2))
    s1 = jnp.einsum("bhqd,bhkd->bhqk", bf(q1), bf(k1),
                    preferred_element_type=jnp.float32)
    s2 = jnp.einsum("bhqd,bhkd->bhqk", bf(q2), bf(k2),
                    preferred_element_type=jnp.float32)
    diff = jax.nn.softmax(s1, axis=-1) - jax.nn.softmax(s2, axis=-1)
    o = jnp.einsum("bhqk,bhkd->bhqd", bf(diff), bf(v_avg),
                   preferred_element_type=jnp.float32)
    o = o.transpose(0, 2, 1, 3).reshape(B, S, D)
    o = mm(o, W["out_wt"]) + W["out_b"][0]
    o = ln(o, W["oln_w"][0], W["oln_b"][0])
    xm = x + o
    h2 = ln(xm, W["ln2_w"][0], W["ln2_b"][0])
    m = mm(h2, W["m1_wt"]) + W["m1_b"][0]
    m = jax.nn.gelu(m, approximate=False)
    m = mm(m, W["m2_wt"]) + W["m2_b"][0]
    return xm + m


# --------------------------------------------------------------------------- #
# demo / self-test
# --------------------------------------------------------------------------- #
if __name__ == "__main__":
    B, S, D = 2, 16, 128            # small, TPU-layout-friendly (D = one lane width)
    num_heads, rank, mlp_ratio = 4, 4, 4

    key = jax.random.PRNGKey(0)
    kx, kz, kp = jax.random.split(key, 3)
    x = jax.random.normal(kx, (B, S, D), dtype=jnp.float32)
    z_vec = jax.random.normal(kz, (8,), dtype=jnp.float32)   # longer than rank -> sliced
    P = make_params(kp, D, num_heads, rank, mlp_ratio)

    # bf16 matmul inputs + bf16 output => relaxed tolerance vs the f32 reference
    TOL = dict(rtol=2e-2, atol=2e-2)

    # path 1: z_vector = None
    out0, maps0 = transformer_layer_svd(x, P, num_heads, rank, z_vector=None)
    out0 = jax.block_until_ready(out0)
    ref0 = jax.block_until_ready(
        reference_jax(x, prepare_params(P, num_heads, rank, None), num_heads))
    np.testing.assert_allclose(np.asarray(out0.astype(jnp.float32)),
                               np.asarray(ref0), **TOL)

    # path 2: with z_vector
    out1, maps1 = transformer_layer_svd(x, P, num_heads, rank, z_vector=z_vec)
    out1 = jax.block_until_ready(out1)
    ref1 = jax.block_until_ready(
        reference_jax(x, prepare_params(P, num_heads, rank, z_vec), num_heads))
    np.testing.assert_allclose(np.asarray(out1.astype(jnp.float32)),
                               np.asarray(ref1), **TOL)

    assert out0.shape == (B, S, D) and out1.shape == (B, S, D)
    assert maps0 is None and maps1 is None
    print("KERNEL_OK")
</pallas_src>

<mosaic_0001>
module attributes {stable_mosaic.version = 11 : i64} {
  func.func @transformer_layer_kernel(%arg0: i32, %arg1: memref<1x16x128xf32, #tpu.memory_space<vmem>>, %arg2: memref<1x128xf32, #tpu.memory_space<vmem>>, %arg3: memref<1x128xf32, #tpu.memory_space<vmem>>, %arg4: memref<64x128xbf16, #tpu.memory_space<vmem>>, %arg5: memref<1x128xf32, #tpu.memory_space<vmem>>, %arg6: memref<64x128xbf16, #tpu.memory_space<vmem>>, %arg7: memref<1x128xf32, #tpu.memory_space<vmem>>, %arg8: memref<128x128xbf16, #tpu.memory_space<vmem>>, %arg9: memref<128x128xbf16, #tpu.memory_space<vmem>>, %arg10: memref<128x128xbf16, #tpu.memory_space<vmem>>, %arg11: memref<128x128xbf16, #tpu.memory_space<vmem>>, %arg12: memref<128x128xbf16, #tpu.memory_space<vmem>>, %arg13: memref<128x128xbf16, #tpu.memory_space<vmem>>, %arg14: memref<128x128xbf16, #tpu.memory_space<vmem>>, %arg15: memref<1x128xf32, #tpu.memory_space<vmem>>, %arg16: memref<1x128xf32, #tpu.memory_space<vmem>>, %arg17: memref<1x128xf32, #tpu.memory_space<vmem>>, %arg18: memref<1x128xf32, #tpu.memory_space<vmem>>, %arg19: memref<1x128xf32, #tpu.memory_space<vmem>>, %arg20: memref<128x512xbf16, #tpu.memory_space<vmem>>, %arg21: memref<1x512xf32, #tpu.memory_space<vmem>>, %arg22: memref<512x128xbf16, #tpu.memory_space<vmem>>, %arg23: memref<1x128xf32, #tpu.memory_space<vmem>>, %arg24: memref<1x16x128xbf16, #tpu.memory_space<vmem>>, %arg25: memref<16x128xbf16, #tpu.memory_space<vmem>>) attributes {dimension_semantics = [#tpu.dimension_semantics<parallel>], iteration_bounds = array<i64: 2>, scalar_prefetch = 0 : i64, scratch_operands = 1 : i64, tpu.core_type = #tpu.core_type<tc>, window_params = [{transform_indices = @transform_0, window_bounds = array<i64: 1, 16, 128>}, {pipeline_mode = #tpu.pipeline_mode<synchronous>, transform_indices = @transform_1, window_bounds = array<i64: 1, 128>}, {pipeline_mode = #tpu.pipeline_mode<synchronous>, transform_indices = @transform_2, window_bounds = array<i64: 1, 128>}, {pipeline_mode = #tpu.pipeline_mode<synchronous>, transform_indices = @transform_3, window_bounds = array<i64: 64, 128>}, {pipeline_mode = #tpu.pipeline_mode<synchronous>, transform_indices = @transform_4, window_bounds = array<i64: 1, 128>}, {pipeline_mode = #tpu.pipeline_mode<synchronous>, transform_indices = @transform_5, window_bounds = array<i64: 64, 128>}, {pipeline_mode = #tpu.pipeline_mode<synchronous>, transform_indices = @transform_6, window_bounds = array<i64: 1, 128>}, {pipeline_mode = #tpu.pipeline_mode<synchronous>, transform_indices = @transform_7, window_bounds = array<i64: 128, 128>}, {pipeline_mode = #tpu.pipeline_mode<synchronous>, transform_indices = @transform_8, window_bounds = array<i64: 128, 128>}, {pipeline_mode = #tpu.pipeline_mode<synchronous>, transform_indices = @transform_9, window_bounds = array<i64: 128, 128>}, {pipeline_mode = #tpu.pipeline_mode<synchronous>, transform_indices = @transform_10, window_bounds = array<i64: 128, 128>}, {pipeline_mode = #tpu.pipeline_mode<synchronous>, transform_indices = @transform_11, window_bounds = array<i64: 128, 128>}, {pipeline_mode = #tpu.pipeline_mode<synchronous>, transform_indices = @transform_12, window_bounds = array<i64: 128, 128>}, {pipeline_mode = #tpu.pipeline_mode<synchronous>, transform_indices = @transform_13, window_bounds = array<i64: 128, 128>}, {pipeline_mode = #tpu.pipeline_mode<synchronous>, transform_indices = @transform_14, window_bounds = array<i64: 1, 128>}, {pipeline_mode = #tpu.pipeline_mode<synchronous>, transform_indices = @transform_15, window_bounds = array<i64: 1, 128>}, {pipeline_mode = #tpu.pipeline_mode<synchronous>, transform_indices = @transform_16, window_bounds = array<i64: 1, 128>}, {pipeline_mode = #tpu.pipeline_mode<synchronous>, transform_indices = @transform_17, window_bounds = array<i64: 1, 128>}, {pipeline_mode = #tpu.pipeline_mode<synchronous>, transform_indices = @transform_18, window_bounds = array<i64: 1, 128>}, {pipeline_mode = #tpu.pipeline_mode<synchronous>, transform_indices = @transform_19, window_bounds = array<i64: 128, 512>}, {pipeline_mode = #tpu.pipeline_mode<synchronous>, transform_indices = @transform_20, window_bounds = array<i64: 1, 512>}, {pipeline_mode = #tpu.pipeline_mode<synchronous>, transform_indices = @transform_21, window_bounds = array<i64: 512, 128>}, {pipeline_mode = #tpu.pipeline_mode<synchronous>, transform_indices = @transform_22, window_bounds = array<i64: 1, 128>}, {transform_indices = @transform_23, window_bounds = array<i64: 1, 16, 128>}]} {
    %c0 = arith.constant 0 : index
    %c0_0 = arith.constant 0 : index
    %c0_1 = arith.constant 0 : index
    %0 = vector.load %arg1[%c0, %c0_0, %c0_1] : memref<1x16x128xf32, #tpu.memory_space<vmem>>, vector<1x16x128xf32>
    %1 = vector.shape_cast %0 : vector<1x16x128xf32> to vector<16x128xf32>
    %c0_2 = arith.constant 0 : index
    %c0_3 = arith.constant 0 : index
    %2 = vector.load %arg2[%c0_2, %c0_3] : memref<1x128xf32, #tpu.memory_space<vmem>>, vector<1x128xf32>
    %c0_4 = arith.constant 0 : index
    %c0_5 = arith.constant 0 : index
    %3 = vector.load %arg3[%c0_4, %c0_5] : memref<1x128xf32, #tpu.memory_space<vmem>>, vector<1x128xf32>
    %cst = arith.constant dense<0.000000e+00> : vector<16xf32>
    %4 = vector.multi_reduction <add>, %1, %cst [1] : vector<16x128xf32> to vector<16xf32>
    %5 = vector.shape_cast %4 : vector<16xf32> to vector<16x1xf32>
    %cst_6 = arith.constant 1.280000e+02 : f32
    %6 = vector.broadcast %cst_6 : f32 to vector<16x1xf32>
    %7 = arith.divf %5, %6 : vector<16x1xf32>
    %8 = vector.broadcast %7 : vector<16x1xf32> to vector<16x128xf32>
    %9 = arith.subf %1, %8 : vector<16x128xf32>
    %10 = arith.mulf %9, %9 : vector<16x128xf32>
    %cst_7 = arith.constant dense<0.000000e+00> : vector<16xf32>
    %11 = vector.multi_reduction <add>, %10, %cst_7 [1] : vector<16x128xf32> to vector<16xf32>
    %12 = vector.shape_cast %11 : vector<16xf32> to vector<16x1xf32>
    %cst_8 = arith.constant 1.280000e+02 : f32
    %13 = vector.broadcast %cst_8 : f32 to vector<16x1xf32>
    %14 = arith.divf %12, %13 : vector<16x1xf32>
    %15 = vector.broadcast %7 : vector<16x1xf32> to vector<16x128xf32>
    %16 = arith.subf %1, %15 : vector<16x128xf32>
    %cst_9 = arith.constant 9.99999974E-6 : f32
    %17 = vector.broadcast %cst_9 : f32 to vector<16x1xf32>
    %18 = arith.addf %14, %17 : vector<16x1xf32>
    %19 = math.rsqrt %18 : vector<16x1xf32>
    %20 = vector.broadcast %19 : vector<16x1xf32> to vector<16x128xf32>
    %21 = arith.mulf %16, %20 : vector<16x128xf32>
    %22 = vector.broadcast %2 : vector<1x128xf32> to vector<16x128xf32>
    %23 = arith.mulf %21, %22 : vector<16x128xf32>
    %24 = vector.broadcast %3 : vector<1x128xf32> to vector<16x128xf32>
    %25 = arith.addf %23, %24 : vector<16x128xf32>
    %26 = arith.truncf %25 : vector<16x128xf32> to vector<16x128xbf16>
    %27 = vector.extract_strided_slice %26 {offsets = [0, 0], sizes = [16, 64], strides = [1, 1]} : vector<16x128xbf16> to vector<16x64xbf16>
    %c0_10 = arith.constant 0 : index
    %c0_11 = arith.constant 0 : index
    %28 = vector.load %arg4[%c0_10, %c0_11] : memref<64x128xbf16, #tpu.memory_space<vmem>>, vector<64x128xbf16>
    %cst_12 = arith.constant dense<0.000000e+00> : vector<16x128xf32>
    %29 = tpu.matmul %27, %28, %cst_12 {dimension_numbers = #tpu.dot_dimension_numbers<[1], [0], [0], [1], [0, 0, 1, 1], [], []>} : vector<16x64xbf16>, vector<64x128xbf16>, vector<16x128xf32> -> vector<16x128xf32>
    %c0_13 = arith.constant 0 : index
    %c0_14 = arith.constant 0 : index
    %30 = vector.load %arg5[%c0_13, %c0_14] : memref<1x128xf32, #tpu.memory_space<vmem>>, vector<1x128xf32>
    %31 = vector.broadcast %30 : vector<1x128xf32> to vector<16x128xf32>
    %32 = arith.addf %29, %31 : vector<16x128xf32>
    %33 = arith.truncf %32 : vector<16x128xf32> to vector<16x128xbf16>
    %34 = vector.extract_strided_slice %26 {offsets = [0, 64], sizes = [16, 64], strides = [1, 1]} : vector<16x128xbf16> to vector<16x64xbf16>
    %c0_15 = arith.constant 0 : index
    %c0_16 = arith.constant 0 : index
    %35 = vector.load %arg6[%c0_15, %c0_16] : memref<64x128xbf16, #tpu.memory_space<vmem>>, vector<64x128xbf16>
    %cst_17 = arith.constant dense<0.000000e+00> : vector<16x128xf32>
    %36 = tpu.matmul %34, %35, %cst_17 {dimension_numbers = #tpu.dot_dimension_numbers<[1], [0], [0], [1], [0, 0, 1, 1], [], []>} : vector<16x64xbf16>, vector<64x128xbf16>, vector<16x128xf32> -> vector<16x128xf32>
    %c0_18 = arith.constant 0 : index
    %c0_19 = arith.constant 0 : index
    %37 = vector.load %arg7[%c0_18, %c0_19] : memref<1x128xf32, #tpu.memory_space<vmem>>, vector<1x128xf32>
    %38 = vector.broadcast %37 : vector<1x128xf32> to vector<16x128xf32>
    %39 = arith.addf %36, %38 : vector<16x128xf32>
    %40 = arith.truncf %39 : vector<16x128xf32> to vector<16x128xbf16>
    %c0_20 = arith.constant 0 : index
    %c0_21 = arith.constant 0 : index
    %41 = vector.load %arg8[%c0_20, %c0_21] : memref<128x128xbf16, #tpu.memory_space<vmem>>, vector<128x128xbf16>
    %cst_22 = arith.constant dense<0.000000e+00> : vector<16x128xf32>
    %42 = tpu.matmul %33, %41, %cst_22 {dimension_numbers = #tpu.dot_dimension_numbers<[1], [0], [0], [1], [0, 0, 1, 1], [], []>} : vector<16x128xbf16>, vector<128x128xbf16>, vector<16x128xf32> -> vector<16x128xf32>
    %43 = arith.truncf %42 : vector<16x128xf32> to vector<16x128xbf16>
    %c0_23 = arith.constant 0 : index
    %c0_24 = arith.constant 0 : index
    %44 = vector.load %arg9[%c0_23, %c0_24] : memref<128x128xbf16, #tpu.memory_space<vmem>>, vector<128x128xbf16>
    %cst_25 = arith.constant dense<0.000000e+00> : vector<16x128xf32>
    %45 = tpu.matmul %33, %44, %cst_25 {dimension_numbers = #tpu.dot_dimension_numbers<[1], [0], [0], [1], [0, 0, 1, 1], [], []>} : vector<16x128xbf16>, vector<128x128xbf16>, vector<16x128xf32> -> vector<16x128xf32>
    %46 = arith.truncf %45 : vector<16x128xf32> to vector<16x128xbf16>
    %c0_26 = arith.constant 0 : index
    %c0_27 = arith.constant 0 : index
    %47 = vector.load %arg10[%c0_26, %c0_27] : memref<128x128xbf16, #tpu.memory_space<vmem>>, vector<128x128xbf16>
    %cst_28 = arith.constant dense<0.000000e+00> : vector<16x128xf32>
    %48 = tpu.matmul %33, %47, %cst_28 {dimension_numbers = #tpu.dot_dimension_numbers<[1], [0], [0], [1], [0, 0, 1, 1], [], []>} : vector<16x128xbf16>, vector<128x128xbf16>, vector<16x128xf32> -> vector<16x128xf32>
    %c0_29 = arith.constant 0 : index
    %c0_30 = arith.constant 0 : index
    %49 = vector.load %arg11[%c0_29, %c0_30] : memref<128x128xbf16, #tpu.memory_space<vmem>>, vector<128x128xbf16>
    %cst_31 = arith.constant dense<0.000000e+00> : vector<16x128xf32>
    %50 = tpu.matmul %40, %49, %cst_31 {dimension_numbers = #tpu.dot_dimension_numbers<[1], [0], [0], [1], [0, 0, 1, 1], [], []>} : vector<16x128xbf16>, vector<128x128xbf16>, vector<16x128xf32> -> vector<16x128xf32>
    %51 = arith.truncf %50 : vector<16x128xf32> to vector<16x128xbf16>
    %c0_32 = arith.constant 0 : index
    %c0_33 = arith.constant 0 : index
    %52 = vector.load %arg12[%c0_32, %c0_33] : memref<128x128xbf16, #tpu.memory_space<vmem>>, vector<128x128xbf16>
    %cst_34 = arith.constant dense<0.000000e+00> : vector<16x128xf32>
    %53 = tpu.matmul %40, %52, %cst_34 {dimension_numbers = #tpu.dot_dimension_numbers<[1], [0], [0], [1], [0, 0, 1, 1], [], []>} : vector<16x128xbf16>, vector<128x128xbf16>, vector<16x128xf32> -> vector<16x128xf32>
    %54 = arith.truncf %53 : vector<16x128xf32> to vector<16x128xbf16>
    %c0_35 = arith.constant 0 : index
    %c0_36 = arith.constant 0 : index
    %55 = vector.load %arg13[%c0_35, %c0_36] : memref<128x128xbf16, #tpu.memory_space<vmem>>, vector<128x128xbf16>
    %cst_37 = arith.constant dense<0.000000e+00> : vector<16x128xf32>
    %56 = tpu.matmul %40, %55, %cst_37 {dimension_numbers = #tpu.dot_dimension_numbers<[1], [0], [0], [1], [0, 0, 1, 1], [], []>} : vector<16x128xbf16>, vector<128x128xbf16>, vector<16x128xf32> -> vector<16x128xf32>
    %57 = arith.addf %48, %56 : vector<16x128xf32>
    %cst_38 = arith.constant 5.000000e-01 : f32
    %58 = vector.broadcast %cst_38 : f32 to vector<16x128xf32>
    %59 = arith.mulf %58, %57 : vector<16x128xf32>
    %60 = arith.truncf %59 : vector<16x128xf32> to vector<16x128xbf16>
    %61 = vector.extract_strided_slice %43 {offsets = [0, 0], sizes = [16, 32], strides = [1, 1]} : vector<16x128xbf16> to vector<16x32xbf16>
    %62 = vector.extract_strided_slice %46 {offsets = [0, 0], sizes = [16, 32], strides = [1, 1]} : vector<16x128xbf16> to vector<16x32xbf16>
    "tpu.trace_start"() <{level = 10 : i32, message = "qd,kd->qk"}> : () -> ()
    %cst_39 = arith.constant dense<0.000000e+00> : vector<16x16xf32>
    %63 = tpu.matmul %61, %62, %cst_39 {dimension_numbers = #tpu.dot_dimension_numbers<[1], [1], [0], [0], [0, 0, 1, 0], [], []>} : vector<16x32xbf16>, vector<16x32xbf16>, vector<16x16xf32> -> vector<16x16xf32>
    "tpu.trace_stop"() : () -> ()
    %64 = vector.extract_strided_slice %51 {offsets = [0, 0], sizes = [16, 32], strides = [1, 1]} : vector<16x128xbf16> to vector<16x32xbf16>
    %65 = vector.extract_strided_slice %54 {offsets = [0, 0], sizes = [16, 32], strides = [1, 1]} : vector<16x128xbf16> to vector<16x32xbf16>
    "tpu.trace_start"() <{level = 10 : i32, message = "qd,kd->qk"}> : () -> ()
    %cst_40 = arith.constant dense<0.000000e+00> : vector<16x16xf32>
    %66 = tpu.matmul %64, %65, %cst_40 {dimension_numbers = #tpu.dot_dimension_numbers<[1], [1], [0], [0], [0, 0, 1, 0], [], []>} : vector<16x32xbf16>, vector<16x32xbf16>, vector<16x16xf32> -> vector<16x16xf32>
    "tpu.trace_stop"() : () -> ()
    %cst_41 = arith.constant dense<0xFF800000> : vector<16xf32>
    %67 = vector.multi_reduction <maximumf>, %63, %cst_41 [1] : vector<16x16xf32> to vector<16xf32>
    %68 = vector.shape_cast %67 : vector<16xf32> to vector<16x1xf32>
    %69 = vector.broadcast %68 : vector<16x1xf32> to vector<16x16xf32>
    %70 = arith.subf %63, %69 : vector<16x16xf32>
    %71 = math.exp %70 : vector<16x16xf32>
    %cst_42 = arith.constant dense<0.000000e+00> : vector<16xf32>
    %72 = vector.multi_reduction <add>, %71, %cst_42 [1] : vector<16x16xf32> to vector<16xf32>
    %73 = vector.shape_cast %72 : vector<16xf32> to vector<16x1xf32>
    %74 = vector.broadcast %73 : vector<16x1xf32> to vector<16x16xf32>
    %75 = arith.divf %71, %74 : vector<16x16xf32>
    %cst_43 = arith.constant dense<0xFF800000> : vector<16xf32>
    %76 = vector.multi_reduction <maximumf>, %66, %cst_43 [1] : vector<16x16xf32> to vector<16xf32>
    %77 = vector.shape_cast %76 : vector<16xf32> to vector<16x1xf32>
    %78 = vector.broadcast %77 : vector<16x1xf32> to vector<16x16xf32>
    %79 = arith.subf %66, %78 : vector<16x16xf32>
    %80 = math.exp %79 : vector<16x16xf32>
    %cst_44 = arith.constant dense<0.000000e+00> : vector<16xf32>
    %81 = vector.multi_reduction <add>, %80, %cst_44 [1] : vector<16x16xf32> to vector<16xf32>
    %82 = vector.shape_cast %81 : vector<16xf32> to vector<16x1xf32>
    %83 = vector.broadcast %82 : vector<16x1xf32> to vector<16x16xf32>
    %84 = arith.divf %80, %83 : vector<16x16xf32>
    %85 = arith.subf %75, %84 : vector<16x16xf32>
    %86 = arith.truncf %85 : vector<16x16xf32> to vector<16x16xbf16>
    %87 = vector.extract_strided_slice %60 {offsets = [0, 0], sizes = [16, 32], strides = [1, 1]} : vector<16x128xbf16> to vector<16x32xbf16>
    %cst_45 = arith.constant dense<0.000000e+00> : vector<16x32xf32>
    %88 = tpu.matmul %86, %87, %cst_45 {dimension_numbers = #tpu.dot_dimension_numbers<[1], [0], [0], [1], [0, 0, 1, 1], [], []>} : vector<16x16xbf16>, vector<16x32xbf16>, vector<16x32xf32> -> vector<16x32xf32>
    %89 = arith.truncf %88 : vector<16x32xf32> to vector<16x32xbf16>
    %c0_46 = arith.constant 0 : index
    %c0_47 = arith.constant 0 : index
    %90 = vector.load %arg25[%c0_46, %c0_47] : memref<16x128xbf16, #tpu.memory_space<vmem>>, vector<16x32xbf16>
    tpu.vector_store %arg25[%c0_46, %c0_47], %89 {strides = array<i32>} : memref<16x128xbf16, #tpu.memory_space<vmem>>, vector<16x32xbf16>,
    %91 = vector.extract_strided_slice %43 {offsets = [0, 32], sizes = [16, 32], strides = [1, 1]} : vector<16x128xbf16> to vector<16x32xbf16>
    %92 = vector.extract_strided_slice %46 {offsets = [0, 32], sizes = [16, 32], strides = [1, 1]} : vector<16x128xbf16> to vector<16x32xbf16>
    "tpu.trace_start"() <{level = 10 : i32, message = "qd,kd->qk"}> : () -> ()
    %cst_48 = arith.constant dense<0.000000e+00> : vector<16x16xf32>
    %93 = tpu.matmul %91, %92, %cst_48 {dimension_numbers = #tpu.dot_dimension_numbers<[1], [1], [0], [0], [0, 0, 1, 0], [], []>} : vector<16x32xbf16>, vector<16x32xbf16>, vector<16x16xf32> -> vector<16x16xf32>
    "tpu.trace_stop"() : () -> ()
    %94 = vector.extract_strided_slice %51 {offsets = [0, 32], sizes = [16, 32], strides = [1, 1]} : vector<16x128xbf16> to vector<16x32xbf16>
    %95 = vector.extract_strided_slice %54 {offsets = [0, 32], sizes = [16, 32], strides = [1, 1]} : vector<16x128xbf16> to vector<16x32xbf16>
    "tpu.trace_start"() <{level = 10 : i32, message = "qd,kd->qk"}> : () -> ()
    %cst_49 = arith.constant dense<0.000000e+00> : vector<16x16xf32>
    %96 = tpu.matmul %94, %95, %cst_49 {dimension_numbers = #tpu.dot_dimension_numbers<[1], [1], [0], [0], [0, 0, 1, 0], [], []>} : vector<16x32xbf16>, vector<16x32xbf16>, vector<16x16xf32> -> vector<16x16xf32>
    "tpu.trace_stop"() : () -> ()
    %cst_50 = arith.constant dense<0xFF800000> : vector<16xf32>
    %97 = vector.multi_reduction <maximumf>, %93, %cst_50 [1] : vector<16x16xf32> to vector<16xf32>
    %98 = vector.shape_cast %97 : vector<16xf32> to vector<16x1xf32>
    %99 = vector.broadcast %98 : vector<16x1xf32> to vector<16x16xf32>
    %100 = arith.subf %93, %99 : vector<16x16xf32>
    %101 = math.exp %100 : vector<16x16xf32>
    %cst_51 = arith.constant dense<0.000000e+00> : vector<16xf32>
    %102 = vector.multi_reduction <add>, %101, %cst_51 [1] : vector<16x16xf32> to vector<16xf32>
    %103 = vector.shape_cast %102 : vector<16xf32> to vector<16x1xf32>
    %104 = vector.broadcast %103 : vector<16x1xf32> to vector<16x16xf32>
    %105 = arith.divf %101, %104 : vector<16x16xf32>
    %cst_52 = arith.constant dense<0xFF800000> : vector<16xf32>
    %106 = vector.multi_reduction <maximumf>, %96, %cst_52 [1] : vector<16x16xf32> to vector<16xf32>
    %107 = vector.shape_cast %106 : vector<16xf32> to vector<16x1xf32>
    %108 = vector.broadcast %107 : vector<16x1xf32> to vector<16x16xf32>
    %109 = arith.subf %96, %108 : vector<16x16xf32>
    %110 = math.exp %109 : vector<16x16xf32>
    %cst_53 = arith.constant dense<0.000000e+00> : vector<16xf32>
    %111 = vector.multi_reduction <add>, %110, %cst_53 [1] : vector<16x16xf32> to vector<16xf32>
    %112 = vector.shape_cast %111 : vector<16xf32> to vector<16x1xf32>
    %113 = vector.broadcast %112 : vector<16x1xf32> to vector<16x16xf32>
    %114 = arith.divf %110, %113 : vector<16x16xf32>
    %115 = arith.subf %105, %114 : vector<16x16xf32>
    %116 = arith.truncf %115 : vector<16x16xf32> to vector<16x16xbf16>
    %117 = vector.extract_strided_slice %60 {offsets = [0, 32], sizes = [16, 32], strides = [1, 1]} : vector<16x128xbf16> to vector<16x32xbf16>
    %cst_54 = arith.constant dense<0.000000e+00> : vector<16x32xf32>
    %118 = tpu.matmul %116, %117, %cst_54 {dimension_numbers = #tpu.dot_dimension_numbers<[1], [0], [0], [1], [0, 0, 1, 1], [], []>} : vector<16x16xbf16>, vector<16x32xbf16>, vector<16x32xf32> -> vector<16x32xf32>
    %119 = arith.truncf %118 : vector<16x32xf32> to vector<16x32xbf16>
    %c0_55 = arith.constant 0 : index
    %c32 = arith.constant 32 : index
    %120 = vector.load %arg25[%c0_55, %c32] : memref<16x128xbf16, #tpu.memory_space<vmem>>, vector<16x32xbf16>
    tpu.vector_store %arg25[%c0_55, %c32], %119 {strides = array<i32>} : memref<16x128xbf16, #tpu.memory_space<vmem>>, vector<16x32xbf16>,
    %121 = vector.extract_strided_slice %43 {offsets = [0, 64], sizes = [16, 32], strides = [1, 1]} : vector<16x128xbf16> to vector<16x32xbf16>
    %122 = vector.extract_strided_slice %46 {offsets = [0, 64], sizes = [16, 32], strides = [1, 1]} : vector<16x128xbf16> to vector<16x32xbf16>
    "tpu.trace_start"() <{level = 10 : i32, message = "qd,kd->qk"}> : () -> ()
    %cst_56 = arith.constant dense<0.000000e+00> : vector<16x16xf32>
    %123 = tpu.matmul %121, %122, %cst_56 {dimension_numbers = #tpu.dot_dimension_numbers<[1], [1], [0], [0], [0, 0, 1, 0], [], []>} : vector<16x32xbf16>, vector<16x32xbf16>, vector<16x16xf32> -> vector<16x16xf32>
    "tpu.trace_stop"() : () -> ()
    %124 = vector.extract_strided_slice %51 {offsets = [0, 64], sizes = [16, 32], strides = [1, 1]} : vector<16x128xbf16> to vector<16x32xbf16>
    %125 = vector.extract_strided_slice %54 {offsets = [0, 64], sizes = [16, 32], strides = [1, 1]} : vector<16x128xbf16> to vector<16x32xbf16>
    "tpu.trace_start"() <{level = 10 : i32, message = "qd,kd->qk"}> : () -> ()
    %cst_57 = arith.constant dense<0.000000e+00> : vector<16x16xf32>
    %126 = tpu.matmul %124, %125, %cst_57 {dimension_numbers = #tpu.dot_dimension_numbers<[1], [1], [0], [0], [0, 0, 1, 0], [], []>} : vector<16x32xbf16>, vector<16x32xbf16>, vector<16x16xf32> -> vector<16x16xf32>
    "tpu.trace_stop"() : () -> ()
    %cst_58 = arith.constant dense<0xFF800000> : vector<16xf32>
    %127 = vector.multi_reduction <maximumf>, %123, %cst_58 [1] : vector<16x16xf32> to vector<16xf32>
    %128 = vector.shape_cast %127 : vector<16xf32> to vector<16x1xf32>
    %129 = vector.broadcast %128 : vector<16x1xf32> to vector<16x16xf32>
    %130 = arith.subf %123, %129 : vector<16x16xf32>
    %131 = math.exp %130 : vector<16x16xf32>
    %cst_59 = arith.constant dense<0.000000e+00> : vector<16xf32>
    %132 = vector.multi_reduction <add>, %131, %cst_59 [1] : vector<16x16xf32> to vector<16xf32>
    %133 = vector.shape_cast %132 : vector<16xf32> to vector<16x1xf32>
    %134 = vector.broadcast %133 : vector<16x1xf32> to vector<16x16xf32>
    %135 = arith.divf %131, %134 : vector<16x16xf32>
    %cst_60 = arith.constant dense<0xFF800000> : vector<16xf32>
    %136 = vector.multi_reduction <maximumf>, %126, %cst_60 [1] : vector<16x16xf32> to vector<16xf32>
    %137 = vector.shape_cast %136 : vector<16xf32> to vector<16x1xf32>
    %138 = vector.broadcast %137 : vector<16x1xf32> to vector<16x16xf32>
    %139 = arith.subf %126, %138 : vector<16x16xf32>
    %140 = math.exp %139 : vector<16x16xf32>
    %cst_61 = arith.constant dense<0.000000e+00> : vector<16xf32>
    %141 = vector.multi_reduction <add>, %140, %cst_61 [1] : vector<16x16xf32> to vector<16xf32>
    %142 = vector.shape_cast %141 : vector<16xf32> to vector<16x1xf32>
    %143 = vector.broadcast %142 : vector<16x1xf32> to vector<16x16xf32>
    %144 = arith.divf %140, %143 : vector<16x16xf32>
    %145 = arith.subf %135, %144 : vector<16x16xf32>
    %146 = arith.truncf %145 : vector<16x16xf32> to vector<16x16xbf16>
    %147 = vector.extract_strided_slice %60 {offsets = [0, 64], sizes = [16, 32], strides = [1, 1]} : vector<16x128xbf16> to vector<16x32xbf16>
    %cst_62 = arith.constant dense<0.000000e+00> : vector<16x32xf32>
    %148 = tpu.matmul %146, %147, %cst_62 {dimension_numbers = #tpu.dot_dimension_numbers<[1], [0], [0], [1], [0, 0, 1, 1], [], []>} : vector<16x16xbf16>, vector<16x32xbf16>, vector<16x32xf32> -> vector<16x32xf32>
    %149 = arith.truncf %148 : vector<16x32xf32> to vector<16x32xbf16>
    %c0_63 = arith.constant 0 : index
    %c64 = arith.constant 64 : index
    %150 = vector.load %arg25[%c0_63, %c64] : memref<16x128xbf16, #tpu.memory_space<vmem>>, vector<16x32xbf16>
    tpu.vector_store %arg25[%c0_63, %c64], %149 {strides = array<i32>} : memref<16x128xbf16, #tpu.memory_space<vmem>>, vector<16x32xbf16>,
    %151 = vector.extract_strided_slice %43 {offsets = [0, 96], sizes = [16, 32], strides = [1, 1]} : vector<16x128xbf16> to vector<16x32xbf16>
    %152 = vector.extract_strided_slice %46 {offsets = [0, 96], sizes = [16, 32], strides = [1, 1]} : vector<16x128xbf16> to vector<16x32xbf16>
    "tpu.trace_start"() <{level = 10 : i32, message = "qd,kd->qk"}> : () -> ()
    %cst_64 = arith.constant dense<0.000000e+00> : vector<16x16xf32>
    %153 = tpu.matmul %151, %152, %cst_64 {dimension_numbers = #tpu.dot_dimension_numbers<[1], [1], [0], [0], [0, 0, 1, 0], [], []>} : vector<16x32xbf16>, vector<16x32xbf16>, vector<16x16xf32> -> vector<16x16xf32>
    "tpu.trace_stop"() : () -> ()
    %154 = vector.extract_strided_slice %51 {offsets = [0, 96], sizes = [16, 32], strides = [1, 1]} : vector<16x128xbf16> to vector<16x32xbf16>
    %155 = vector.extract_strided_slice %54 {offsets = [0, 96], sizes = [16, 32], strides = [1, 1]} : vector<16x128xbf16> to vector<16x32xbf16>
    "tpu.trace_start"() <{level = 10 : i32, message = "qd,kd->qk"}> : () -> ()
    %cst_65 = arith.constant dense<0.000000e+00> : vector<16x16xf32>
    %156 = tpu.matmul %154, %155, %cst_65 {dimension_numbers = #tpu.dot_dimension_numbers<[1], [1], [0], [0], [0, 0, 1, 0], [], []>} : vector<16x32xbf16>, vector<16x32xbf16>, vector<16x16xf32> -> vector<16x16xf32>
    "tpu.trace_stop"() : () -> ()
    %cst_66 = arith.constant dense<0xFF800000> : vector<16xf32>
    %157 = vector.multi_reduction <maximumf>, %153, %cst_66 [1] : vector<16x16xf32> to vector<16xf32>
    %158 = vector.shape_cast %157 : vector<16xf32> to vector<16x1xf32>
    %159 = vector.broadcast %158 : vector<16x1xf32> to vector<16x16xf32>
    %160 = arith.subf %153, %159 : vector<16x16xf32>
    %161 = math.exp %160 : vector<16x16xf32>
    %cst_67 = arith.constant dense<0.000000e+00> : vector<16xf32>
    %162 = vector.multi_reduction <add>, %161, %cst_67 [1] : vector<16x16xf32> to vector<16xf32>
    %163 = vector.shape_cast %162 : vector<16xf32> to vector<16x1xf32>
    %164 = vector.broadcast %163 : vector<16x1xf32> to vector<16x16xf32>
    %165 = arith.divf %161, %164 : vector<16x16xf32>
    %cst_68 = arith.constant dense<0xFF800000> : vector<16xf32>
    %166 = vector.multi_reduction <maximumf>, %156, %cst_68 [1] : vector<16x16xf32> to vector<16xf32>
    %167 = vector.shape_cast %166 : vector<16xf32> to vector<16x1xf32>
    %168 = vector.broadcast %167 : vector<16x1xf32> to vector<16x16xf32>
    %169 = arith.subf %156, %168 : vector<16x16xf32>
    %170 = math.exp %169 : vector<16x16xf32>
    %cst_69 = arith.constant dense<0.000000e+00> : vector<16xf32>
    %171 = vector.multi_reduction <add>, %170, %cst_69 [1] : vector<16x16xf32> to vector<16xf32>
    %172 = vector.shape_cast %171 : vector<16xf32> to vector<16x1xf32>
    %173 = vector.broadcast %172 : vector<16x1xf32> to vector<16x16xf32>
    %174 = arith.divf %170, %173 : vector<16x16xf32>
    %175 = arith.subf %165, %174 : vector<16x16xf32>
    %176 = arith.truncf %175 : vector<16x16xf32> to vector<16x16xbf16>
    %177 = vector.extract_strided_slice %60 {offsets = [0, 96], sizes = [16, 32], strides = [1, 1]} : vector<16x128xbf16> to vector<16x32xbf16>
    %cst_70 = arith.constant dense<0.000000e+00> : vector<16x32xf32>
    %178 = tpu.matmul %176, %177, %cst_70 {dimension_numbers = #tpu.dot_dimension_numbers<[1], [0], [0], [1], [0, 0, 1, 1], [], []>} : vector<16x16xbf16>, vector<16x32xbf16>, vector<16x32xf32> -> vector<16x32xf32>
    %179 = arith.truncf %178 : vector<16x32xf32> to vector<16x32xbf16>
    %c0_71 = arith.constant 0 : index
    %c96 = arith.constant 96 : index
    %180 = vector.load %arg25[%c0_71, %c96] : memref<16x128xbf16, #tpu.memory_space<vmem>>, vector<16x32xbf16>
    tpu.vector_store %arg25[%c0_71, %c96], %179 {strides = array<i32>} : memref<16x128xbf16, #tpu.memory_space<vmem>>, vector<16x32xbf16>,
    %c0_72 = arith.constant 0 : index
    %c0_73 = arith.constant 0 : index
    %181 = vector.load %arg25[%c0_72, %c0_73] : memref<16x128xbf16, #tpu.memory_space<vmem>>, vector<16x128xbf16>
    %c0_74 = arith.constant 0 : index
    %c0_75 = arith.constant 0 : index
    %182 = vector.load %arg14[%c0_74, %c0_75] : memref<128x128xbf16, #tpu.memory_space<vmem>>, vector<128x128xbf16>
    %cst_76 = arith.constant dense<0.000000e+00> : vector<16x128xf32>
    %183 = tpu.matmul %181, %182, %cst_76 {dimension_numbers = #tpu.dot_dimension_numbers<[1], [0], [0], [1], [0, 0, 1, 1], [], []>} : vector<16x128xbf16>, vector<128x128xbf16>, vector<16x128xf32> -> vector<16x128xf32>
    %c0_77 = arith.constant 0 : index
    %c0_78 = arith.constant 0 : index
    %184 = vector.load %arg15[%c0_77, %c0_78] : memref<1x128xf32, #tpu.memory_space<vmem>>, vector<1x128xf32>
    %185 = vector.broadcast %184 : vector<1x128xf32> to vector<16x128xf32>
    %186 = arith.addf %183, %185 : vector<16x128xf32>
    %c0_79 = arith.constant 0 : index
    %c0_80 = arith.constant 0 : index
    %187 = vector.load %arg16[%c0_79, %c0_80] : memref<1x128xf32, #tpu.memory_space<vmem>>, vector<1x128xf32>
    %c0_81 = arith.constant 0 : index
    %c0_82 = arith.constant 0 : index
    %188 = vector.load %arg17[%c0_81, %c0_82] : memref<1x128xf32, #tpu.memory_space<vmem>>, vector<1x128xf32>
    %cst_83 = arith.constant dense<0.000000e+00> : vector<16xf32>
    %189 = vector.multi_reduction <add>, %186, %cst_83 [1] : vector<16x128xf32> to vector<16xf32>
    %190 = vector.shape_cast %189 : vector<16xf32> to vector<16x1xf32>
    %cst_84 = arith.constant 1.280000e+02 : f32
    %191 = vector.broadcast %cst_84 : f32 to vector<16x1xf32>
    %192 = arith.divf %190, %191 : vector<16x1xf32>
    %193 = vector.broadcast %192 : vector<16x1xf32> to vector<16x128xf32>
    %194 = arith.subf %186, %193 : vector<16x128xf32>
    %195 = arith.mulf %194, %194 : vector<16x128xf32>
    %cst_85 = arith.constant dense<0.000000e+00> : vector<16xf32>
    %196 = vector.multi_reduction <add>, %195, %cst_85 [1] : vector<16x128xf32> to vector<16xf32>
    %197 = vector.shape_cast %196 : vector<16xf32> to vector<16x1xf32>
    %cst_86 = arith.constant 1.280000e+02 : f32
    %198 = vector.broadcast %cst_86 : f32 to vector<16x1xf32>
    %199 = arith.divf %197, %198 : vector<16x1xf32>
    %200 = vector.broadcast %192 : vector<16x1xf32> to vector<16x128xf32>
    %201 = arith.subf %186, %200 : vector<16x128xf32>
    %cst_87 = arith.constant 9.99999974E-6 : f32
    %202 = vector.broadcast %cst_87 : f32 to vector<16x1xf32>
    %203 = arith.addf %199, %202 : vector<16x1xf32>
    %204 = math.rsqrt %203 : vector<16x1xf32>
    %205 = vector.broadcast %204 : vector<16x1xf32> to vector<16x128xf32>
    %206 = arith.mulf %201, %205 : vector<16x128xf32>
    %207 = vector.broadcast %187 : vector<1x128xf32> to vector<16x128xf32>
    %208 = arith.mulf %206, %207 : vector<16x128xf32>
    %209 = vector.broadcast %188 : vector<1x128xf32> to vector<16x128xf32>
    %210 = arith.addf %208, %209 : vector<16x128xf32>
    %211 = arith.addf %1, %210 : vector<16x128xf32>
    %c0_88 = arith.constant 0 : index
    %c0_89 = arith.constant 0 : index
    %212 = vector.load %arg18[%c0_88, %c0_89] : memref<1x128xf32, #tpu.memory_space<vmem>>, vector<1x128xf32>
    %c0_90 = arith.constant 0 : index
    %c0_91 = arith.constant 0 : index
    %213 = vector.load %arg19[%c0_90, %c0_91] : memref<1x128xf32, #tpu.memory_space<vmem>>, vector<1x128xf32>
    %cst_92 = arith.constant dense<0.000000e+00> : vector<16xf32>
    %214 = vector.multi_reduction <add>, %211, %cst_92 [1] : vector<16x128xf32> to vector<16xf32>
    %215 = vector.shape_cast %214 : vector<16xf32> to vector<16x1xf32>
    %cst_93 = arith.constant 1.280000e+02 : f32
    %216 = vector.broadcast %cst_93 : f32 to vector<16x1xf32>
    %217 = arith.divf %215, %216 : vector<16x1xf32>
    %218 = vector.broadcast %217 : vector<16x1xf32> to vector<16x128xf32>
    %219 = arith.subf %211, %218 : vector<16x128xf32>
    %220 = arith.mulf %219, %219 : vector<16x128xf32>
    %cst_94 = arith.constant dense<0.000000e+00> : vector<16xf32>
    %221 = vector.multi_reduction <add>, %220, %cst_94 [1] : vector<16x128xf32> to vector<16xf32>
    %222 = vector.shape_cast %221 : vector<16xf32> to vector<16x1xf32>
    %cst_95 = arith.constant 1.280000e+02 : f32
    %223 = vector.broadcast %cst_95 : f32 to vector<16x1xf32>
    %224 = arith.divf %222, %223 : vector<16x1xf32>
    %225 = vector.broadcast %217 : vector<16x1xf32> to vector<16x128xf32>
    %226 = arith.subf %211, %225 : vector<16x128xf32>
    %cst_96 = arith.constant 9.99999974E-6 : f32
    %227 = vector.broadcast %cst_96 : f32 to vector<16x1xf32>
    %228 = arith.addf %224, %227 : vector<16x1xf32>
    %229 = math.rsqrt %228 : vector<16x1xf32>
    %230 = vector.broadcast %229 : vector<16x1xf32> to vector<16x128xf32>
    %231 = arith.mulf %226, %230 : vector<16x128xf32>
    %232 = vector.broadcast %212 : vector<1x128xf32> to vector<16x128xf32>
    %233 = arith.mulf %231, %232 : vector<16x128xf32>
    %234 = vector.broadcast %213 : vector<1x128xf32> to vector<16x128xf32>
    %235 = arith.addf %233, %234 : vector<16x128xf32>
    %236 = arith.truncf %235 : vector<16x128xf32> to vector<16x128xbf16>
    %c0_97 = arith.constant 0 : index
    %c0_98 = arith.constant 0 : index
    %237 = vector.load %arg20[%c0_97, %c0_98] : memref<128x512xbf16, #tpu.memory_space<vmem>>, vector<128x512xbf16>
    %cst_99 = arith.constant dense<0.000000e+00> : vector<16x512xf32>
    %238 = tpu.matmul %236, %237, %cst_99 {dimension_numbers = #tpu.dot_dimension_numbers<[1], [0], [0], [1], [0, 0, 1, 1], [], []>} : vector<16x128xbf16>, vector<128x512xbf16>, vector<16x512xf32> -> vector<16x512xf32>
    %c0_100 = arith.constant 0 : index
    %c0_101 = arith.constant 0 : index
    %239 = vector.load %arg21[%c0_100, %c0_101] : memref<1x512xf32, #tpu.memory_space<vmem>>, vector<1x512xf32>
    %240 = vector.broadcast %239 : vector<1x512xf32> to vector<16x512xf32>
    %241 = arith.addf %238, %240 : vector<16x512xf32>
    %cst_102 = arith.constant 5.000000e-01 : f32
    %242 = vector.broadcast %cst_102 : f32 to vector<16x512xf32>
    %243 = arith.mulf %242, %241 : vector<16x512xf32>
    %cst_103 = arith.constant 0.707106769 : f32
    %244 = vector.broadcast %cst_103 : f32 to vector<16x512xf32>
    %245 = arith.mulf %241, %244 : vector<16x512xf32>
    %cst_104 = arith.constant 0.000000e+00 : f32
    %246 = vector.broadcast %cst_104 : f32 to vector<16x512xf32>
    %247 = arith.cmpf oge, %245, %246 : vector<16x512xf32>
    %cst_105 = arith.constant 0.000000e+00 : f32
    %248 = vector.broadcast %cst_105 : f32 to vector<16x512xf32>
    %249 = arith.subf %248, %245 : vector<16x512xf32>
    %250 = arith.select %247, %245, %249 : vector<16x512xi1>, vector<16x512xf32>
    %cst_106 = arith.constant 0.327591091 : f32
    %251 = vector.broadcast %cst_106 : f32 to vector<16x512xf32>
    %252 = arith.mulf %251, %250 : vector<16x512xf32>
    %cst_107 = arith.constant 1.000000e+00 : f32
    %253 = vector.broadcast %cst_107 : f32 to vector<16x512xf32>
    %254 = arith.addf %253, %252 : vector<16x512xf32>
    %cst_108 = arith.constant 1.000000e+00 : f32
    %255 = vector.broadcast %cst_108 : f32 to vector<16x512xf32>
    %256 = arith.divf %255, %254 : vector<16x512xf32>
    %cst_109 = arith.constant 1.06140542 : f32
    %257 = vector.broadcast %cst_109 : f32 to vector<16x512xf32>
    %258 = arith.mulf %257, %256 : vector<16x512xf32>
    %cst_110 = arith.constant -1.45315206 : f32
    %259 = vector.broadcast %cst_110 : f32 to vector<16x512xf32>
    %260 = arith.addf %258, %259 : vector<16x512xf32>
    %261 = arith.mulf %260, %256 : vector<16x512xf32>
    %cst_111 = arith.constant 1.42141378 : f32
    %262 = vector.broadcast %cst_111 : f32 to vector<16x512xf32>
    %263 = arith.addf %261, %262 : vector<16x512xf32>
    %264 = arith.mulf %263, %256 : vector<16x512xf32>
    %cst_112 = arith.constant -0.284496725 : f32
    %265 = vector.broadcast %cst_112 : f32 to vector<16x512xf32>
    %266 = arith.addf %264, %265 : vector<16x512xf32>
    %267 = arith.mulf %266, %256 : vector<16x512xf32>
    %cst_113 = arith.constant 0.254829586 : f32
    %268 = vector.broadcast %cst_113 : f32 to vector<16x512xf32>
    %269 = arith.addf %267, %268 : vector<16x512xf32>
    %270 = arith.mulf %269, %256 : vector<16x512xf32>
    %cst_114 = arith.constant 0.000000e+00 : f32
    %271 = vector.broadcast %cst_114 : f32 to vector<16x512xf32>
    %272 = arith.subf %271, %250 : vector<16x512xf32>
    %273 = arith.mulf %272, %250 : vector<16x512xf32>
    %274 = math.exp %273 : vector<16x512xf32>
    %275 = arith.mulf %270, %274 : vector<16x512xf32>
    %cst_115 = arith.constant 1.000000e+00 : f32
    %276 = vector.broadcast %cst_115 : f32 to vector<16x512xf32>
    %277 = arith.subf %276, %275 : vector<16x512xf32>
    %cst_116 = arith.constant 0.000000e+00 : f32
    %278 = vector.broadcast %cst_116 : f32 to vector<16x512xf32>
    %279 = arith.cmpf oge, %245, %278 : vector<16x512xf32>
    %cst_117 = arith.constant 0.000000e+00 : f32
    %280 = vector.broadcast %cst_117 : f32 to vector<16x512xf32>
    %281 = arith.subf %280, %277 : vector<16x512xf32>
    %282 = arith.select %279, %277, %281 : vector<16x512xi1>, vector<16x512xf32>
    %cst_118 = arith.constant 1.000000e+00 : f32
    %283 = vector.broadcast %cst_118 : f32 to vector<16x512xf32>
    %284 = arith.addf %283, %282 : vector<16x512xf32>
    %285 = arith.mulf %243, %284 : vector<16x512xf32>
    %286 = arith.truncf %285 : vector<16x512xf32> to vector<16x512xbf16>
    %c0_119 = arith.constant 0 : index
    %c0_120 = arith.constant 0 : index
    %287 = vector.load %arg22[%c0_119, %c0_120] : memref<512x128xbf16, #tpu.memory_space<vmem>>, vector<512x128xbf16>
    %cst_121 = arith.constant dense<0.000000e+00> : vector<16x128xf32>
    %288 = tpu.matmul %286, %287, %cst_121 {dimension_numbers = #tpu.dot_dimension_numbers<[1], [0], [0], [1], [0, 0, 1, 1], [], []>} : vector<16x512xbf16>, vector<512x128xbf16>, vector<16x128xf32> -> vector<16x128xf32>
    %c0_122 = arith.constant 0 : index
    %c0_123 = arith.constant 0 : index
    %289 = vector.load %arg23[%c0_122, %c0_123] : memref<1x128xf32, #tpu.memory_space<vmem>>, vector<1x128xf32>
    %290 = vector.broadcast %289 : vector<1x128xf32> to vector<16x128xf32>
    %291 = arith.addf %288, %290 : vector<16x128xf32>
    %292 = arith.addf %211, %291 : vector<16x128xf32>
    %293 = arith.truncf %292 : vector<16x128xf32> to vector<16x128xbf16>
    %c0_124 = arith.constant 0 : index
    %c0_125 = arith.constant 0 : index
    %c0_126 = arith.constant 0 : index
    %294 = vector.load %arg24[%c0_124, %c0_125, %c0_126] : memref<1x16x128xbf16, #tpu.memory_space<vmem>>, vector<1x16x128xbf16>
    %295 = vector.shape_cast %294 : vector<1x16x128xbf16> to vector<16x128xbf16>
    %296 = vector.shape_cast %293 : vector<16x128xbf16> to vector<1x16x128xbf16>
    tpu.vector_store %arg24[%c0_124, %c0_125, %c0_126], %296 {strides = array<i32>} : memref<1x16x128xbf16, #tpu.memory_space<vmem>>, vector<1x16x128xbf16>,
    return
  }
  func.func @transform_0(%arg0: i32) -> (i32, i32, i32) {
    %c0_i32 = arith.constant 0 : i32
    %c0_i32_0 = arith.constant 0 : i32
    %c0_i32_1 = arith.constant 0 : i32
    return %arg0, %c0_i32, %c0_i32_0 : i32, i32, i32
  }
  func.func @transform_1(%arg0: i32) -> (i32, i32) {
    %c0_i32 = arith.constant 0 : i32
    %c0_i32_0 = arith.constant 0 : i32
    %c0_i32_1 = arith.constant 0 : i32
    return %c0_i32, %c0_i32_0 : i32, i32
  }
  func.func @transform_2(%arg0: i32) -> (i32, i32) {
    %c0_i32 = arith.constant 0 : i32
    %c0_i32_0 = arith.constant 0 : i32
    %c0_i32_1 = arith.constant 0 : i32
    return %c0_i32, %c0_i32_0 : i32, i32
  }
  func.func @transform_3(%arg0: i32) -> (i32, i32) {
    %c0_i32 = arith.constant 0 : i32
    %c0_i32_0 = arith.constant 0 : i32
    %c0_i32_1 = arith.constant 0 : i32
    return %c0_i32, %c0_i32_0 : i32, i32
  }
  func.func @transform_4(%arg0: i32) -> (i32, i32) {
    %c0_i32 = arith.constant 0 : i32
    %c0_i32_0 = arith.constant 0 : i32
    %c0_i32_1 = arith.constant 0 : i32
    return %c0_i32, %c0_i32_0 : i32, i32
  }
  func.func @transform_5(%arg0: i32) -> (i32, i32) {
    %c0_i32 = arith.constant 0 : i32
    %c0_i32_0 = arith.constant 0 : i32
    %c0_i32_1 = arith.constant 0 : i32
    return %c0_i32, %c0_i32_0 : i32, i32
  }
  func.func @transform_6(%arg0: i32) -> (i32, i32) {
    %c0_i32 = arith.constant 0 : i32
    %c0_i32_0 = arith.constant 0 : i32
    %c0_i32_1 = arith.constant 0 : i32
    return %c0_i32, %c0_i32_0 : i32, i32
  }
  func.func @transform_7(%arg0: i32) -> (i32, i32) {
    %c0_i32 = arith.constant 0 : i32
    %c0_i32_0 = arith.constant 0 : i32
    %c0_i32_1 = arith.constant 0 : i32
    return %c0_i32, %c0_i32_0 : i32, i32
  }
  func.func @transform_8(%arg0: i32) -> (i32, i32) {
    %c0_i32 = arith.constant 0 : i32
    %c0_i32_0 = arith.constant 0 : i32
    %c0_i32_1 = arith.constant 0 : i32
    return %c0_i32, %c0_i32_0 : i32, i32
  }
  func.func @transform_9(%arg0: i32) -> (i32, i32) {
    %c0_i32 = arith.constant 0 : i32
    %c0_i32_0 = arith.constant 0 : i32
    %c0_i32_1 = arith.constant 0 : i32
    return %c0_i32, %c0_i32_0 : i32, i32
  }
  func.func @transform_10(%arg0: i32) -> (i32, i32) {
    %c0_i32 = arith.constant 0 : i32
    %c0_i32_0 = arith.constant 0 : i32
    %c0_i32_1 = arith.constant 0 : i32
    return %c0_i32, %c0_i32_0 : i32, i32
  }
  func.func @transform_11(%arg0: i32) -> (i32, i32) {
    %c0_i32 = arith.constant 0 : i32
    %c0_i32_0 = arith.constant 0 : i32
    %c0_i32_1 = arith.constant 0 : i32
    return %c0_i32, %c0_i32_0 : i32, i32
  }
  func.func @transform_12(%arg0: i32) -> (i32, i32) {
    %c0_i32 = arith.constant 0 : i32
    %c0_i32_0 = arith.constant 0 : i32
    %c0_i32_1 = arith.constant 0 : i32
    return %c0_i32, %c0_i32_0 : i32, i32
  }
  func.func @transform_13(%arg0: i32) -> (i32, i32) {
    %c0_i32 = arith.constant 0 : i32
    %c0_i32_0 = arith.constant 0 : i32
    %c0_i32_1 = arith.constant 0 : i32
    return %c0_i32, %c0_i32_0 : i32, i32
  }
  func.func @transform_14(%arg0: i32) -> (i32, i32) {
    %c0_i32 = arith.constant 0 : i32
    %c0_i32_0 = arith.constant 0 : i32
    %c0_i32_1 = arith.constant 0 : i32
    return %c0_i32, %c0_i32_0 : i32, i32
  }
  func.func @transform_15(%arg0: i32) -> (i32, i32) {
    %c0_i32 = arith.constant 0 : i32
    %c0_i32_0 = arith.constant 0 : i32
    %c0_i32_1 = arith.constant 0 : i32
    return %c0_i32, %c0_i32_0 : i32, i32
  }
  func.func @transform_16(%arg0: i32) -> (i32, i32) {
    %c0_i32 = arith.constant 0 : i32
    %c0_i32_0 = arith.constant 0 : i32
    %c0_i32_1 = arith.constant 0 : i32
    return %c0_i32, %c0_i32_0 : i32, i32
  }
  func.func @transform_17(%arg0: i32) -> (i32, i32) {
    %c0_i32 = arith.constant 0 : i32
    %c0_i32_0 = arith.constant 0 : i32
    %c0_i32_1 = arith.constant 0 : i32
    return %c0_i32, %c0_i32_0 : i32, i32
  }
  func.func @transform_18(%arg0: i32) -> (i32, i32) {
    %c0_i32 = arith.constant 0 : i32
    %c0_i32_0 = arith.constant 0 : i32
    %c0_i32_1 = arith.constant 0 : i32
    return %c0_i32, %c0_i32_0 : i32, i32
  }
  func.func @transform_19(%arg0: i32) -> (i32, i32) {
    %c0_i32 = arith.constant 0 : i32
    %c0_i32_0 = arith.constant 0 : i32
    %c0_i32_1 = arith.constant 0 : i32
    return %c0_i32, %c0_i32_0 : i32, i32
  }
  func.func @transform_20(%arg0: i32) -> (i32, i32) {
    %c0_i32 = arith.constant 0 : i32
    %c0_i32_0 = arith.constant 0 : i32
    %c0_i32_1 = arith.constant 0 : i32
    return %c0_i32, %c0_i32_0 : i32, i32
  }
  func.func @transform_21(%arg0: i32) -> (i32, i32) {
    %c0_i32 = arith.constant 0 : i32
    %c0_i32_0 = arith.constant 0 : i32
    %c0_i32_1 = arith.constant 0 : i32
    return %c0_i32, %c0_i32_0 : i32, i32
  }
  func.func @transform_22(%arg0: i32) -> (i32, i32) {
    %c0_i32 = arith.constant 0 : i32
    %c0_i32_0 = arith.constant 0 : i32
    %c0_i32_1 = arith.constant 0 : i32
    return %c0_i32, %c0_i32_0 : i32, i32
  }
  func.func @transform_23(%arg0: i32) -> (i32, i32, i32) {
    %c0_i32 = arith.constant 0 : i32
    %c0_i32_0 = arith.constant 0 : i32
    %c0_i32_1 = arith.constant 0 : i32
    return %arg0, %c0_i32, %c0_i32_0 : i32, i32, i32
  }
}

</mosaic_0001>

<llo_original>
// kernel: tpu_custom_call.1
$region0: #{tpu_custom_call.1}
  #allocation0 [shape = 'u32[]', space=smem, size = 0x4, offset = 0x4, fixed_abs, tag = 'smem constant byte address 0x4 - core index']
  #allocation1 [shape = 'u32[144,128]{1,0:T(1,128)}', space=vmem, size = 0x12000, scoped, tag = 'internal scratch']
  #allocation2 [shape = 'bf16[16,128]{1,0:T(16,128)(2,1)}', space=vmem, size = 0x1000, scoped, tag = 'scratch operand']
  %s0 = inlined_call_operand.hbm [shape: f32[2,16,128], index: 0, kind: input, shape index: {}]
  %s1 = inlined_call_operand.vmem [shape: f32[1,128], index: 1, kind: input, shape index: {}]
  %s2 = inlined_call_operand.vmem [shape: f32[1,128], index: 2, kind: input, shape index: {}]
  %s3 = inlined_call_operand.hbm [shape: bf16[64,128], index: 3, kind: input, shape index: {}]
  %s4 = inlined_call_operand.vmem [shape: f32[1,128], index: 4, kind: input, shape index: {}]
  %s5 = inlined_call_operand.hbm [shape: bf16[64,128], index: 5, kind: input, shape index: {}]
  %s6 = inlined_call_operand.vmem [shape: f32[1,128], index: 6, kind: input, shape index: {}]
  %s7 = inlined_call_operand.hbm [shape: bf16[128,128], index: 7, kind: input, shape index: {}]
  %s8 = inlined_call_operand.hbm [shape: bf16[128,128], index: 8, kind: input, shape index: {}]
  %s9 = inlined_call_operand.hbm [shape: bf16[128,128], index: 9, kind: input, shape index: {}]
  %s10 = inlined_call_operand.hbm [shape: bf16[128,128], index: 10, kind: input, shape index: {}]
  %s11 = inlined_call_operand.hbm [shape: bf16[128,128], index: 11, kind: input, shape index: {}]
  %s12 = inlined_call_operand.hbm [shape: bf16[128,128], index: 12, kind: input, shape index: {}]
  %s13 = inlined_call_operand.hbm [shape: bf16[128,128], index: 13, kind: input, shape index: {}]
  %s14 = inlined_call_operand.vmem [shape: f32[1,128], index: 14, kind: input, shape index: {}]
  %s15 = inlined_call_operand.vmem [shape: f32[1,128], index: 15, kind: input, shape index: {}]
  %s16 = inlined_call_operand.vmem [shape: f32[1,128], index: 16, kind: input, shape index: {}]
  %s17 = inlined_call_operand.vmem [shape: f32[1,128], index: 17, kind: input, shape index: {}]
  %s18 = inlined_call_operand.vmem [shape: f32[1,128], index: 18, kind: input, shape index: {}]
  %s19 = inlined_call_operand.hbm [shape: bf16[128,512], index: 19, kind: input, shape index: {}]
  %s20 = inlined_call_operand.vmem [shape: f32[1,512], index: 20, kind: input, shape index: {}]
  %s21 = inlined_call_operand.hbm [shape: bf16[512,128], index: 21, kind: input, shape index: {}]
  %s22 = inlined_call_operand.vmem [shape: f32[1,128], index: 22, kind: input, shape index: {}]
  %s23 = inlined_call_operand.hbm [shape: bf16[2,16,128], index: 23, kind: output, shape index: {}]
  %s24 = sld [smem:[#allocation0]]
  $region173: #{tpu_custom_call.1} parent=0
    _
  %s26 = ssub.s32 1, %s24
  %s27 = scalar_select 0, %s26, %s24
  $region1: #{tpu_custom_call.1} parent=0
    #allocation3 [shape = 'u8[16384]{0}', space=vmem, size = 0x4000, scoped, tag = 'input window, operand 0']
    #allocation4 [shape = 's32[2]{0}', space=sflag, size = 0x8, scoped, tag = 'scoped memory for tpu_custom_call.1']
    #allocation5 [shape = 's32[2]{0}', space=sflag, size = 0x8, scoped, tag = 'scoped memory for tpu_custom_call.1']
    #allocation6 [shape = 'u8[16384]{0}', space=vmem, size = 0x4000, scoped, tag = 'input window, operand 3, single buffered']
    #allocation7 [shape = 's32[1]{0}', space=sflag, size = 0x4, scoped, tag = 'scoped memory for tpu_custom_call.1']
    #allocation8 [shape = 'u8[16384]{0}', space=vmem, size = 0x4000, scoped, tag = 'input window, operand 5, single buffered']
    #allocation9 [shape = 'u8[32768]{0}', space=vmem, size = 0x8000, scoped, tag = 'input window, operand 7, single buffered']
    #allocation10 [shape = 's32[1]{0}', space=sflag, size = 0x4, scoped, tag = 'scoped memory for tpu_custom_call.1']
    #allocation11 [shape = 'u8[32768]{0}', space=vmem, size = 0x8000, scoped, tag = 'input window, operand 8, single buffered']
    #allocation12 [shape = 'u8[32768]{0}', space=vmem, size = 0x8000, scoped, tag = 'input window, operand 9, single buffered']
    #allocation13 [shape = 's32[1]{0}', space=sflag, size = 0x4, scoped, tag = 'scoped memory for tpu_custom_call.1']
    #allocation14 [shape = 'u8[32768]{0}', space=vmem, size = 0x8000, scoped, tag = 'input window, operand 10, single buffered']
    #allocation15 [shape = 'u8[32768]{0}', space=vmem, size = 0x8000, scoped, tag = 'input window, operand 11, single buffered']
    #allocation16 [shape = 's32[1]{0}', space=sflag, size = 0x4, scoped, tag = 'scoped memory for tpu_custom_call.1']
    #allocation17 [shape = 'u8[32768]{0}', space=vmem, size = 0x8000, scoped, tag = 'input window, operand 12, single buffered']
    #allocation18 [shape = 'u8[32768]{0}', space=vmem, size = 0x8000, scoped, tag = 'input window, operand 13, single buffered']
    #allocation19 [shape = 's32[1]{0}', space=sflag, size = 0x4, scoped, tag = 'scoped memory for tpu_custom_call.1']
    #allocation20 [shape = 'u8[131072]{0}', space=vmem, size = 0x20000, scoped, tag = 'input window, operand 19, single buffered']
    #allocation21 [shape = 'u8[131072]{0}', space=vmem, size = 0x20000, scoped, tag = 'input window, operand 21, single buffered']
    #allocation22 [shape = 's32[1]{0}', space=sflag, size = 0x4, scoped, tag = 'scoped memory for tpu_custom_call.1']
    #allocation23 [shape = 'u8[8192]{0}', space=vmem, size = 0x2000, scoped, tag = 'output window, operand 0']
    %28 = vsyncpa [#allocation4], 0
    %s29 = scalar_lea.sflag [#allocation4], 1
    %30 = vsyncpa %s29, 0
    %31 = vsyncpa [#allocation7], 0
    %32 = vsyncpa [#allocation10], 0
    %33 = vsyncpa [#allocation13], 0
    %34 = vsyncpa [#allocation16], 0
    %35 = vsyncpa [#allocation19], 0
    %36 = vsyncpa [#allocation22], 0
    %37 = vsyncpa [#allocation5], 0
    %s38 = scalar_lea.sflag [#allocation5], 1
    %39 = vsyncpa %s38, 0
    loop: start=0, step=1, limit=4
    $region2: #{tpu_custom_call.1} parent=1 // loop_pre_header
      _
    $region3: #{tpu_custom_call.1} parent=1 // loop_header
      %s41 = sphi 0, %s45
      %p42 = scmp.ge.s32.totalorder %s41, 4
      %s51 = sphi 0, %s53
      %s54 = sphi 0, %s51
      %s55 = sphi 0, %s54
      %s71 = sphi 0, %s55
      %s75 = sphi 0, %s75
      %s77 = sphi 0, %s75
      %s78 = sphi 0, %s77
      %s92 = sphi 0, %s78
      %s96 = sphi 0, %s96
      %s98 = sphi 0, %s96
      %s99 = sphi 0, %s98
      %s113 = sphi 0, %s99
      %s117 = sphi 0, %s117
      %s119 = sphi 0, %s117
      %s120 = sphi 0, %s119
      %s134 = sphi 0, %s120
      %s138 = sphi 0, %s138
      %s140 = sphi 0, %s138
      %s141 = sphi 0, %s140
      %s155 = sphi 0, %s141
      %s159 = sphi 0, %s159
      %s161 = sphi 0, %s159
      %s162 = sphi 0, %s161
      %s176 = sphi 0, %s162
      %s180 = sphi 0, %s180
      %s182 = sphi 0, %s180
      %s183 = sphi 0, %s182
      %s197 = sphi 0, %s183
      %s201 = sphi 0, %s201
      %s203 = sphi 0, %s201
      %s204 = sphi 0, %s203
      %s218 = sphi 0, %s204
      %s222 = sphi 0, %s222
      %s224 = sphi 0, %s222
      %s225 = sphi 0, %s224
      %s239 = sphi 0, %s225
      %s243 = sphi 0, %s243
      %s245 = sphi 0, %s243
      %s246 = sphi 0, %s245
      %s260 = sphi 0, %s246
      %s264 = sphi 0, %s264
      %s266 = sphi 0, %s264
      %s267 = sphi 0, %s266
      %s281 = sphi 0, %s267
      %s285 = sphi 0, %s285
      %s287 = sphi 0, %s285
      %s288 = sphi 0, %s287
      %s302 = sphi 0, %s288
      %s306 = sphi 0, %s306
      %s308 = sphi 0, %s306
      %s309 = sphi 0, %s308
      %s323 = sphi 0, %s309
      %s327 = sphi 0, %s327
      %s329 = sphi 0, %s327
      %s330 = sphi 0, %s329
      %s344 = sphi 0, %s330
      %s348 = sphi 0, %s348
      %s350 = sphi 0, %s348
      %s351 = sphi 0, %s350
      %s365 = sphi 0, %s351
      %s369 = sphi 0, %s369
      %s371 = sphi 0, %s369
      %s372 = sphi 0, %s371
      %s386 = sphi 0, %s372
      %s390 = sphi 0, %s390
      %s392 = sphi 0, %s390
      %s393 = sphi 0, %s392
      %s407 = sphi 0, %s393
      %s411 = sphi 0, %s411
      %s413 = sphi 0, %s411
      %s414 = sphi 0, %s413
      %s428 = sphi 0, %s414
      %s432 = sphi 0, %s432
      %s434 = sphi 0, %s432
      %s435 = sphi 0, %s434
      %s449 = sphi 0, %s435
      %s453 = sphi 0, %s453
      %s455 = sphi 0, %s453
      %s456 = sphi 0, %s455
      %s470 = sphi 0, %s456
      %s474 = sphi 0, %s474
      %s476 = sphi 0, %s474
      %s477 = sphi 0, %s476
      %s491 = sphi 0, %s477
      %s495 = sphi 0, %s495
      %s497 = sphi 0, %s495
      %s498 = sphi 0, %s497
      %s512 = sphi 0, %s498
      %s516 = sphi 0, %s516
      %s518 = sphi 0, %s516
      %s519 = sphi 0, %s518
      %s533 = sphi 0, %s519
      %s539 = sphi 0, %s541
      %s542 = sphi 0, %s539
      %s543 = sphi 0, %s542
      %s559 = sphi 0, %s543
    $region4: #{tpu_custom_call.1} parent=1 // loop_header_branch
      %44 = sbr.rel (%p42) target = $region8
    $region5: #{tpu_custom_call.1} parent=1 // loop_body
      %s46 = ssub.s32 %s41, 1
      %s47 = ssub.s32 %s41, 2
      %s48 = sadd.s32 %s41, 1
      %s49 = ssub.s32 %s41, %s48
      %p50 = scmp.eq.s32.totalorder %s49, 0
      %s52 = sadd.s32 %s51, 1
      %s53 = scalar_select %p50, %s51, %s52
      %p56 = pneg %p50
      %p57 = scmp.eq.s32.totalorder %s41, 1
      %p58 = por %p56, %p57
      %p59 = scmp.ne.s32.totalorder %s51, %s54
      %p60 = scmp.eq.s32.totalorder %s41, 0
      %p61 = por %p59, %p60
      %p62 = scmp.ne.s32.totalorder %s51, %s54
      %p63 = scmp.eq.s32.totalorder %s46, 1
      %p64 = por %p62, %p63
      %p65 = scmp.ne.s32.totalorder %s54, %s55
      %p66 = scmp.eq.s32.totalorder %s46, 0
      %p67 = por %p65, %p66
      %p68 = scmp.ne.s32.totalorder %s54, %s55
      %p69 = scmp.eq.s32.totalorder %s47, 1
      %p70 = por %p68, %p69
      %p72 = scmp.ne.s32.totalorder %s55, %s71
      %p73 = scmp.eq.s32.totalorder %s47, 0
      %p74 = por %p72, %p73
      %s76 = sadd.s32 %s75, 1
      %p79 = scmp.eq.s32.totalorder %s41, 1
      %p80 = scmp.ne.s32.totalorder %s75, %s77
      %p81 = scmp.eq.s32.totalorder %s41, 0
      %p82 = por %p80, %p81
      %p83 = scmp.ne.s32.totalorder %s75, %s77
      %p84 = scmp.eq.s32.totalorder %s46, 1
      %p85 = por %p83, %p84
      %p86 = scmp.ne.s32.totalorder %s77, %s78
      %p87 = scmp.eq.s32.totalorder %s46, 0
      %p88 = por %p86, %p87
      %p89 = scmp.ne.s32.totalorder %s77, %s78
      %p90 = scmp.eq.s32.totalorder %s47, 1
      %p91 = por %p89, %p90
      %p93 = scmp.ne.s32.totalorder %s78, %s92
      %p94 = scmp.eq.s32.totalorder %s47, 0
      %p95 = por %p93, %p94
      %s97 = sadd.s32 %s96, 1
      %p100 = scmp.eq.s32.totalorder %s41, 1
      %p101 = scmp.ne.s32.totalorder %s96, %s98
      %p102 = scmp.eq.s32.totalorder %s41, 0
      %p103 = por %p101, %p102
      %p104 = scmp.ne.s32.totalorder %s96, %s98
      %p105 = scmp.eq.s32.totalorder %s46, 1
      %p106 = por %p104, %p105
      %p107 = scmp.ne.s32.totalorder %s98, %s99
      %p108 = scmp.eq.s32.totalorder %s46, 0
      %p109 = por %p107, %p108
      %p110 = scmp.ne.s32.totalorder %s98, %s99
      %p111 = scmp.eq.s32.totalorder %s47, 1
      %p112 = por %p110, %p111
      %p114 = scmp.ne.s32.totalorder %s99, %s113
      %p115 = scmp.eq.s32.totalorder %s47, 0
      %p116 = por %p114, %p115
      %s118 = sadd.s32 %s117, 1
      %p121 = scmp.eq.s32.totalorder %s41, 1
      %p122 = scmp.ne.s32.totalorder %s117, %s119
      %p123 = scmp.eq.s32.totalorder %s41, 0
      %p124 = por %p122, %p123
      %p125 = scmp.ne.s32.totalorder %s117, %s119
      %p126 = scmp.eq.s32.totalorder %s46, 1
      %p127 = por %p125, %p126
      %p128 = scmp.ne.s32.totalorder %s119, %s120
      %p129 = scmp.eq.s32.totalorder %s46, 0
      %p130 = por %p128, %p129
      %p131 = scmp.ne.s32.totalorder %s119, %s120
      %p132 = scmp.eq.s32.totalorder %s47, 1
      %p133 = por %p131, %p132
      %p135 = scmp.ne.s32.totalorder %s120, %s134
      %p136 = scmp.eq.s32.totalorder %s47, 0
      %p137 = por %p135, %p136
      %s139 = sadd.s32 %s138, 1
      %p142 = scmp.eq.s32.totalorder %s41, 1
      %p143 = scmp.ne.s32.totalorder %s138, %s140
      %p144 = scmp.eq.s32.totalorder %s41, 0
      %p145 = por %p143, %p144
      %p146 = scmp.ne.s32.totalorder %s138, %s140
      %p147 = scmp.eq.s32.totalorder %s46, 1
      %p148 = por %p146, %p147
      %p149 = scmp.ne.s32.totalorder %s140, %s141
      %p150 = scmp.eq.s32.totalorder %s46, 0
      %p151 = por %p149, %p150
      %p152 = scmp.ne.s32.totalorder %s140, %s141
      %p153 = scmp.eq.s32.totalorder %s47, 1
      %p154 = por %p152, %p153
      %p156 = scmp.ne.s32.totalorder %s141, %s155
      %p157 = scmp.eq.s32.totalorder %s47, 0
      %p158 = por %p156, %p157
      %s160 = sadd.s32 %s159, 1
      %p163 = scmp.eq.s32.totalorder %s41, 1
      %p164 = scmp.ne.s32.totalorder %s159, %s161
      %p165 = scmp.eq.s32.totalorder %s41, 0
      %p166 = por %p164, %p165
      %p167 = scmp.ne.s32.totalorder %s159, %s161
      %p168 = scmp.eq.s32.totalorder %s46, 1
      %p169 = por %p167, %p168
      %p170 = scmp.ne.s32.totalorder %s161, %s162
      %p171 = scmp.eq.s32.totalorder %s46, 0
      %p172 = por %p170, %p171
      %p173 = scmp.ne.s32.totalorder %s161, %s162
      %p174 = scmp.eq.s32.totalorder %s47, 1
      %p175 = por %p173, %p174
      %p177 = scmp.ne.s32.totalorder %s162, %s176
      %p178 = scmp.eq.s32.totalorder %s47, 0
      %p179 = por %p177, %p178
      %s181 = sadd.s32 %s180, 1
      %p184 = scmp.eq.s32.totalorder %s41, 1
      %p185 = scmp.ne.s32.totalorder %s180, %s182
      %p186 = scmp.eq.s32.totalorder %s41, 0
      %p187 = por %p185, %p186
      %p188 = scmp.ne.s32.totalorder %s180, %s182
      %p189 = scmp.eq.s32.totalorder %s46, 1
      %p190 = por %p188, %p189
      %p191 = scmp.ne.s32.totalorder %s182, %s183
      %p192 = scmp.eq.s32.totalorder %s46, 0
      %p193 = por %p191, %p192
      %p194 = scmp.ne.s32.totalorder %s182, %s183
      %p195 = scmp.eq.s32.totalorder %s47, 1
      %p196 = por %p194, %p195
      %p198 = scmp.ne.s32.totalorder %s183, %s197
      %p199 = scmp.eq.s32.totalorder %s47, 0
      %p200 = por %p198, %p199
      %s202 = sadd.s32 %s201, 1
      %p205 = scmp.eq.s32.totalorder %s41, 1
      %p206 = scmp.ne.s32.totalorder %s201, %s203
      %p207 = scmp.eq.s32.totalorder %s41, 0
      %p208 = por %p206, %p207
      %p209 = scmp.ne.s32.totalorder %s201, %s203
      %p210 = scmp.eq.s32.totalorder %s46, 1
      %p211 = por %p209, %p210
      %p212 = scmp.ne.s32.totalorder %s203, %s204
      %p213 = scmp.eq.s32.totalorder %s46, 0
      %p214 = por %p212, %p213
      %p215 = scmp.ne.s32.totalorder %s203, %s204
      %p216 = scmp.eq.s32.totalorder %s47, 1
      %p217 = por %p215, %p216
      %p219 = scmp.ne.s32.totalorder %s204, %s218
      %p220 = scmp.eq.s32.totalorder %s47, 0
      %p221 = por %p219, %p220
      %s223 = sadd.s32 %s222, 1
      %p226 = scmp.eq.s32.totalorder %s41, 1
      %p227 = scmp.ne.s32.totalorder %s222, %s224
      %p228 = scmp.eq.s32.totalorder %s41, 0
      %p229 = por %p227, %p228
      %p230 = scmp.ne.s32.totalorder %s222, %s224
      %p231 = scmp.eq.s32.totalorder %s46, 1
      %p232 = por %p230, %p231
      %p233 = scmp.ne.s32.totalorder %s224, %s225
      %p234 = scmp.eq.s32.totalorder %s46, 0
      %p235 = por %p233, %p234
      %p236 = scmp.ne.s32.totalorder %s224, %s225
      %p237 = scmp.eq.s32.totalorder %s47, 1
      %p238 = por %p236, %p237
      %p240 = scmp.ne.s32.totalorder %s225, %s239
      %p241 = scmp.eq.s32.totalorder %s47, 0
      %p242 = por %p240, %p241
      %s244 = sadd.s32 %s243, 1
      %p247 = scmp.eq.s32.totalorder %s41, 1
      %p248 = scmp.ne.s32.totalorder %s243, %s245
      %p249 = scmp.eq.s32.totalorder %s41, 0
      %p250 = por %p248, %p249
      %p251 = scmp.ne.s32.totalorder %s243, %s245
      %p252 = scmp.eq.s32.totalorder %s46, 1
      %p253 = por %p251, %p252
      %p254 = scmp.ne.s32.totalorder %s245, %s246
      %p255 = scmp.eq.s32.totalorder %s46, 0
      %p256 = por %p254, %p255
      %p257 = scmp.ne.s32.totalorder %s245, %s246
      %p258 = scmp.eq.s32.totalorder %s47, 1
      %p259 = por %p257, %p258
      %p261 = scmp.ne.s32.totalorder %s246, %s260
      %p262 = scmp.eq.s32.totalorder %s47, 0
      %p263 = por %p261, %p262
      %s265 = sadd.s32 %s264, 1
      %p268 = scmp.eq.s32.totalorder %s41, 1
      %p269 = scmp.ne.s32.totalorder %s264, %s266
      %p270 = scmp.eq.s32.totalorder %s41, 0
      %p271 = por %p269, %p270
      %p272 = scmp.ne.s32.totalorder %s264, %s266
      %p273 = scmp.eq.s32.totalorder %s46, 1
      %p274 = por %p272, %p273
      %p275 = scmp.ne.s32.totalorder %s266, %s267
      %p276 = scmp.eq.s32.totalorder %s46, 0
      %p277 = por %p275, %p276
      %p278 = scmp.ne.s32.totalorder %s266, %s267
      %p279 = scmp.eq.s32.totalorder %s47, 1
      %p280 = por %p278, %p279
      %p282 = scmp.ne.s32.totalorder %s267, %s281
      %p283 = scmp.eq.s32.totalorder %s47, 0
      %p284 = por %p282, %p283
      %s286 = sadd.s32 %s285, 1
      %p289 = scmp.eq.s32.totalorder %s41, 1
      %p290 = scmp.ne.s32.totalorder %s285, %s287
      %p291 = scmp.eq.s32.totalorder %s41, 0
      %p292 = por %p290, %p291
      %p293 = scmp.ne.s32.totalorder %s285, %s287
      %p294 = scmp.eq.s32.totalorder %s46, 1
      %p295 = por %p293, %p294
      %p296 = scmp.ne.s32.totalorder %s287, %s288
      %p297 = scmp.eq.s32.totalorder %s46, 0
      %p298 = por %p296, %p297
      %p299 = scmp.ne.s32.totalorder %s287, %s288
      %p300 = scmp.eq.s32.totalorder %s47, 1
      %p301 = por %p299, %p300
      %p303 = scmp.ne.s32.totalorder %s288, %s302
      %p304 = scmp.eq.s32.totalorder %s47, 0
      %p305 = por %p303, %p304
      %s307 = sadd.s32 %s306, 1
      %p310 = scmp.eq.s32.totalorder %s41, 1
      %p311 = scmp.ne.s32.totalorder %s306, %s308
      %p312 = scmp.eq.s32.totalorder %s41, 0
      %p313 = por %p311, %p312
      %p314 = scmp.ne.s32.totalorder %s306, %s308
      %p315 = scmp.eq.s32.totalorder %s46, 1
      %p316 = por %p314, %p315
      %p317 = scmp.ne.s32.totalorder %s308, %s309
      %p318 = scmp.eq.s32.totalorder %s46, 0
      %p319 = por %p317, %p318
      %p320 = scmp.ne.s32.totalorder %s308, %s309
      %p321 = scmp.eq.s32.totalorder %s47, 1
      %p322 = por %p320, %p321
      %p324 = scmp.ne.s32.totalorder %s309, %s323
      %p325 = scmp.eq.s32.totalorder %s47, 0
      %p326 = por %p324, %p325
      %s328 = sadd.s32 %s327, 1
      %p331 = scmp.eq.s32.totalorder %s41, 1
      %p332 = scmp.ne.s32.totalorder %s327, %s329
      %p333 = scmp.eq.s32.totalorder %s41, 0
      %p334 = por %p332, %p333
      %p335 = scmp.ne.s32.totalorder %s327, %s329
      %p336 = scmp.eq.s32.totalorder %s46, 1
      %p337 = por %p335, %p336
      %p338 = scmp.ne.s32.totalorder %s329, %s330
      %p339 = scmp.eq.s32.totalorder %s46, 0
      %p340 = por %p338, %p339
      %p341 = scmp.ne.s32.totalorder %s329, %s330
      %p342 = scmp.eq.s32.totalorder %s47, 1
      %p343 = por %p341, %p342
      %p345 = scmp.ne.s32.totalorder %s330, %s344
      %p346 = scmp.eq.s32.totalorder %s47, 0
      %p347 = por %p345, %p346
      %s349 = sadd.s32 %s348, 1
      %p352 = scmp.eq.s32.totalorder %s41, 1
      %p353 = scmp.ne.s32.totalorder %s348, %s350
      %p354 = scmp.eq.s32.totalorder %s41, 0
      %p355 = por %p353, %p354
      %p356 = scmp.ne.s32.totalorder %s348, %s350
      %p357 = scmp.eq.s32.totalorder %s46, 1
      %p358 = por %p356, %p357
      %p359 = scmp.ne.s32.totalorder %s350, %s351
      %p360 = scmp.eq.s32.totalorder %s46, 0
      %p361 = por %p359, %p360
      %p362 = scmp.ne.s32.totalorder %s350, %s351
      %p363 = scmp.eq.s32.totalorder %s47, 1
      %p364 = por %p362, %p363
      %p366 = scmp.ne.s32.totalorder %s351, %s365
      %p367 = scmp.eq.s32.totalorder %s47, 0
      %p368 = por %p366, %p367
      %s370 = sadd.s32 %s369, 1
      %p373 = scmp.eq.s32.totalorder %s41, 1
      %p374 = scmp.ne.s32.totalorder %s369, %s371
      %p375 = scmp.eq.s32.totalorder %s41, 0
      %p376 = por %p374, %p375
      %p377 = scmp.ne.s32.totalorder %s369, %s371
      %p378 = scmp.eq.s32.totalorder %s46, 1
      %p379 = por %p377, %p378
      %p380 = scmp.ne.s32.totalorder %s371, %s372
      %p381 = scmp.eq.s32.totalorder %s46, 0
      %p382 = por %p380, %p381
      %p383 = scmp.ne.s32.totalorder %s371, %s372
      %p384 = scmp.eq.s32.totalorder %s47, 1
      %p385 = por %p383, %p384
      %p387 = scmp.ne.s32.totalorder %s372, %s386
      %p388 = scmp.eq.s32.totalorder %s47, 0
      %p389 = por %p387, %p388
      %s391 = sadd.s32 %s390, 1
      %p394 = scmp.eq.s32.totalorder %s41, 1
      %p395 = scmp.ne.s32.totalorder %s390, %s392
      %p396 = scmp.eq.s32.totalorder %s41, 0
      %p397 = por %p395, %p396
      %p398 = scmp.ne.s32.totalorder %s390, %s392
      %p399 = scmp.eq.s32.totalorder %s46, 1
      %p400 = por %p398, %p399
      %p401 = scmp.ne.s32.totalorder %s392, %s393
      %p402 = scmp.eq.s32.totalorder %s46, 0
      %p403 = por %p401, %p402
      %p404 = scmp.ne.s32.totalorder %s392, %s393
      %p405 = scmp.eq.s32.totalorder %s47, 1
      %p406 = por %p404, %p405
      %p408 = scmp.ne.s32.totalorder %s393, %s407
      %p409 = scmp.eq.s32.totalorder %s47, 0
      %p410 = por %p408, %p409
      %s412 = sadd.s32 %s411, 1
      %p415 = scmp.eq.s32.totalorder %s41, 1
      %p416 = scmp.ne.s32.totalorder %s411, %s413
      %p417 = scmp.eq.s32.totalorder %s41, 0
      %p418 = por %p416, %p417
      %p419 = scmp.ne.s32.totalorder %s411, %s413
      %p420 = scmp.eq.s32.totalorder %s46, 1
      %p421 = por %p419, %p420
      %p422 = scmp.ne.s32.totalorder %s413, %s414
      %p423 = scmp.eq.s32.totalorder %s46, 0
      %p424 = por %p422, %p423
      %p425 = scmp.ne.s32.totalorder %s413, %s414
      %p426 = scmp.eq.s32.totalorder %s47, 1
      %p427 = por %p425, %p426
      %p429 = scmp.ne.s32.totalorder %s414, %s428
      %p430 = scmp.eq.s32.totalorder %s47, 0
      %p431 = por %p429, %p430
      %s433 = sadd.s32 %s432, 1
      %p436 = scmp.eq.s32.totalorder %s41, 1
      %p437 = scmp.ne.s32.totalorder %s432, %s434
      %p438 = scmp.eq.s32.totalorder %s41, 0
      %p439 = por %p437, %p438
      %p440 = scmp.ne.s32.totalorder %s432, %s434
      %p441 = scmp.eq.s32.totalorder %s46, 1
      %p442 = por %p440, %p441
      %p443 = scmp.ne.s32.totalorder %s434, %s435
      %p444 = scmp.eq.s32.totalorder %s46, 0
      %p445 = por %p443, %p444
      %p446 = scmp.ne.s32.totalorder %s434, %s435
      %p447 = scmp.eq.s32.totalorder %s47, 1
      %p448 = por %p446, %p447
      %p450 = scmp.ne.s32.totalorder %s435, %s449
      %p451 = scmp.eq.s32.totalorder %s47, 0
      %p452 = por %p450, %p451
      %s454 = sadd.s32 %s453, 1
      %p457 = scmp.eq.s32.totalorder %s41, 1
      %p458 = scmp.ne.s32.totalorder %s453, %s455
      %p459 = scmp.eq.s32.totalorder %s41, 0
      %p460 = por %p458, %p459
      %p461 = scmp.ne.s32.totalorder %s453, %s455
      %p462 = scmp.eq.s32.totalorder %s46, 1
      %p463 = por %p461, %p462
      %p464 = scmp.ne.s32.totalorder %s455, %s456
      %p465 = scmp.eq.s32.totalorder %s46, 0
      %p466 = por %p464, %p465
      %p467 = scmp.ne.s32.totalorder %s455, %s456
      %p468 = scmp.eq.s32.totalorder %s47, 1
      %p469 = por %p467, %p468
      %p471 = scmp.ne.s32.totalorder %s456, %s470
      %p472 = scmp.eq.s32.totalorder %s47, 0
      %p473 = por %p471, %p472
      %s475 = sadd.s32 %s474, 1
      %p478 = scmp.eq.s32.totalorder %s41, 1
      %p479 = scmp.ne.s32.totalorder %s474, %s476
      %p480 = scmp.eq.s32.totalorder %s41, 0
      %p481 = por %p479, %p480
      %p482 = scmp.ne.s32.totalorder %s474, %s476
      %p483 = scmp.eq.s32.totalorder %s46, 1
      %p484 = por %p482, %p483
      %p485 = scmp.ne.s32.totalorder %s476, %s477
      %p486 = scmp.eq.s32.totalorder %s46, 0
      %p487 = por %p485, %p486
      %p488 = scmp.ne.s32.totalorder %s476, %s477
      %p489 = scmp.eq.s32.totalorder %s47, 1
      %p490 = por %p488, %p489
      %p492 = scmp.ne.s32.totalorder %s477, %s491
      %p493 = scmp.eq.s32.totalorder %s47, 0
      %p494 = por %p492, %p493
      %s496 = sadd.s32 %s495, 1
      %p499 = scmp.eq.s32.totalorder %s41, 1
      %p500 = scmp.ne.s32.totalorder %s495, %s497
      %p501 = scmp.eq.s32.totalorder %s41, 0
      %p502 = por %p500, %p501
      %p503 = scmp.ne.s32.totalorder %s495, %s497
      %p504 = scmp.eq.s32.totalorder %s46, 1
      %p505 = por %p503, %p504
      %p506 = scmp.ne.s32.totalorder %s497, %s498
      %p507 = scmp.eq.s32.totalorder %s46, 0
      %p508 = por %p506, %p507
      %p509 = scmp.ne.s32.totalorder %s497, %s498
      %p510 = scmp.eq.s32.totalorder %s47, 1
      %p511 = por %p509, %p510
      %p513 = scmp.ne.s32.totalorder %s498, %s512
      %p514 = scmp.eq.s32.totalorder %s47, 0
      %p515 = por %p513, %p514
      %s517 = sadd.s32 %s516, 1
      %p520 = scmp.eq.s32.totalorder %s41, 1
      %p521 = scmp.ne.s32.totalorder %s516, %s518
      %p522 = scmp.eq.s32.totalorder %s41, 0
      %p523 = por %p521, %p522
      %p524 = scmp.ne.s32.totalorder %s516, %s518
      %p525 = scmp.eq.s32.totalorder %s46, 1
      %p526 = por %p524, %p525
      %p527 = scmp.ne.s32.totalorder %s518, %s519
      %p528 = scmp.eq.s32.totalorder %s46, 0
      %p529 = por %p527, %p528
      %p530 = scmp.ne.s32.totalorder %s518, %s519
      %p531 = scmp.eq.s32.totalorder %s47, 1
      %p532 = por %p530, %p531
      %p534 = scmp.ne.s32.totalorder %s519, %s533
      %p535 = scmp.eq.s32.totalorder %s47, 0
      %p536 = por %p534, %p535
      %s537 = ssub.s32 %s41, %s48
      %p538 = scmp.eq.s32.totalorder %s537, 0
      %s540 = sadd.s32 %s539, 1
      %s541 = scalar_select %p538, %s539, %s540
      %p544 = pneg %p538
      %p545 = scmp.eq.s32.totalorder %s41, 1
      %p546 = por %p544, %p545
      %p547 = scmp.ne.s32.totalorder %s539, %s542
      %p548 = scmp.eq.s32.totalorder %s41, 0
      %p549 = por %p547, %p548
      %p550 = scmp.ne.s32.totalorder %s539, %s542
      %p551 = scmp.eq.s32.totalorder %s46, 1
      %p552 = por %p550, %p551
      %p553 = scmp.ne.s32.totalorder %s542, %s543
      %p554 = scmp.eq.s32.totalorder %s46, 0
      %p555 = por %p553, %p554
      %p556 = scmp.ne.s32.totalorder %s542, %s543
      %p557 = scmp.eq.s32.totalorder %s47, 1
      %p558 = por %p556, %p557
      %p560 = scmp.ne.s32.totalorder %s543, %s559
      %p561 = scmp.eq.s32.totalorder %s47, 0
      %p562 = por %p560, %p561
      %p563 = scmp.le.s32.totalorder 1, %s41
      %p564 = scmp.lt.s32.totalorder %s41, 3
      %p565 = pnand %p563, %p564
      %p566 = pneg %p565
      // Predicated region
      $region9: #{tpu_custom_call.1} parent=5 // pred_check
        _
      $region10: #{tpu_custom_call.1} parent=5 // pred_check_branch
        %568 = sbr.rel (%p565) target = $region12
      $region11: #{tpu_custom_call.1} parent=5 // pred_region
        %s569 = ssub.s32 %s41, 1
        // Predicated region
        $region13: #{tpu_custom_call.1} parent=11 // pred_check
          %p570 = pneg %p88
        $region14: #{tpu_custom_call.1} parent=11 // pred_check_branch
          %572 = sbr.rel (%p570) target = $region16
        $region15: #{tpu_custom_call.1} parent=11 // pred_region
          _
        $region16: #{tpu_custom_call.1} parent=11 // pred_fallthru
          _
        // Predicated region
        $region17: #{tpu_custom_call.1} parent=11 // pred_check
          %p573 = pneg %p109
        $region18: #{tpu_custom_call.1} parent=11 // pred_check_branch
          %575 = sbr.rel (%p573) target = $region20
        $region19: #{tpu_custom_call.1} parent=11 // pred_region
          _
        $region20: #{tpu_custom_call.1} parent=11 // pred_fallthru
          _
        // Predicated region
        $region21: #{tpu_custom_call.1} parent=11 // pred_check
          %p576 = pneg %p130
        $region22: #{tpu_custom_call.1} parent=11 // pred_check_branch
          %578 = sbr.rel (%p576) target = $region24
        $region23: #{tpu_custom_call.1} parent=11 // pred_region
          %s580 = ssub.s32 512, 512
          %581 = vsyncadd [#allocation7], %s580
          %s582 = sshll.u32 [#allocation6], 4
          %s583 = int_to_ptr.vmem [resolvable:$true] %s582
          %588 = dma.hbm_to_vmem [thread:$0]  %s3, 512, %s583, [#allocation7], 64, 64, 4
        $region24: #{tpu_custom_call.1} parent=11 // pred_fallthru
          _
        // Predicated region
        $region25: #{tpu_custom_call.1} parent=11 // pred_check
          %p589 = pneg %p151
        $region26: #{tpu_custom_call.1} parent=11 // pred_check_branch
          %591 = sbr.rel (%p589) target = $region28
        $region27: #{tpu_custom_call.1} parent=11 // pred_region
          _
        $region28: #{tpu_custom_call.1} parent=11 // pred_fallthru
          _
        // Predicated region
        $region29: #{tpu_custom_call.1} parent=11 // pred_check
          %p592 = pneg %p172
        $region30: #{tpu_custom_call.1} parent=11 // pred_check_branch
          %594 = sbr.rel (%p592) target = $region32
        $region31: #{tpu_custom_call.1} parent=11 // pred_region
          %s596 = ssub.s32 512, 512
          %597 = vsyncadd [#allocation7], %s596
          %s598 = sshll.u32 [#allocation8], 4
          %s599 = int_to_ptr.vmem [resolvable:$true] %s598
          %604 = dma.hbm_to_vmem [thread:$0]  %s5, 512, %s599, [#allocation7], 64, 64, 4
        $region32: #{tpu_custom_call.1} parent=11 // pred_fallthru
          _
        // Predicated region
        $region33: #{tpu_custom_call.1} parent=11 // pred_check
          %p605 = pneg %p193
        $region34: #{tpu_custom_call.1} parent=11 // pred_check_branch
          %607 = sbr.rel (%p605) target = $region36
        $region35: #{tpu_custom_call.1} parent=11 // pred_region
          _
        $region36: #{tpu_custom_call.1} parent=11 // pred_fallthru
          _
        // Predicated region
        $region37: #{tpu_custom_call.1} parent=11 // pred_check
          %p608 = pneg %p214
        $region38: #{tpu_custom_call.1} parent=11 // pred_check_branch
          %610 = sbr.rel (%p608) target = $region40
        $region39: #{tpu_custom_call.1} parent=11 // pred_region
          %s612 = ssub.s32 1024, 1024
          %613 = vsyncadd [#allocation10], %s612
          %s614 = sshll.u32 [#allocation9], 4
          %s615 = int_to_ptr.vmem [resolvable:$true] %s614
          %620 = dma.hbm_to_vmem [thread:$0]  %s7, 1024, %s615, [#allocation10], 64, 64, 4
        $region40: #{tpu_custom_call.1} parent=11 // pred_fallthru
          _
        // Predicated region
        $region41: #{tpu_custom_call.1} parent=11 // pred_check
          %p621 = pneg %p235
        $region42: #{tpu_custom_call.1} parent=11 // pred_check_branch
          %623 = sbr.rel (%p621) target = $region44
        $region43: #{tpu_custom_call.1} parent=11 // pred_region
          %s625 = ssub.s32 1024, 1024
          %626 = vsyncadd [#allocation10], %s625
          %s627 = sshll.u32 [#allocation11], 4
          %s628 = int_to_ptr.vmem [resolvable:$true] %s627
          %633 = dma.hbm_to_vmem [thread:$0]  %s8, 1024, %s628, [#allocation10], 64, 64, 4
        $region44: #{tpu_custom_call.1} parent=11 // pred_fallthru
          _
        // Predicated region
        $region45: #{tpu_custom_call.1} parent=11 // pred_check
          %p634 = pneg %p256
        $region46: #{tpu_custom_call.1} parent=11 // pred_check_branch
          %636 = sbr.rel (%p634) target = $region48
        $region47: #{tpu_custom_call.1} parent=11 // pred_region
          %s638 = ssub.s32 1024, 1024
          %639 = vsyncadd [#allocation13], %s638
          %s640 = sshll.u32 [#allocation12], 4
          %s641 = int_to_ptr.vmem [resolvable:$true] %s640
          %646 = dma.hbm_to_vmem [thread:$0]  %s9, 1024, %s641, [#allocation13], 64, 64, 4
        $region48: #{tpu_custom_call.1} parent=11 // pred_fallthru
          _
        // Predicated region
        $region49: #{tpu_custom_call.1} parent=11 // pred_check
          %p647 = pneg %p277
        $region50: #{tpu_custom_call.1} parent=11 // pred_check_branch
          %649 = sbr.rel (%p647) target = $region52
        $region51: #{tpu_custom_call.1} parent=11 // pred_region
          %s651 = ssub.s32 1024, 1024
          %652 = vsyncadd [#allocation13], %s651
          %s653 = sshll.u32 [#allocation14], 4
          %s654 = int_to_ptr.vmem [resolvable:$true] %s653
          %659 = dma.hbm_to_vmem [thread:$0]  %s10, 1024, %s654, [#allocation13], 64, 64, 4
        $region52: #{tpu_custom_call.1} parent=11 // pred_fallthru
          _
        // Predicated region
        $region53: #{tpu_custom_call.1} parent=11 // pred_check
          %p660 = pneg %p298
        $region54: #{tpu_custom_call.1} parent=11 // pred_check_branch
          %662 = sbr.rel (%p660) target = $region56
        $region55: #{tpu_custom_call.1} parent=11 // pred_region
          %s664 = ssub.s32 1024, 1024
          %665 = vsyncadd [#allocation16], %s664
          %s666 = sshll.u32 [#allocation15], 4
          %s667 = int_to_ptr.vmem [resolvable:$true] %s666
          %672 = dma.hbm_to_vmem [thread:$0]  %s11, 1024, %s667, [#allocation16], 64, 64, 4
        $region56: #{tpu_custom_call.1} parent=11 // pred_fallthru
          _
        // Predicated region
        $region57: #{tpu_custom_call.1} parent=11 // pred_check
          %p673 = pneg %p319
        $region58: #{tpu_custom_call.1} parent=11 // pred_check_branch
          %675 = sbr.rel (%p673) target = $region60
        $region59: #{tpu_custom_call.1} parent=11 // pred_region
          %s677 = ssub.s32 1024, 1024
          %678 = vsyncadd [#allocation16], %s677
          %s679 = sshll.u32 [#allocation17], 4
          %s680 = int_to_ptr.vmem [resolvable:$true] %s679
          %685 = dma.hbm_to_vmem [thread:$0]  %s12, 1024, %s680, [#allocation16], 64, 64, 4
        $region60: #{tpu_custom_call.1} parent=11 // pred_fallthru
          _
        // Predicated region
        $region61: #{tpu_custom_call.1} parent=11 // pred_check
          %p686 = pneg %p340
        $region62: #{tpu_custom_call.1} parent=11 // pred_check_branch
          %688 = sbr.rel (%p686) target = $region64
        $region63: #{tpu_custom_call.1} parent=11 // pred_region
          %s690 = ssub.s32 1024, 1024
          %691 = vsyncadd [#allocation19], %s690
          %s692 = sshll.u32 [#allocation18], 4
          %s693 = int_to_ptr.vmem [resolvable:$true] %s692
          %698 = dma.hbm_to_vmem [thread:$0]  %s13, 1024, %s693, [#allocation19], 64, 64, 4
        $region64: #{tpu_custom_call.1} parent=11 // pred_fallthru
          _
        // Predicated region
        $region65: #{tpu_custom_call.1} parent=11 // pred_check
          %p699 = pneg %p361
        $region66: #{tpu_custom_call.1} parent=11 // pred_check_branch
          %701 = sbr.rel (%p699) target = $region68
        $region67: #{tpu_custom_call.1} parent=11 // pred_region
          _
        $region68: #{tpu_custom_call.1} parent=11 // pred_fallthru
          _
        // Predicated region
        $region69: #{tpu_custom_call.1} parent=11 // pred_check
          %p702 = pneg %p382
        $region70: #{tpu_custom_call.1} parent=11 // pred_check_branch
          %704 = sbr.rel (%p702) target = $region72
        $region71: #{tpu_custom_call.1} parent=11 // pred_region
          _
        $region72: #{tpu_custom_call.1} parent=11 // pred_fallthru
          _
        // Predicated region
        $region73: #{tpu_custom_call.1} parent=11 // pred_check
          %p705 = pneg %p403
        $region74: #{tpu_custom_call.1} parent=11 // pred_check_branch
          %707 = sbr.rel (%p705) target = $region76
        $region75: #{tpu_custom_call.1} parent=11 // pred_region
          _
        $region76: #{tpu_custom_call.1} parent=11 // pred_fallthru
          _
        // Predicated region
        $region77: #{tpu_custom_call.1} parent=11 // pred_check
          %p708 = pneg %p424
        $region78: #{tpu_custom_call.1} parent=11 // pred_check_branch
          %710 = sbr.rel (%p708) target = $region80
        $region79: #{tpu_custom_call.1} parent=11 // pred_region
          _
        $region80: #{tpu_custom_call.1} parent=11 // pred_fallthru
          _
        // Predicated region
        $region81: #{tpu_custom_call.1} parent=11 // pred_check
          %p711 = pneg %p445
        $region82: #{tpu_custom_call.1} parent=11 // pred_check_branch
          %713 = sbr.rel (%p711) target = $region84
        $region83: #{tpu_custom_call.1} parent=11 // pred_region
          _
        $region84: #{tpu_custom_call.1} parent=11 // pred_fallthru
          _
        // Predicated region
        $region85: #{tpu_custom_call.1} parent=11 // pred_check
          %p714 = pneg %p466
        $region86: #{tpu_custom_call.1} parent=11 // pred_check_branch
          %716 = sbr.rel (%p714) target = $region88
        $region87: #{tpu_custom_call.1} parent=11 // pred_region
          %s718 = ssub.s32 4096, 4096
          %719 = vsyncadd [#allocation19], %s718
          %s720 = sshll.u32 [#allocation20], 4
          %s721 = int_to_ptr.vmem [resolvable:$true] %s720
          %726 = dma.hbm_to_vmem [thread:$0]  %s19, 4096, %s721, [#allocation19], 256, 256, 16
        $region88: #{tpu_custom_call.1} parent=11 // pred_fallthru
          _
        // Predicated region
        $region89: #{tpu_custom_call.1} parent=11 // pred_check
          %p727 = pneg %p487
        $region90: #{tpu_custom_call.1} parent=11 // pred_check_branch
          %729 = sbr.rel (%p727) target = $region92
        $region91: #{tpu_custom_call.1} parent=11 // pred_region
          _
        $region92: #{tpu_custom_call.1} parent=11 // pred_fallthru
          _
        // Predicated region
        $region93: #{tpu_custom_call.1} parent=11 // pred_check
          %p730 = pneg %p508
        $region94: #{tpu_custom_call.1} parent=11 // pred_check_branch
          %732 = sbr.rel (%p730) target = $region96
        $region95: #{tpu_custom_call.1} parent=11 // pred_region
          %s734 = ssub.s32 4096, 4096
          %735 = vsyncadd [#allocation22], %s734
          %s736 = sshll.u32 [#allocation21], 4
          %s737 = int_to_ptr.vmem [resolvable:$true] %s736
          %742 = dma.hbm_to_vmem [thread:$0]  %s21, 4096, %s737, [#allocation22], 64, 64, 4
        $region96: #{tpu_custom_call.1} parent=11 // pred_fallthru
          _
        // Predicated region
        $region97: #{tpu_custom_call.1} parent=11 // pred_check
          %p743 = pneg %p529
        $region98: #{tpu_custom_call.1} parent=11 // pred_check_branch
          %745 = sbr.rel (%p743) target = $region100
        $region99: #{tpu_custom_call.1} parent=11 // pred_region
          _
        $region100: #{tpu_custom_call.1} parent=11 // pred_fallthru
          _
      $region12: #{tpu_custom_call.1} parent=5 // pred_fallthru
        _
      %p746 = scmp.lt.s32.totalorder %s41, 2
      // Predicated region
      $region101: #{tpu_custom_call.1} parent=5 // pred_check
        %p747 = pneg %p746
      $region102: #{tpu_custom_call.1} parent=5 // pred_check_branch
        %749 = sbr.rel (%p747) target = $region104
      $region103: #{tpu_custom_call.1} parent=5 // pred_region
        // Predicated region
        $region105: #{tpu_custom_call.1} parent=103 // pred_check
          %p750 = pneg %p61
        $region106: #{tpu_custom_call.1} parent=103 // pred_check_branch
          %752 = sbr.rel (%p750) target = $region108
        $region107: #{tpu_custom_call.1} parent=103 // pred_region
          %s753 = sand.u32 %s51, 1
          %s754 = scalar_lea.sflag [#allocation4], %s753
          %s755 = sand.u32 %s51, 1
          %s756 = smul.addr %s755, 16
          %s757 = scalar_lea.vmem [#allocation3], %s756
          %s759 = ssub.s32 256, 256
          %760 = vsyncadd %s754, %s759
          %s761 = smul.addr %s41, 2
          %s762 = smul.addr %s761, 128
          %s763 = scalar_lea.hbm %s0, %s762
          %s764 = sshll.u32 %s757, 4
          %s765 = int_to_ptr.vmem [resolvable:$true] %s764
          %770 = dma.hbm_to_vmem [thread:$0]  %s763, 256, %s765, %s754, 128, 128, 8
        $region108: #{tpu_custom_call.1} parent=103 // pred_fallthru
          _
      $region104: #{tpu_custom_call.1} parent=5 // pred_fallthru
        _
      %p771 = scmp.le.s32.totalorder 1, %s41
      %p772 = scmp.lt.s32.totalorder %s41, 3
      %p773 = pnand %p771, %p772
      %p774 = pneg %p773
      // Predicated region
      $region109: #{tpu_custom_call.1} parent=5 // pred_check
        _
      $region110: #{tpu_custom_call.1} parent=5 // pred_check_branch
        %776 = sbr.rel (%p773) target = $region112
      $region111: #{tpu_custom_call.1} parent=5 // pred_region
        %s777 = ssub.s32 %s41, 1
        %s778 = sand.u32 %s54, 1
        %s779 = scalar_lea.sflag [#allocation4], %s778
        %s780 = sand.u32 %s54, 1
        %s781 = smul.addr %s780, 16
        %s782 = scalar_lea.vmem [#allocation3], %s781
        // Predicated region
        $region113: #{tpu_custom_call.1} parent=111 // pred_check
          %p783 = pneg %p67
        $region114: #{tpu_custom_call.1} parent=111 // pred_check_branch
          %785 = sbr.rel (%p783) target = $region116
        $region115: #{tpu_custom_call.1} parent=111 // pred_region
          %786 = dma.done %s779, 256
        $region116: #{tpu_custom_call.1} parent=111 // pred_fallthru
          _
        // Predicated region
        $region117: #{tpu_custom_call.1} parent=111 // pred_check
          %p787 = pneg %p130
        $region118: #{tpu_custom_call.1} parent=111 // pred_check_branch
          %789 = sbr.rel (%p787) target = $region120
        $region119: #{tpu_custom_call.1} parent=111 // pred_region
          %790 = dma.done [#allocation7], 512
        $region120: #{tpu_custom_call.1} parent=111 // pred_fallthru
          _
        // Predicated region
        $region121: #{tpu_custom_call.1} parent=111 // pred_check
          %p791 = pneg %p172
        $region122: #{tpu_custom_call.1} parent=111 // pred_check_branch
          %793 = sbr.rel (%p791) target = $region124
        $region123: #{tpu_custom_call.1} parent=111 // pred_region
          %794 = dma.done [#allocation7], 512
        $region124: #{tpu_custom_call.1} parent=111 // pred_fallthru
          _
        // Predicated region
        $region125: #{tpu_custom_call.1} parent=111 // pred_check
          %p795 = pneg %p214
        $region126: #{tpu_custom_call.1} parent=111 // pred_check_branch
          %797 = sbr.rel (%p795) target = $region128
        $region127: #{tpu_custom_call.1} parent=111 // pred_region
          %798 = dma.done [#allocation10], 1024
        $region128: #{tpu_custom_call.1} parent=111 // pred_fallthru
          _
        // Predicated region
        $region129: #{tpu_custom_call.1} parent=111 // pred_check
          %p799 = pneg %p235
        $region130: #{tpu_custom_call.1} parent=111 // pred_check_branch
          %801 = sbr.rel (%p799) target = $region132
        $region131: #{tpu_custom_call.1} parent=111 // pred_region
          %802 = dma.done [#allocation10], 1024
        $region132: #{tpu_custom_call.1} parent=111 // pred_fallthru
          _
        // Predicated region
        $region133: #{tpu_custom_call.1} parent=111 // pred_check
          %p803 = pneg %p256
        $region134: #{tpu_custom_call.1} parent=111 // pred_check_branch
          %805 = sbr.rel (%p803) target = $region136
        $region135: #{tpu_custom_call.1} parent=111 // pred_region
          %806 = dma.done [#allocation13], 1024
        $region136: #{tpu_custom_call.1} parent=111 // pred_fallthru
          _
        // Predicated region
        $region137: #{tpu_custom_call.1} parent=111 // pred_check
          %p807 = pneg %p277
        $region138: #{tpu_custom_call.1} parent=111 // pred_check_branch
          %809 = sbr.rel (%p807) target = $region140
        $region139: #{tpu_custom_call.1} parent=111 // pred_region
          %810 = dma.done [#allocation13], 1024
        $region140: #{tpu_custom_call.1} parent=111 // pred_fallthru
          _
        // Predicated region
        $region141: #{tpu_custom_call.1} parent=111 // pred_check
          %p811 = pneg %p298
        $region142: #{tpu_custom_call.1} parent=111 // pred_check_branch
          %813 = sbr.rel (%p811) target = $region144
        $region143: #{tpu_custom_call.1} parent=111 // pred_region
          %814 = dma.done [#allocation16], 1024
        $region144: #{tpu_custom_call.1} parent=111 // pred_fallthru
          _
        // Predicated region
        $region145: #{tpu_custom_call.1} parent=111 // pred_check
          %p815 = pneg %p319
        $region146: #{tpu_custom_call.1} parent=111 // pred_check_branch
          %817 = sbr.rel (%p815) target = $region148
        $region147: #{tpu_custom_call.1} parent=111 // pred_region
          %818 = dma.done [#allocation16], 1024
        $region148: #{tpu_custom_call.1} parent=111 // pred_fallthru
          _
        // Predicated region
        $region149: #{tpu_custom_call.1} parent=111 // pred_check
          %p819 = pneg %p340
        $region150: #{tpu_custom_call.1} parent=111 // pred_check_branch
          %821 = sbr.rel (%p819) target = $region152
        $region151: #{tpu_custom_call.1} parent=111 // pred_region
          %822 = dma.done [#allocation19], 1024
        $region152: #{tpu_custom_call.1} parent=111 // pred_fallthru
          _
        // Predicated region
        $region153: #{tpu_custom_call.1} parent=111 // pred_check
          %p823 = pneg %p466
        $region154: #{tpu_custom_call.1} parent=111 // pred_check_branch
          %825 = sbr.rel (%p823) target = $region156
        $region155: #{tpu_custom_call.1} parent=111 // pred_region
          %826 = dma.done [#allocation19], 4096
        $region156: #{tpu_custom_call.1} parent=111 // pred_fallthru
          _
        // Predicated region
        $region157: #{tpu_custom_call.1} parent=111 // pred_check
          %p827 = pneg %p508
        $region158: #{tpu_custom_call.1} parent=111 // pred_check_branch
          %829 = sbr.rel (%p827) target = $region160
        $region159: #{tpu_custom_call.1} parent=111 // pred_region
          %830 = dma.done [#allocation22], 4096
        $region160: #{tpu_custom_call.1} parent=111 // pred_fallthru
          _
        %s831 = sand.u32 %s54, 1
        %s832 = scalar_lea.sflag [#allocation4], %s831
        %s833 = sand.u32 %s54, 1
        %s834 = smul.addr %s833, 16
        %s835 = scalar_lea.vmem [#allocation3], %s834
        %p836 = pneg %p67
        %p837 = pneg %p64
        %p838 = pneg %p88
        %p839 = pneg %p85
        %p840 = pneg %p109
        %p841 = pneg %p106
        %p842 = pneg %p130
        %p843 = pneg %p127
        %p844 = pneg %p151
        %p845 = pneg %p148
        %p846 = pneg %p172
        %p847 = pneg %p169
        %p848 = pneg %p193
        %p849 = pneg %p190
        %p850 = pneg %p214
        %p851 = pneg %p211
        %p852 = pneg %p235
        %p853 = pneg %p232
        %p854 = pneg %p256
        %p855 = pneg %p253
        %p856 = pneg %p277
        %p857 = pneg %p274
        %p858 = pneg %p298
        %p859 = pneg %p295
        %p860 = pneg %p319
        %p861 = pneg %p316
        %p862 = pneg %p340
        %p863 = pneg %p337
        %p864 = pneg %p361
        %p865 = pneg %p358
        %p866 = pneg %p382
        %p867 = pneg %p379
        %p868 = pneg %p403
        %p869 = pneg %p400
        %p870 = pneg %p424
        %p871 = pneg %p421
        %p872 = pneg %p445
        %p873 = pneg %p442
        %p874 = pneg %p466
        %p875 = pneg %p463
        %p876 = pneg %p487
        %p877 = pneg %p484
        %p878 = pneg %p508
        %p879 = pneg %p505
        %p880 = pneg %p529
        %p881 = pneg %p526
        %p882 = pneg %p555
        %p883 = pneg %p552
        %s884 = sand.u32 %s542, 1
        %s885 = scalar_lea.sflag [#allocation5], %s884
        %s886 = sand.u32 %s542, 1
        %s887 = smul.addr %s886, 8
        %s888 = scalar_lea.vmem [#allocation23], %s887
        %v890 = vld [vmem:[%s782] sm:$0xff]
        %v891 = vld [vmem:[%s782 + $0x8] sm:$0xff]
        %v892 = vld [vmem:[%s1] sm:$0x1]
        %v893 = vld [vmem:[%s2] sm:$0x1]
        %894 = vadd.xlane.f32.xlu0 %v890
        %v895 = vpop.xlane.xlu0 %894
        %896 = vadd.xlane.f32.xlu0 %v891
        %v897 = vpop.xlane.xlu0 %896
        %v898 = vrcp.pop 128.0
        %v899 = vmul.f32 %v895, %v898
        %v900 = vmul.f32 %v897, %v898
        %v901 = vsub.f32 %v890, %v899
        %v902 = vsub.f32 %v891, %v900
        %v903 = vmul.f32 %v901, %v901
        %v904 = vmul.f32 %v902, %v902
        %905 = vadd.xlane.f32.xlu0 %v903
        %v906 = vpop.xlane.xlu0 %905
        %907 = vadd.xlane.f32.xlu0 %v904
        %v908 = vpop.xlane.xlu0 %907
        %v909 = vmul.f32 %v906, %v898
        %v910 = vmul.f32 %v908, %v898
        %v911 = vadd.f32 %v909, 1e-05
        %v912 = vadd.f32 %v910, 1e-05
        %v913 = vrsqrt.pop %v911
        %v914 = vrsqrt.pop %v912
        %v915 = vmul.f32 %v901, %v913
        %v916 = vmul.f32 %v902, %v914
        %v918 = vlaneseq
        %v919 = vshrl.u32 %v918, 7
        %v920 = vsub.s32 0, %v919
        %v921 = vrot.slane %v892, %v920
        %v923 = vmul.f32 %v915, %v921
        %v924 = vmul.f32 %v916, %v921
        %v926 = vlaneseq
        %v927 = vshrl.u32 %v926, 7
        %v928 = vsub.s32 0, %v927
        %v929 = vrot.slane %v893, %v928
        %v931 = vadd.f32 %v923, %v929
        %v932 = vadd.f32 %v924, %v929
        %v933 = vpack.c.bf16 %v932, %v931
        %v934 = vld [vmem:[#allocation6] sm:$0xf]
        %v935 = vld [vmem:[#allocation6 + $0x4] sm:$0xf]
        %v936 = vld [vmem:[#allocation6 + $0x8] sm:$0xf]
        %v937 = vld [vmem:[#allocation6 + $0xc] sm:$0xf]
        %v938 = vld [vmem:[#allocation6 + $0x10] sm:$0xf]
        %v939 = vld [vmem:[#allocation6 + $0x14] sm:$0xf]
        %v940 = vld [vmem:[#allocation6 + $0x18] sm:$0xf]
        %v941 = vld [vmem:[#allocation6 + $0x1c] sm:$0xf]
        %v942 = vld [vmem:[%s4] sm:$0x1]
        %v944 = vlaneseq
        %v945 = vshrl.u32 %v944, 7
        %v946 = vsub.s32 0, %v945
        %v947 = vrot.slane %v942, %v946
        %v957 = vunpack.c.l.b16 %v934
        %v958 = vunpack.c.l.b16 %v935
        %v959 = vunpack.c.l.b16 %v936
        %v960 = vunpack.c.l.b16 %v937
        %v961 = vunpack.c.l.b16 %v938
        %v962 = vunpack.c.l.b16 %v939
        %v963 = vunpack.c.l.b16 %v940
        %v964 = vunpack.c.l.b16 %v941
        %v965 = vpack.c.b16 %v958, %v957
        %v966 = vpack.c.b16 %v960, %v959
        %v967 = vpack.c.b16 %v962, %v961
        %v968 = vpack.c.b16 %v964, %v963
        %vm973 = vcmask 523264
        %v975 = vsel %vm973, %v933, 0
        %977 = vmatprep.subr.bf16.mxu0 0
        %978 = vmatpush1.bf16.msra.mxu0 %v965
        %979 = vmatprep.subr.bf16.mxu0 0
        %980 = vmatpush1.bf16.msra.mxu0 %v966
        %981 = vmatprep.subr.bf16.mxu0 0
        %982 = vmatpush1.bf16.msra.mxu0 %v967
        %983 = vmatprep.subr.bf16.mxu0 0
        %984 = vmatpush1.bf16.msra.mxu0 %v968
        %985 = vmatprep.subr.bf16.mxu0 0
        %986 = vmatpush1.bf16.msra.mxu0 0
        %987 = vmatprep.subr.bf16.mxu0 0
        %988 = vmatpush1.bf16.msra.mxu0 0
        %989 = vmatprep.subr.bf16.mxu0 0
        %990 = vmatpush1.bf16.msra.mxu0 0
        %991 = vmatprep.subr.bf16.mxu0 0
        %992 = vmatpush1.bf16.msra.mxu0 0
        %993 = vmatprep.subr.bf16.mxu0 0
        %994 = vmatpush1.bf16.msra.mxu0 0
        %995 = vmatprep.subr.bf16.mxu0 0
        %996 = vmatpush1.bf16.msra.mxu0 0
        %997 = vmatprep.subr.bf16.mxu0 0
        %998 = vmatpush1.bf16.msra.mxu0 0
        %999 = vmatprep.subr.bf16.mxu0 0
        %1000 = vmatpush1.bf16.msra.mxu0 0
        %1001 = vmatprep.subr.bf16.mxu0 0
        %1002 = vmatpush1.bf16.msra.mxu0 0
        %1003 = vmatprep.subr.bf16.mxu0 0
        %1004 = vmatpush1.bf16.msra.mxu0 0
        %1005 = vmatprep.subr.bf16.mxu0 0
        %1006 = vmatpush1.bf16.msra.mxu0 0
        %1007 = vmatprep.subr.bf16.mxu0 0
        %1008 = vmatpush1.bf16.msra.mxu0 0
        %1009 = vmatprep.mubr.bf16.mxu0 0
        %1010 = vmatmul.mubr.bf16.gmra.mrb[0].mxu0 %v975
        %v1011 = vpop.f32.mrb[0].mxu0
        %v1012 = vadd.f32 %v947, %v1011
        %v1013 = vpop.f32.mrb[0].mxu0
        %v1014 = vpop.f32.mrb[0].mxu0
        %v1015 = vadd.f32 %v947, %v1014
        %v1016 = vpop.f32.mrb[0].mxu0
        %1017 = vdwg.mxu0
        %v1018 = vpack.c.bf16 %v1015, %v1012
        %v1019 = vld [vmem:[#allocation8] sm:$0xf]
        %v1020 = vld [vmem:[#allocation8 + $0x4] sm:$0xf]
        %v1021 = vld [vmem:[#allocation8 + $0x8] sm:$0xf]
        %v1022 = vld [vmem:[#allocation8 + $0xc] sm:$0xf]
        %v1023 = vld [vmem:[#allocation8 + $0x10] sm:$0xf]
        %v1024 = vld [vmem:[#allocation8 + $0x14] sm:$0xf]
        %v1025 = vld [vmem:[#allocation8 + $0x18] sm:$0xf]
        %v1026 = vld [vmem:[#allocation8 + $0x1c] sm:$0xf]
        %v1027 = vld [vmem:[%s6] sm:$0x1]
        %v1029 = vlaneseq
        %v1030 = vshrl.u32 %v1029, 7
        %v1031 = vsub.s32 0, %v1030
        %v1032 = vrot.slane %v1027, %v1031
        %1035 = vrot.lane.b32.xlu0 %v933, 64
        %v1036 = vpop.permute.xlu0 %1035
        %v1045 = vunpack.c.l.b16 %v1019
        %v1046 = vunpack.c.l.b16 %v1020
        %v1047 = vunpack.c.l.b16 %v1021
        %v1048 = vunpack.c.l.b16 %v1022
        %v1049 = vunpack.c.l.b16 %v1023
        %v1050 = vunpack.c.l.b16 %v1024
        %v1051 = vunpack.c.l.b16 %v1025
        %v1052 = vunpack.c.l.b16 %v1026
        %v1053 = vpack.c.b16 %v1046, %v1045
        %v1054 = vpack.c.b16 %v1048, %v1047
        %v1055 = vpack.c.b16 %v1050, %v1049
        %v1056 = vpack.c.b16 %v1052, %v1051
        %v1062 = vsel %vm973, %v1036, 0
        %1064 = vmatprep.subr.bf16.mxu0 0
        %1065 = vmatpush1.bf16.msra.mxu0 %v1053
        %1066 = vmatprep.subr.bf16.mxu0 0
        %1067 = vmatpush1.bf16.msra.mxu0 %v1054
        %1068 = vmatprep.subr.bf16.mxu0 0
        %1069 = vmatpush1.bf16.msra.mxu0 %v1055
        %1070 = vmatprep.subr.bf16.mxu0 0
        %1071 = vmatpush1.bf16.msra.mxu0 %v1056
        %1072 = vmatprep.subr.bf16.mxu0 0
        %1073 = vmatpush1.bf16.msra.mxu0 0
        %1074 = vmatprep.subr.bf16.mxu0 0
        %1075 = vmatpush1.bf16.msra.mxu0 0
        %1076 = vmatprep.subr.bf16.mxu0 0
        %1077 = vmatpush1.bf16.msra.mxu0 0
        %1078 = vmatprep.subr.bf16.mxu0 0
        %1079 = vmatpush1.bf16.msra.mxu0 0
        %1080 = vmatprep.subr.bf16.mxu0 0
        %1081 = vmatpush1.bf16.msra.mxu0 0
        %1082 = vmatprep.subr.bf16.mxu0 0
        %1083 = vmatpush1.bf16.msra.mxu0 0
        %1084 = vmatprep.subr.bf16.mxu0 0
        %1085 = vmatpush1.bf16.msra.mxu0 0
        %1086 = vmatprep.subr.bf16.mxu0 0
        %1087 = vmatpush1.bf16.msra.mxu0 0
        %1088 = vmatprep.subr.bf16.mxu0 0
        %1089 = vmatpush1.bf16.msra.mxu0 0
        %1090 = vmatprep.subr.bf16.mxu0 0
        %1091 = vmatpush1.bf16.msra.mxu0 0
        %1092 = vmatprep.subr.bf16.mxu0 0
        %1093 = vmatpush1.bf16.msra.mxu0 0
        %1094 = vmatprep.subr.bf16.mxu0 0
        %1095 = vmatpush1.bf16.msra.mxu0 0
        %1096 = vmatprep.mubr.bf16.mxu0 0
        %1097 = vmatmul.mubr.bf16.gmra.mrb[0].mxu0 %v1062
        %v1098 = vpop.f32.mrb[0].mxu0
        %v1099 = vadd.f32 %v1032, %v1098
        %v1100 = vpop.f32.mrb[0].mxu0
        %v1101 = vpop.f32.mrb[0].mxu0
        %v1102 = vadd.f32 %v1032, %v1101
        %v1103 = vpop.f32.mrb[0].mxu0
        %1104 = vdwg.mxu0
        %v1105 = vpack.c.bf16 %v1102, %v1099
        %v1106 = vld [vmem:[#allocation9] sm:$0xf]
        %v1107 = vld [vmem:[#allocation9 + $0x4] sm:$0xf]
        %v1108 = vld [vmem:[#allocation9 + $0x8] sm:$0xf]
        %v1109 = vld [vmem:[#allocation9 + $0xc] sm:$0xf]
        %v1110 = vld [vmem:[#allocation9 + $0x10] sm:$0xf]
        %v1111 = vld [vmem:[#allocation9 + $0x14] sm:$0xf]
        %v1112 = vld [vmem:[#allocation9 + $0x18] sm:$0xf]
        %v1113 = vld [vmem:[#allocation9 + $0x1c] sm:$0xf]
        %v1114 = vld [vmem:[#allocation9 + $0x20] sm:$0xf]
        %v1115 = vld [vmem:[#allocation9 + $0x24] sm:$0xf]
        %v1116 = vld [vmem:[#allocation9 + $0x28] sm:$0xf]
        %v1117 = vld [vmem:[#allocation9 + $0x2c] sm:$0xf]
        %v1118 = vld [vmem:[#allocation9 + $0x30] sm:$0xf]
        %v1119 = vld [vmem:[#allocation9 + $0x34] sm:$0xf]
        %v1120 = vld [vmem:[#allocation9 + $0x38] sm:$0xf]
        %v1121 = vld [vmem:[#allocation9 + $0x3c] sm:$0xf]
        %v1138 = vunpack.c.l.b16 %v1106
        %v1139 = vunpack.c.l.b16 %v1107
        %v1140 = vunpack.c.l.b16 %v1108
        %v1141 = vunpack.c.l.b16 %v1109
        %v1142 = vunpack.c.l.b16 %v1110
        %v1143 = vunpack.c.l.b16 %v1111
        %v1144 = vunpack.c.l.b16 %v1112
        %v1145 = vunpack.c.l.b16 %v1113
        %v1146 = vunpack.c.l.b16 %v1114
        %v1147 = vunpack.c.l.b16 %v1115
        %v1148 = vunpack.c.l.b16 %v1116
        %v1149 = vunpack.c.l.b16 %v1117
        %v1150 = vunpack.c.l.b16 %v1118
        %v1151 = vunpack.c.l.b16 %v1119
        %v1152 = vunpack.c.l.b16 %v1120
        %v1153 = vunpack.c.l.b16 %v1121
        %v1154 = vpack.c.b16 %v1139, %v1138
        %v1155 = vpack.c.b16 %v1141, %v1140
        %v1156 = vpack.c.b16 %v1143, %v1142
        %v1157 = vpack.c.b16 %v1145, %v1144
        %v1158 = vpack.c.b16 %v1147, %v1146
        %v1159 = vpack.c.b16 %v1149, %v1148
        %v1160 = vpack.c.b16 %v1151, %v1150
        %v1161 = vpack.c.b16 %v1153, %v1152
        %1170 = vmatprep.subr.bf16.mxu0 0
        %1171 = vmatpush1.bf16.msra.mxu0 %v1154
        %1172 = vmatprep.subr.bf16.mxu0 0
        %1173 = vmatpush1.bf16.msra.mxu0 %v1155
        %1174 = vmatprep.subr.bf16.mxu0 0
        %1175 = vmatpush1.bf16.msra.mxu0 %v1156
        %1176 = vmatprep.subr.bf16.mxu0 0
        %1177 = vmatpush1.bf16.msra.mxu0 %v1157
        %1178 = vmatprep.subr.bf16.mxu0 0
        %1179 = vmatpush1.bf16.msra.mxu0 %v1158
        %1180 = vmatprep.subr.bf16.mxu0 0
        %1181 = vmatpush1.bf16.msra.mxu0 %v1159
        %1182 = vmatprep.subr.bf16.mxu0 0
        %1183 = vmatpush1.bf16.msra.mxu0 %v1160
        %1184 = vmatprep.subr.bf16.mxu0 0
        %1185 = vmatpush1.bf16.msra.mxu0 %v1161
        %1186 = vmatprep.subr.bf16.mxu0 0
        %1187 = vmatpush1.bf16.msra.mxu0 0
        %1188 = vmatprep.subr.bf16.mxu0 0
        %1189 = vmatpush1.bf16.msra.mxu0 0
        %1190 = vmatprep.subr.bf16.mxu0 0
        %1191 = vmatpush1.bf16.msra.mxu0 0
        %1192 = vmatprep.subr.bf16.mxu0 0
        %1193 = vmatpush1.bf16.msra.mxu0 0
        %1194 = vmatprep.subr.bf16.mxu0 0
        %1195 = vmatpush1.bf16.msra.mxu0 0
        %1196 = vmatprep.subr.bf16.mxu0 0
        %1197 = vmatpush1.bf16.msra.mxu0 0
        %1198 = vmatprep.subr.bf16.mxu0 0
        %1199 = vmatpush1.bf16.msra.mxu0 0
        %1200 = vmatprep.subr.bf16.mxu0 0
        %1201 = vmatpush1.bf16.msra.mxu0 0
        %1202 = vmatprep.mubr.bf16.mxu0 0
        %1203 = vmatmul.mubr.bf16.gmra.mrb[0].mxu0 %v1018
        %v1204 = vpop.f32.mrb[0].mxu0
        %v1205 = vadd.f32 0.0, %v1204
        %v1206 = vpop.f32.mrb[0].mxu0
        %v1207 = vpop.f32.mrb[0].mxu0
        %v1208 = vadd.f32 0.0, %v1207
        %v1209 = vpop.f32.mrb[0].mxu0
        %1210 = vdwg.mxu0
        %v1211 = vpack.c.bf16 %v1208, %v1205
        %v1212 = vld [vmem:[#allocation11] sm:$0xf]
        %v1213 = vld [vmem:[#allocation11 + $0x4] sm:$0xf]
        %v1214 = vld [vmem:[#allocation11 + $0x8] sm:$0xf]
        %v1215 = vld [vmem:[#allocation11 + $0xc] sm:$0xf]
        %v1216 = vld [vmem:[#allocation11 + $0x10] sm:$0xf]
        %v1217 = vld [vmem:[#allocation11 + $0x14] sm:$0xf]
        %v1218 = vld [vmem:[#allocation11 + $0x18] sm:$0xf]
        %v1219 = vld [vmem:[#allocation11 + $0x1c] sm:$0xf]
        %v1220 = vld [vmem:[#allocation11 + $0x20] sm:$0xf]
        %v1221 = vld [vmem:[#allocation11 + $0x24] sm:$0xf]
        %v1222 = vld [vmem:[#allocation11 + $0x28] sm:$0xf]
        %v1223 = vld [vmem:[#allocation11 + $0x2c] sm:$0xf]
        %v1224 = vld [vmem:[#allocation11 + $0x30] sm:$0xf]
        %v1225 = vld [vmem:[#allocation11 + $0x34] sm:$0xf]
        %v1226 = vld [vmem:[#allocation11 + $0x38] sm:$0xf]
        %v1227 = vld [vmem:[#allocation11 + $0x3c] sm:$0xf]
        %v1244 = vunpack.c.l.b16 %v1212
        %v1245 = vunpack.c.l.b16 %v1213
        %v1246 = vunpack.c.l.b16 %v1214
        %v1247 = vunpack.c.l.b16 %v1215
        %v1248 = vunpack.c.l.b16 %v1216
        %v1249 = vunpack.c.l.b16 %v1217
        %v1250 = vunpack.c.l.b16 %v1218
        %v1251 = vunpack.c.l.b16 %v1219
        %v1252 = vunpack.c.l.b16 %v1220
        %v1253 = vunpack.c.l.b16 %v1221
        %v1254 = vunpack.c.l.b16 %v1222
        %v1255 = vunpack.c.l.b16 %v1223
        %v1256 = vunpack.c.l.b16 %v1224
        %v1257 = vunpack.c.l.b16 %v1225
        %v1258 = vunpack.c.l.b16 %v1226
        %v1259 = vunpack.c.l.b16 %v1227
        %v1260 = vpack.c.b16 %v1245, %v1244
        %v1261 = vpack.c.b16 %v1247, %v1246
        %v1262 = vpack.c.b16 %v1249, %v1248
        %v1263 = vpack.c.b16 %v1251, %v1250
        %v1264 = vpack.c.b16 %v1253, %v1252
        %v1265 = vpack.c.b16 %v1255, %v1254
        %v1266 = vpack.c.b16 %v1257, %v1256
        %v1267 = vpack.c.b16 %v1259, %v1258
        %1276 = vmatprep.subr.bf16.mxu0 0
        %1277 = vmatpush1.bf16.msra.mxu0 %v1260
        %1278 = vmatprep.subr.bf16.mxu0 0
        %1279 = vmatpush1.bf16.msra.mxu0 %v1261
        %1280 = vmatprep.subr.bf16.mxu0 0
        %1281 = vmatpush1.bf16.msra.mxu0 %v1262
        %1282 = vmatprep.subr.bf16.mxu0 0
        %1283 = vmatpush1.bf16.msra.mxu0 %v1263
        %1284 = vmatprep.subr.bf16.mxu0 0
        %1285 = vmatpush1.bf16.msra.mxu0 %v1264
        %1286 = vmatprep.subr.bf16.mxu0 0
        %1287 = vmatpush1.bf16.msra.mxu0 %v1265
        %1288 = vmatprep.subr.bf16.mxu0 0
        %1289 = vmatpush1.bf16.msra.mxu0 %v1266
        %1290 = vmatprep.subr.bf16.mxu0 0
        %1291 = vmatpush1.bf16.msra.mxu0 %v1267
        %1292 = vmatprep.subr.bf16.mxu0 0
        %1293 = vmatpush1.bf16.msra.mxu0 0
        %1294 = vmatprep.subr.bf16.mxu0 0
        %1295 = vmatpush1.bf16.msra.mxu0 0
        %1296 = vmatprep.subr.bf16.mxu0 0
        %1297 = vmatpush1.bf16.msra.mxu0 0
        %1298 = vmatprep.subr.bf16.mxu0 0
        %1299 = vmatpush1.bf16.msra.mxu0 0
        %1300 = vmatprep.subr.bf16.mxu0 0
        %1301 = vmatpush1.bf16.msra.mxu0 0
        %1302 = vmatprep.subr.bf16.mxu0 0
        %1303 = vmatpush1.bf16.msra.mxu0 0
        %1304 = vmatprep.subr.bf16.mxu0 0
        %1305 = vmatpush1.bf16.msra.mxu0 0
        %1306 = vmatprep.subr.bf16.mxu0 0
        %1307 = vmatpush1.bf16.msra.mxu0 0
        %1308 = vmatprep.mubr.bf16.mxu0 0
        %1309 = vmatmul.mubr.bf16.gmra.mrb[0].mxu0 %v1018
        %v1310 = vpop.f32.mrb[0].mxu0
        %v1311 = vadd.f32 0.0, %v1310
        %v1312 = vpop.f32.mrb[0].mxu0
        %v1313 = vpop.f32.mrb[0].mxu0
        %v1314 = vadd.f32 0.0, %v1313
        %v1315 = vpop.f32.mrb[0].mxu0
        %1316 = vdwg.mxu0
        %v1317 = vpack.c.bf16 %v1314, %v1311
        %v1318 = vld [vmem:[#allocation12] sm:$0xf]
        %v1319 = vld [vmem:[#allocation12 + $0x4] sm:$0xf]
        %v1320 = vld [vmem:[#allocation12 + $0x8] sm:$0xf]
        %v1321 = vld [vmem:[#allocation12 + $0xc] sm:$0xf]
        %v1322 = vld [vmem:[#allocation12 + $0x10] sm:$0xf]
        %v1323 = vld [vmem:[#allocation12 + $0x14] sm:$0xf]
        %v1324 = vld [vmem:[#allocation12 + $0x18] sm:$0xf]
        %v1325 = vld [vmem:[#allocation12 + $0x1c] sm:$0xf]
        %v1326 = vld [vmem:[#allocation12 + $0x20] sm:$0xf]
        %v1327 = vld [vmem:[#allocation12 + $0x24] sm:$0xf]
        %v1328 = vld [vmem:[#allocation12 + $0x28] sm:$0xf]
        %v1329 = vld [vmem:[#allocation12 + $0x2c] sm:$0xf]
        %v1330 = vld [vmem:[#allocation12 + $0x30] sm:$0xf]
        %v1331 = vld [vmem:[#allocation12 + $0x34] sm:$0xf]
        %v1332 = vld [vmem:[#allocation12 + $0x38] sm:$0xf]
        %v1333 = vld [vmem:[#allocation12 + $0x3c] sm:$0xf]
        %v1334 = vld [vmem:[#allocation14] sm:$0xf]
        %v1335 = vld [vmem:[#allocation14 + $0x4] sm:$0xf]
        %v1336 = vld [vmem:[#allocation14 + $0x8] sm:$0xf]
        %v1337 = vld [vmem:[#allocation14 + $0xc] sm:$0xf]
        %v1338 = vld [vmem:[#allocation14 + $0x10] sm:$0xf]
        %v1339 = vld [vmem:[#allocation14 + $0x14] sm:$0xf]
        %v1340 = vld [vmem:[#allocation14 + $0x18] sm:$0xf]
        %v1341 = vld [vmem:[#allocation14 + $0x1c] sm:$0xf]
        %v1342 = vld [vmem:[#allocation14 + $0x20] sm:$0xf]
        %v1343 = vld [vmem:[#allocation14 + $0x24] sm:$0xf]
        %v1344 = vld [vmem:[#allocation14 + $0x28] sm:$0xf]
        %v1345 = vld [vmem:[#allocation14 + $0x2c] sm:$0xf]
        %v1346 = vld [vmem:[#allocation14 + $0x30] sm:$0xf]
        %v1347 = vld [vmem:[#allocation14 + $0x34] sm:$0xf]
        %v1348 = vld [vmem:[#allocation14 + $0x38] sm:$0xf]
        %v1349 = vld [vmem:[#allocation14 + $0x3c] sm:$0xf]
        %v1366 = vunpack.c.l.b16 %v1334
        %v1367 = vunpack.c.l.b16 %v1335
        %v1368 = vunpack.c.l.b16 %v1336
        %v1369 = vunpack.c.l.b16 %v1337
        %v1370 = vunpack.c.l.b16 %v1338
        %v1371 = vunpack.c.l.b16 %v1339
        %v1372 = vunpack.c.l.b16 %v1340
        %v1373 = vunpack.c.l.b16 %v1341
        %v1374 = vunpack.c.l.b16 %v1342
        %v1375 = vunpack.c.l.b16 %v1343
        %v1376 = vunpack.c.l.b16 %v1344
        %v1377 = vunpack.c.l.b16 %v1345
        %v1378 = vunpack.c.l.b16 %v1346
        %v1379 = vunpack.c.l.b16 %v1347
        %v1380 = vunpack.c.l.b16 %v1348
        %v1381 = vunpack.c.l.b16 %v1349
        %v1382 = vpack.c.b16 %v1367, %v1366
        %v1383 = vpack.c.b16 %v1369, %v1368
        %v1384 = vpack.c.b16 %v1371, %v1370
        %v1385 = vpack.c.b16 %v1373, %v1372
        %v1386 = vpack.c.b16 %v1375, %v1374
        %v1387 = vpack.c.b16 %v1377, %v1376
        %v1388 = vpack.c.b16 %v1379, %v1378
        %v1389 = vpack.c.b16 %v1381, %v1380
        %1398 = vmatprep.subr.bf16.mxu0 0
        %1399 = vmatpush1.bf16.msra.mxu0 %v1382
        %1400 = vmatprep.subr.bf16.mxu0 0
        %1401 = vmatpush1.bf16.msra.mxu0 %v1383
        %1402 = vmatprep.subr.bf16.mxu0 0
        %1403 = vmatpush1.bf16.msra.mxu0 %v1384
        %1404 = vmatprep.subr.bf16.mxu0 0
        %1405 = vmatpush1.bf16.msra.mxu0 %v1385
        %1406 = vmatprep.subr.bf16.mxu0 0
        %1407 = vmatpush1.bf16.msra.mxu0 %v1386
        %1408 = vmatprep.subr.bf16.mxu0 0
        %1409 = vmatpush1.bf16.msra.mxu0 %v1387
        %1410 = vmatprep.subr.bf16.mxu0 0
        %1411 = vmatpush1.bf16.msra.mxu0 %v1388
        %1412 = vmatprep.subr.bf16.mxu0 0
        %1413 = vmatpush1.bf16.msra.mxu0 %v1389
        %1414 = vmatprep.subr.bf16.mxu0 0
        %1415 = vmatpush1.bf16.msra.mxu0 0
        %1416 = vmatprep.subr.bf16.mxu0 0
        %1417 = vmatpush1.bf16.msra.mxu0 0
        %1418 = vmatprep.subr.bf16.mxu0 0
        %1419 = vmatpush1.bf16.msra.mxu0 0
        %1420 = vmatprep.subr.bf16.mxu0 0
        %1421 = vmatpush1.bf16.msra.mxu0 0
        %1422 = vmatprep.subr.bf16.mxu0 0
        %1423 = vmatpush1.bf16.msra.mxu0 0
        %1424 = vmatprep.subr.bf16.mxu0 0
        %1425 = vmatpush1.bf16.msra.mxu0 0
        %1426 = vmatprep.subr.bf16.mxu0 0
        %1427 = vmatpush1.bf16.msra.mxu0 0
        %1428 = vmatprep.subr.bf16.mxu0 0
        %1429 = vmatpush1.bf16.msra.mxu0 0
        %1430 = vmatprep.mubr.bf16.mxu0 0
        %1431 = vmatmul.mubr.bf16.gmra.mrb[0].mxu0 %v1105
        %v1432 = vpop.f32.mrb[0].mxu0
        %v1433 = vadd.f32 0.0, %v1432
        %v1434 = vpop.f32.mrb[0].mxu0
        %v1435 = vpop.f32.mrb[0].mxu0
        %v1436 = vadd.f32 0.0, %v1435
        %v1437 = vpop.f32.mrb[0].mxu0
        %1438 = vdwg.mxu0
        %v1439 = vpack.c.bf16 %v1436, %v1433
        %v1440 = vld [vmem:[#allocation15] sm:$0xf]
        %v1441 = vld [vmem:[#allocation15 + $0x4] sm:$0xf]
        %v1442 = vld [vmem:[#allocation15 + $0x8] sm:$0xf]
        %v1443 = vld [vmem:[#allocation15 + $0xc] sm:$0xf]
        %v1444 = vld [vmem:[#allocation15 + $0x10] sm:$0xf]
        %v1445 = vld [vmem:[#allocation15 + $0x14] sm:$0xf]
        %v1446 = vld [vmem:[#allocation15 + $0x18] sm:$0xf]
        %v1447 = vld [vmem:[#allocation15 + $0x1c] sm:$0xf]
        %v1448 = vld [vmem:[#allocation15 + $0x20] sm:$0xf]
        %v1449 = vld [vmem:[#allocation15 + $0x24] sm:$0xf]
        %v1450 = vld [vmem:[#allocation15 + $0x28] sm:$0xf]
        %v1451 = vld [vmem:[#allocation15 + $0x2c] sm:$0xf]
        %v1452 = vld [vmem:[#allocation15 + $0x30] sm:$0xf]
        %v1453 = vld [vmem:[#allocation15 + $0x34] sm:$0xf]
        %v1454 = vld [vmem:[#allocation15 + $0x38] sm:$0xf]
        %v1455 = vld [vmem:[#allocation15 + $0x3c] sm:$0xf]
        %v1472 = vunpack.c.l.b16 %v1440
        %v1473 = vunpack.c.l.b16 %v1441
        %v1474 = vunpack.c.l.b16 %v1442
        %v1475 = vunpack.c.l.b16 %v1443
        %v1476 = vunpack.c.l.b16 %v1444
        %v1477 = vunpack.c.l.b16 %v1445
        %v1478 = vunpack.c.l.b16 %v1446
        %v1479 = vunpack.c.l.b16 %v1447
        %v1480 = vunpack.c.l.b16 %v1448
        %v1481 = vunpack.c.l.b16 %v1449
        %v1482 = vunpack.c.l.b16 %v1450
        %v1483 = vunpack.c.l.b16 %v1451
        %v1484 = vunpack.c.l.b16 %v1452
        %v1485 = vunpack.c.l.b16 %v1453
        %v1486 = vunpack.c.l.b16 %v1454
        %v1487 = vunpack.c.l.b16 %v1455
        %v1488 = vpack.c.b16 %v1473, %v1472
        %v1489 = vpack.c.b16 %v1475, %v1474
        %v1490 = vpack.c.b16 %v1477, %v1476
        %v1491 = vpack.c.b16 %v1479, %v1478
        %v1492 = vpack.c.b16 %v1481, %v1480
        %v1493 = vpack.c.b16 %v1483, %v1482
        %v1494 = vpack.c.b16 %v1485, %v1484
        %v1495 = vpack.c.b16 %v1487, %v1486
        %1504 = vmatprep.subr.bf16.mxu0 0
        %1505 = vmatpush1.bf16.msra.mxu0 %v1488
        %1506 = vmatprep.subr.bf16.mxu0 0
        %1507 = vmatpush1.bf16.msra.mxu0 %v1489
        %1508 = vmatprep.subr.bf16.mxu0 0
        %1509 = vmatpush1.bf16.msra.mxu0 %v1490
        %1510 = vmatprep.subr.bf16.mxu0 0
        %1511 = vmatpush1.bf16.msra.mxu0 %v1491
        %1512 = vmatprep.subr.bf16.mxu0 0
        %1513 = vmatpush1.bf16.msra.mxu0 %v1492
        %1514 = vmatprep.subr.bf16.mxu0 0
        %1515 = vmatpush1.bf16.msra.mxu0 %v1493
        %1516 = vmatprep.subr.bf16.mxu0 0
        %1517 = vmatpush1.bf16.msra.mxu0 %v1494
        %1518 = vmatprep.subr.bf16.mxu0 0
        %1519 = vmatpush1.bf16.msra.mxu0 %v1495
        %1520 = vmatprep.subr.bf16.mxu0 0
        %1521 = vmatpush1.bf16.msra.mxu0 0
        %1522 = vmatprep.subr.bf16.mxu0 0
        %1523 = vmatpush1.bf16.msra.mxu0 0
        %1524 = vmatprep.subr.bf16.mxu0 0
        %1525 = vmatpush1.bf16.msra.mxu0 0
        %1526 = vmatprep.subr.bf16.mxu0 0
        %1527 = vmatpush1.bf16.msra.mxu0 0
        %1528 = vmatprep.subr.bf16.mxu0 0
        %1529 = vmatpush1.bf16.msra.mxu0 0
        %1530 = vmatprep.subr.bf16.mxu0 0
        %1531 = vmatpush1.bf16.msra.mxu0 0
        %1532 = vmatprep.subr.bf16.mxu0 0
        %1533 = vmatpush1.bf16.msra.mxu0 0
        %1534 = vmatprep.subr.bf16.mxu0 0
        %1535 = vmatpush1.bf16.msra.mxu0 0
        %1536 = vmatprep.mubr.bf16.mxu0 0
        %1537 = vmatmul.mubr.bf16.gmra.mrb[0].mxu0 %v1105
        %v1538 = vpop.f32.mrb[0].mxu0
        %v1539 = vadd.f32 0.0, %v1538
        %v1540 = vpop.f32.mrb[0].mxu0
        %v1541 = vpop.f32.mrb[0].mxu0
        %v1542 = vadd.f32 0.0, %v1541
        %v1543 = vpop.f32.mrb[0].mxu0
        %1544 = vdwg.mxu0
        %v1545 = vpack.c.bf16 %v1542, %v1539
        %v1546 = vld [vmem:[#allocation17] sm:$0xf]
        %v1547 = vld [vmem:[#allocation17 + $0x4] sm:$0xf]
        %v1548 = vld [vmem:[#allocation17 + $0x8] sm:$0xf]
        %v1549 = vld [vmem:[#allocation17 + $0xc] sm:$0xf]
        %v1550 = vld [vmem:[#allocation17 + $0x10] sm:$0xf]
        %v1551 = vld [vmem:[#allocation17 + $0x14] sm:$0xf]
        %v1552 = vld [vmem:[#allocation17 + $0x18] sm:$0xf]
        %v1553 = vld [vmem:[#allocation17 + $0x1c] sm:$0xf]
        %v1554 = vld [vmem:[#allocation17 + $0x20] sm:$0xf]
        %v1555 = vld [vmem:[#allocation17 + $0x24] sm:$0xf]
        %v1556 = vld [vmem:[#allocation17 + $0x28] sm:$0xf]
        %v1557 = vld [vmem:[#allocation17 + $0x2c] sm:$0xf]
        %v1558 = vld [vmem:[#allocation17 + $0x30] sm:$0xf]
        %v1559 = vld [vmem:[#allocation17 + $0x34] sm:$0xf]
        %v1560 = vld [vmem:[#allocation17 + $0x38] sm:$0xf]
        %v1561 = vld [vmem:[#allocation17 + $0x3c] sm:$0xf]
        %v1578 = vunpack.c.l.b16 %v1546
        %v1579 = vunpack.c.l.b16 %v1547
        %v1580 = vunpack.c.l.b16 %v1548
        %v1581 = vunpack.c.l.b16 %v1549
        %v1582 = vunpack.c.l.b16 %v1550
        %v1583 = vunpack.c.l.b16 %v1551
        %v1584 = vunpack.c.l.b16 %v1552
        %v1585 = vunpack.c.l.b16 %v1553
        %v1586 = vunpack.c.l.b16 %v1554
        %v1587 = vunpack.c.l.b16 %v1555
        %v1588 = vunpack.c.l.b16 %v1556
        %v1589 = vunpack.c.l.b16 %v1557
        %v1590 = vunpack.c.l.b16 %v1558
        %v1591 = vunpack.c.l.b16 %v1559
        %v1592 = vunpack.c.l.b16 %v1560
        %v1593 = vunpack.c.l.b16 %v1561
        %v1594 = vpack.c.b16 %v1579, %v1578
        %v1595 = vpack.c.b16 %v1581, %v1580
        %v1596 = vpack.c.b16 %v1583, %v1582
        %v1597 = vpack.c.b16 %v1585, %v1584
        %v1598 = vpack.c.b16 %v1587, %v1586
        %v1599 = vpack.c.b16 %v1589, %v1588
        %v1600 = vpack.c.b16 %v1591, %v1590
        %v1601 = vpack.c.b16 %v1593, %v1592
        %1610 = vmatprep.subr.bf16.mxu0 0
        %1611 = vmatpush1.bf16.msra.mxu0 %v1594
        %1612 = vmatprep.subr.bf16.mxu0 0
        %1613 = vmatpush1.bf16.msra.mxu0 %v1595
        %1614 = vmatprep.subr.bf16.mxu0 0
        %1615 = vmatpush1.bf16.msra.mxu0 %v1596
        %1616 = vmatprep.subr.bf16.mxu0 0
        %1617 = vmatpush1.bf16.msra.mxu0 %v1597
        %1618 = vmatprep.subr.bf16.mxu0 0
        %1619 = vmatpush1.bf16.msra.mxu0 %v1598
        %1620 = vmatprep.subr.bf16.mxu0 0
        %1621 = vmatpush1.bf16.msra.mxu0 %v1599
        %1622 = vmatprep.subr.bf16.mxu0 0
        %1623 = vmatpush1.bf16.msra.mxu0 %v1600
        %1624 = vmatprep.subr.bf16.mxu0 0
        %1625 = vmatpush1.bf16.msra.mxu0 %v1601
        %1626 = vmatprep.subr.bf16.mxu0 0
        %1627 = vmatpush1.bf16.msra.mxu0 0
        %1628 = vmatprep.subr.bf16.mxu0 0
        %1629 = vmatpush1.bf16.msra.mxu0 0
        %1630 = vmatprep.subr.bf16.mxu0 0
        %1631 = vmatpush1.bf16.msra.mxu0 0
        %1632 = vmatprep.subr.bf16.mxu0 0
        %1633 = vmatpush1.bf16.msra.mxu0 0
        %1634 = vmatprep.subr.bf16.mxu0 0
        %1635 = vmatpush1.bf16.msra.mxu0 0
        %1636 = vmatprep.subr.bf16.mxu0 0
        %1637 = vmatpush1.bf16.msra.mxu0 0
        %1638 = vmatprep.subr.bf16.mxu0 0
        %1639 = vmatpush1.bf16.msra.mxu0 0
        %1640 = vmatprep.subr.bf16.mxu0 0
        %1641 = vmatpush1.bf16.msra.mxu0 0
        %1642 = vmatprep.mubr.bf16.mxu0 0
        %1643 = vmatmul.mubr.bf16.gmra.mrb[0].mxu0 %v1105
        %v1644 = vpop.f32.mrb[0].mxu0
        %v1645 = vadd.f32 0.0, %v1644
        %v1646 = vpop.f32.mrb[0].mxu0
        %v1647 = vpop.f32.mrb[0].mxu0
        %v1648 = vadd.f32 0.0, %v1647
        %v1649 = vpop.f32.mrb[0].mxu0
        %1650 = vdwg.mxu0
        %v1667 = vunpack.c.l.b16 %v1318
        %v1668 = vunpack.c.l.b16 %v1319
        %v1669 = vunpack.c.l.b16 %v1320
        %v1670 = vunpack.c.l.b16 %v1321
        %v1671 = vunpack.c.l.b16 %v1322
        %v1672 = vunpack.c.l.b16 %v1323
        %v1673 = vunpack.c.l.b16 %v1324
        %v1674 = vunpack.c.l.b16 %v1325
        %v1675 = vunpack.c.l.b16 %v1326
        %v1676 = vunpack.c.l.b16 %v1327
        %v1677 = vunpack.c.l.b16 %v1328
        %v1678 = vunpack.c.l.b16 %v1329
        %v1679 = vunpack.c.l.b16 %v1330
        %v1680 = vunpack.c.l.b16 %v1331
        %v1681 = vunpack.c.l.b16 %v1332
        %v1682 = vunpack.c.l.b16 %v1333
        %v1683 = vpack.c.b16 %v1668, %v1667
        %v1684 = vpack.c.b16 %v1670, %v1669
        %v1685 = vpack.c.b16 %v1672, %v1671
        %v1686 = vpack.c.b16 %v1674, %v1673
        %v1687 = vpack.c.b16 %v1676, %v1675
        %v1688 = vpack.c.b16 %v1678, %v1677
        %v1689 = vpack.c.b16 %v1680, %v1679
        %v1690 = vpack.c.b16 %v1682, %v1681
        %1699 = vmatprep.subr.bf16.mxu0 0
        %1700 = vmatpush1.bf16.msra.mxu0 %v1683
        %1701 = vmatprep.subr.bf16.mxu0 0
        %1702 = vmatpush1.bf16.msra.mxu0 %v1684
        %1703 = vmatprep.subr.bf16.mxu0 0
        %1704 = vmatpush1.bf16.msra.mxu0 %v1685
        %1705 = vmatprep.subr.bf16.mxu0 0
        %1706 = vmatpush1.bf16.msra.mxu0 %v1686
        %1707 = vmatprep.subr.bf16.mxu0 0
        %1708 = vmatpush1.bf16.msra.mxu0 %v1687
        %1709 = vmatprep.subr.bf16.mxu0 0
        %1710 = vmatpush1.bf16.msra.mxu0 %v1688
        %1711 = vmatprep.subr.bf16.mxu0 0
        %1712 = vmatpush1.bf16.msra.mxu0 %v1689
        %1713 = vmatprep.subr.bf16.mxu0 0
        %1714 = vmatpush1.bf16.msra.mxu0 %v1690
        %1715 = vmatprep.subr.bf16.mxu0 0
        %1716 = vmatpush1.bf16.msra.mxu0 0
        %1717 = vmatprep.subr.bf16.mxu0 0
        %1718 = vmatpush1.bf16.msra.mxu0 0
        %1719 = vmatprep.subr.bf16.mxu0 0
        %1720 = vmatpush1.bf16.msra.mxu0 0
        %1721 = vmatprep.subr.bf16.mxu0 0
        %1722 = vmatpush1.bf16.msra.mxu0 0
        %1723 = vmatprep.subr.bf16.mxu0 0
        %1724 = vmatpush1.bf16.msra.mxu0 0
        %1725 = vmatprep.subr.bf16.mxu0 0
        %1726 = vmatpush1.bf16.msra.mxu0 0
        %1727 = vmatprep.subr.bf16.mxu0 0
        %1728 = vmatpush1.bf16.msra.mxu0 0
        %1729 = vmatprep.subr.bf16.mxu0 0
        %1730 = vmatpush1.bf16.msra.mxu0 0
        %1731 = vmatprep.mubr.bf16.mxu0 0
        %1732 = vmatmul.mubr.bf16.gmra.mrb[0].mxu0 %v1018
        %v1733 = vpop.f32.mrb[0].mxu0
        %v1734 = vadd.f32 %v1645, %v1733
        %v1735 = vpop.f32.mrb[0].mxu0
        %v1736 = vpop.f32.mrb[0].mxu0
        %v1737 = vadd.f32 %v1648, %v1736
        %v1738 = vpop.f32.mrb[0].mxu0
        %1739 = vdwg.mxu0
        %v1740 = vmul.f32 %v1734, 0.5
        %v1741 = vmul.f32 %v1737, 0.5
        %v1742 = vpack.c.bf16 %v1741, %v1740
        %vm1743 = vcmask 261120
        %v1745 = vsel %vm1743, %v1211, 0
        %v1748 = vsel %vm1743, %v1317, 0
        %1750 = vmatprep.subr.bf16.mxu0 0
        %1751 = vmatpush1.bf16.xpose.msra.mxu0 %v1748
        %1752 = vmatprep.subr.bf16.mxu0 0
        %1753 = vmatpush1.bf16.xpose.msra.mxu0 0
        %1754 = vmatprep.subr.bf16.mxu0 0
        %1755 = vmatpush1.bf16.xpose.msra.mxu0 0
        %1756 = vmatprep.subr.bf16.mxu0 0
        %1757 = vmatpush1.bf16.xpose.msra.mxu0 0
        %1758 = vmatprep.subr.bf16.mxu0 0
        %1759 = vmatpush1.bf16.xpose.msra.mxu0 0
        %1760 = vmatprep.subr.bf16.mxu0 0
        %1761 = vmatpush1.bf16.xpose.msra.mxu0 0
        %1762 = vmatprep.subr.bf16.mxu0 0
        %1763 = vmatpush1.bf16.xpose.msra.mxu0 0
        %1764 = vmatprep.subr.bf16.mxu0 0
        %1765 = vmatpush1.bf16.xpose.msra.mxu0 0
        %1766 = vmatprep.subr.bf16.mxu0 0
        %1767 = vmatpush1.bf16.xpose.msra.mxu0 0
        %1768 = vmatprep.subr.bf16.mxu0 0
        %1769 = vmatpush1.bf16.xpose.msra.mxu0 0
        %1770 = vmatprep.subr.bf16.mxu0 0
        %1771 = vmatpush1.bf16.xpose.msra.mxu0 0
        %1772 = vmatprep.subr.bf16.mxu0 0
        %1773 = vmatpush1.bf16.xpose.msra.mxu0 0
        %1774 = vmatprep.subr.bf16.mxu0 0
        %1775 = vmatpush1.bf16.xpose.msra.mxu0 0
        %1776 = vmatprep.subr.bf16.mxu0 0
        %1777 = vmatpush1.bf16.xpose.msra.mxu0 0
        %1778 = vmatprep.subr.bf16.mxu0 0
        %1779 = vmatpush1.bf16.xpose.msra.mxu0 0
        %1780 = vmatprep.subr.bf16.mxu0 0
        %1781 = vmatpush1.bf16.xpose.msra.mxu0 0
        %1782 = vmatprep.mubr.bf16.mxu0 0
        %1783 = vmatmul.mubr.bf16.gmra.mrb[0].mxu0 %v1745
        %v1784 = vpop.f32.mrb[0].mxu0
        %v1785 = vadd.f32 0.0, %v1784
        %v1786 = vpop.f32.mrb[0].mxu0
        %v1787 = vpop.f32.mrb[0].mxu0
        %v1788 = vadd.f32 0.0, %v1787
        %v1789 = vpop.f32.mrb[0].mxu0
        %1790 = vdwg.mxu0
        %v1792 = vsel %vm1743, %v1439, 0
        %v1795 = vsel %vm1743, %v1545, 0
        %1797 = vmatprep.subr.bf16.mxu0 0
        %1798 = vmatpush1.bf16.xpose.msra.mxu0 %v1795
        %1799 = vmatprep.subr.bf16.mxu0 0
        %1800 = vmatpush1.bf16.xpose.msra.mxu0 0
        %1801 = vmatprep.subr.bf16.mxu0 0
        %1802 = vmatpush1.bf16.xpose.msra.mxu0 0
        %1803 = vmatprep.subr.bf16.mxu0 0
        %1804 = vmatpush1.bf16.xpose.msra.mxu0 0
        %1805 = vmatprep.subr.bf16.mxu0 0
        %1806 = vmatpush1.bf16.xpose.msra.mxu0 0
        %1807 = vmatprep.subr.bf16.mxu0 0
        %1808 = vmatpush1.bf16.xpose.msra.mxu0 0
        %1809 = vmatprep.subr.bf16.mxu0 0
        %1810 = vmatpush1.bf16.xpose.msra.mxu0 0
        %1811 = vmatprep.subr.bf16.mxu0 0
        %1812 = vmatpush1.bf16.xpose.msra.mxu0 0
        %1813 = vmatprep.subr.bf16.mxu0 0
        %1814 = vmatpush1.bf16.xpose.msra.mxu0 0
        %1815 = vmatprep.subr.bf16.mxu0 0
        %1816 = vmatpush1.bf16.xpose.msra.mxu0 0
        %1817 = vmatprep.subr.bf16.mxu0 0
        %1818 = vmatpush1.bf16.xpose.msra.mxu0 0
        %1819 = vmatprep.subr.bf16.mxu0 0
        %1820 = vmatpush1.bf16.xpose.msra.mxu0 0
        %1821 = vmatprep.subr.bf16.mxu0 0
        %1822 = vmatpush1.bf16.xpose.msra.mxu0 0
        %1823 = vmatprep.subr.bf16.mxu0 0
        %1824 = vmatpush1.bf16.xpose.msra.mxu0 0
        %1825 = vmatprep.subr.bf16.mxu0 0
        %1826 = vmatpush1.bf16.xpose.msra.mxu0 0
        %1827 = vmatprep.subr.bf16.mxu0 0
        %1828 = vmatpush1.bf16.xpose.msra.mxu0 0
        %1829 = vmatprep.mubr.bf16.mxu0 0
        %1830 = vmatmul.mubr.bf16.gmra.mrb[0].mxu0 %v1792
        %v1831 = vpop.f32.mrb[0].mxu0
        %v1832 = vadd.f32 0.0, %v1831
        %v1833 = vpop.f32.mrb[0].mxu0
        %v1834 = vpop.f32.mrb[0].mxu0
        %v1835 = vadd.f32 0.0, %v1834
        %v1836 = vpop.f32.mrb[0].mxu0
        %1837 = vdwg.mxu0
        %vm1838 = vcmask 130048
        %v1839 = vsel %vm1838, %v1785, -inf
        %1840 = vmax.xlane.f32.xlu0 %v1839
        %v1841 = vpop.xlane.xlu0 %1840
        %v1842 = vsel %vm1838, %v1788, -inf
        %1843 = vmax.xlane.f32.xlu0 %v1842
        %v1844 = vpop.xlane.xlu0 %1843
        %v1845 = vsub.f32 %v1785, %v1841
        %v1846 = vsub.f32 %v1788, %v1844
        %v1847 = vmul.f32 %v1845, 1.442695
        %v1848 = vpow.pop %v1847
        %v1849 = vmul.f32 %v1846, 1.442695
        %v1850 = vpow.pop %v1849
        %v1851 = vsel %vm1838, %v1848, 0.0
        %1852 = vadd.xlane.f32.xlu0 %v1851
        %v1853 = vpop.xlane.xlu0 %1852
        %v1854 = vsel %vm1838, %v1850, 0.0
        %1855 = vadd.xlane.f32.xlu0 %v1854
        %v1856 = vpop.xlane.xlu0 %1855
        %v1857 = vrcp.pop %v1853
        %v1858 = vmul.f32 %v1848, %v1857
        %v1859 = vrcp.pop %v1856
        %v1860 = vmul.f32 %v1850, %v1859
        %v1861 = vsel %vm1838, %v1832, -inf
        %1862 = vmax.xlane.f32.xlu0 %v1861
        %v1863 = vpop.xlane.xlu0 %1862
        %v1864 = vsel %vm1838, %v1835, -inf
        %1865 = vmax.xlane.f32.xlu0 %v1864
        %v1866 = vpop.xlane.xlu0 %1865
        %v1867 = vsub.f32 %v1832, %v1863
        %v1868 = vsub.f32 %v1835, %v1866
        %v1869 = vmul.f32 %v1867, 1.442695
        %v1870 = vpow.pop %v1869
        %v1871 = vmul.f32 %v1868, 1.442695
        %v1872 = vpow.pop %v1871
        %v1873 = vsel %vm1838, %v1870, 0.0
        %1874 = vadd.xlane.f32.xlu0 %v1873
        %v1875 = vpop.xlane.xlu0 %1874
        %v1876 = vsel %vm1838, %v1872, 0.0
        %1877 = vadd.xlane.f32.xlu0 %v1876
        %v1878 = vpop.xlane.xlu0 %1877
        %v1879 = vrcp.pop %v1875
        %v1880 = vmul.f32 %v1870, %v1879
        %v1881 = vrcp.pop %v1878
        %v1882 = vmul.f32 %v1872, %v1881
        %v1883 = vsub.f32 %v1858, %v1880
        %v1884 = vsub.f32 %v1860, %v1882
        %v1885 = vpack.c.bf16 %v1884, %v1883
        %v1887 = vsel %vm1838, %v1885, 0
        %1889 = vmatprep.subr.bf16.mxu0 0
        %1890 = vmatpush1.bf16.msra.mxu0 %v1742
        %1891 = vmatprep.subr.bf16.mxu0 0
        %1892 = vmatpush1.bf16.msra.mxu0 0
        %1893 = vmatprep.subr.bf16.mxu0 0
        %1894 = vmatpush1.bf16.msra.mxu0 0
        %1895 = vmatprep.subr.bf16.mxu0 0
        %1896 = vmatpush1.bf16.msra.mxu0 0
        %1897 = vmatprep.subr.bf16.mxu0 0
        %1898 = vmatpush1.bf16.msra.mxu0 0
        %1899 = vmatprep.subr.bf16.mxu0 0
        %1900 = vmatpush1.bf16.msra.mxu0 0
        %1901 = vmatprep.subr.bf16.mxu0 0
        %1902 = vmatpush1.bf16.msra.mxu0 0
        %1903 = vmatprep.subr.bf16.mxu0 0
        %1904 = vmatpush1.bf16.msra.mxu0 0
        %1905 = vmatprep.subr.bf16.mxu0 0
        %1906 = vmatpush1.bf16.msra.mxu0 0
        %1907 = vmatprep.subr.bf16.mxu0 0
        %1908 = vmatpush1.bf16.msra.mxu0 0
        %1909 = vmatprep.subr.bf16.mxu0 0
        %1910 = vmatpush1.bf16.msra.mxu0 0
        %1911 = vmatprep.subr.bf16.mxu0 0
        %1912 = vmatpush1.bf16.msra.mxu0 0
        %1913 = vmatprep.subr.bf16.mxu0 0
        %1914 = vmatpush1.bf16.msra.mxu0 0
        %1915 = vmatprep.subr.bf16.mxu0 0
        %1916 = vmatpush1.bf16.msra.mxu0 0
        %1917 = vmatprep.subr.bf16.mxu0 0
        %1918 = vmatpush1.bf16.msra.mxu0 0
        %1919 = vmatprep.subr.bf16.mxu0 0
        %1920 = vmatpush1.bf16.msra.mxu0 0
        %1921 = vmatprep.mubr.bf16.mxu0 0
        %1922 = vmatmul.mubr.bf16.gmra.mrb[0].mxu0 %v1887
        %v1923 = vpop.f32.mrb[0].mxu0
        %v1924 = vadd.f32 0.0, %v1923
        %v1925 = vpop.f32.mrb[0].mxu0
        %v1926 = vpop.f32.mrb[0].mxu0
        %v1927 = vadd.f32 0.0, %v1926
        %v1928 = vpop.f32.mrb[0].mxu0
        %1929 = vdwg.mxu0
        %v1930 = vpack.c.bf16 %v1927, %v1924
        %1931 = vst.msk [vmem:[#allocation2] sm:$0xff] %vm1743, %v1930
        %1933 = vrot.lane.b32.xlu0 %v1211, 96
        %v1934 = vpop.permute.xlu0 %1933
        %1936 = vrot.lane.b32.xlu0 %v1317, 96
        %v1937 = vpop.permute.xlu0 %1936
        %v1939 = vsel %vm1743, %v1934, 0
        %v1942 = vsel %vm1743, %v1937, 0
        %1944 = vmatprep.subr.bf16.mxu0 0
        %1945 = vmatpush1.bf16.xpose.msra.mxu0 %v1942
        %1946 = vmatprep.subr.bf16.mxu0 0
        %1947 = vmatpush1.bf16.xpose.msra.mxu0 0
        %1948 = vmatprep.subr.bf16.mxu0 0
        %1949 = vmatpush1.bf16.xpose.msra.mxu0 0
        %1950 = vmatprep.subr.bf16.mxu0 0
        %1951 = vmatpush1.bf16.xpose.msra.mxu0 0
        %1952 = vmatprep.subr.bf16.mxu0 0
        %1953 = vmatpush1.bf16.xpose.msra.mxu0 0
        %1954 = vmatprep.subr.bf16.mxu0 0
        %1955 = vmatpush1.bf16.xpose.msra.mxu0 0
        %1956 = vmatprep.subr.bf16.mxu0 0
        %1957 = vmatpush1.bf16.xpose.msra.mxu0 0
        %1958 = vmatprep.subr.bf16.mxu0 0
        %1959 = vmatpush1.bf16.xpose.msra.mxu0 0
        %1960 = vmatprep.subr.bf16.mxu0 0
        %1961 = vmatpush1.bf16.xpose.msra.mxu0 0
        %1962 = vmatprep.subr.bf16.mxu0 0
        %1963 = vmatpush1.bf16.xpose.msra.mxu0 0
        %1964 = vmatprep.subr.bf16.mxu0 0
        %1965 = vmatpush1.bf16.xpose.msra.mxu0 0
        %1966 = vmatprep.subr.bf16.mxu0 0
        %1967 = vmatpush1.bf16.xpose.msra.mxu0 0
        %1968 = vmatprep.subr.bf16.mxu0 0
        %1969 = vmatpush1.bf16.xpose.msra.mxu0 0
        %1970 = vmatprep.subr.bf16.mxu0 0
        %1971 = vmatpush1.bf16.xpose.msra.mxu0 0
        %1972 = vmatprep.subr.bf16.mxu0 0
        %1973 = vmatpush1.bf16.xpose.msra.mxu0 0
        %1974 = vmatprep.subr.bf16.mxu0 0
        %1975 = vmatpush1.bf16.xpose.msra.mxu0 0
        %1976 = vmatprep.mubr.bf16.mxu0 0
        %1977 = vmatmul.mubr.bf16.gmra.mrb[0].mxu0 %v1939
        %v1978 = vpop.f32.mrb[0].mxu0
        %v1979 = vadd.f32 0.0, %v1978
        %v1980 = vpop.f32.mrb[0].mxu0
        %v1981 = vpop.f32.mrb[0].mxu0
        %v1982 = vadd.f32 0.0, %v1981
        %v1983 = vpop.f32.mrb[0].mxu0
        %1984 = vdwg.mxu0
        %1986 = vrot.lane.b32.xlu0 %v1439, 96
        %v1987 = vpop.permute.xlu0 %1986
        %1989 = vrot.lane.b32.xlu0 %v1545, 96
        %v1990 = vpop.permute.xlu0 %1989
        %v1992 = vsel %vm1743, %v1987, 0
        %v1995 = vsel %vm1743, %v1990, 0
        %1997 = vmatprep.subr.bf16.mxu0 0
        %1998 = vmatpush1.bf16.xpose.msra.mxu0 %v1995
        %1999 = vmatprep.subr.bf16.mxu0 0
        %2000 = vmatpush1.bf16.xpose.msra.mxu0 0
        %2001 = vmatprep.subr.bf16.mxu0 0
        %2002 = vmatpush1.bf16.xpose.msra.mxu0 0
        %2003 = vmatprep.subr.bf16.mxu0 0
        %2004 = vmatpush1.bf16.xpose.msra.mxu0 0
        %2005 = vmatprep.subr.bf16.mxu0 0
        %2006 = vmatpush1.bf16.xpose.msra.mxu0 0
        %2007 = vmatprep.subr.bf16.mxu0 0
        %2008 = vmatpush1.bf16.xpose.msra.mxu0 0
        %2009 = vmatprep.subr.bf16.mxu0 0
        %2010 = vmatpush1.bf16.xpose.msra.mxu0 0
        %2011 = vmatprep.subr.bf16.mxu0 0
        %2012 = vmatpush1.bf16.xpose.msra.mxu0 0
        %2013 = vmatprep.subr.bf16.mxu0 0
        %2014 = vmatpush1.bf16.xpose.msra.mxu0 0
        %2015 = vmatprep.subr.bf16.mxu0 0
        %2016 = vmatpush1.bf16.xpose.msra.mxu0 0
        %2017 = vmatprep.subr.bf16.mxu0 0
        %2018 = vmatpush1.bf16.xpose.msra.mxu0 0
        %2019 = vmatprep.subr.bf16.mxu0 0
        %2020 = vmatpush1.bf16.xpose.msra.mxu0 0
        %2021 = vmatprep.subr.bf16.mxu0 0
        %2022 = vmatpush1.bf16.xpose.msra.mxu0 0
        %2023 = vmatprep.subr.bf16.mxu0 0
        %2024 = vmatpush1.bf16.xpose.msra.mxu0 0
        %2025 = vmatprep.subr.bf16.mxu0 0
        %2026 = vmatpush1.bf16.xpose.msra.mxu0 0
        %2027 = vmatprep.subr.bf16.mxu0 0
        %2028 = vmatpush1.bf16.xpose.msra.mxu0 0
        %2029 = vmatprep.mubr.bf16.mxu0 0
        %2030 = vmatmul.mubr.bf16.gmra.mrb[0].mxu0 %v1992
        %v2031 = vpop.f32.mrb[0].mxu0
        %v2032 = vadd.f32 0.0, %v2031
        %v2033 = vpop.f32.mrb[0].mxu0
        %v2034 = vpop.f32.mrb[0].mxu0
        %v2035 = vadd.f32 0.0, %v2034
        %v2036 = vpop.f32.mrb[0].mxu0
        %2037 = vdwg.mxu0
        %v2038 = vsel %vm1838, %v1979, -inf
        %2039 = vmax.xlane.f32.xlu0 %v2038
        %v2040 = vpop.xlane.xlu0 %2039
        %v2041 = vsel %vm1838, %v1982, -inf
        %2042 = vmax.xlane.f32.xlu0 %v2041
        %v2043 = vpop.xlane.xlu0 %2042
        %v2044 = vsub.f32 %v1979, %v2040
        %v2045 = vsub.f32 %v1982, %v2043
        %v2046 = vmul.f32 %v2044, 1.442695
        %v2047 = vpow.pop %v2046
        %v2048 = vmul.f32 %v2045, 1.442695
        %v2049 = vpow.pop %v2048
        %v2050 = vsel %vm1838, %v2047, 0.0
        %2051 = vadd.xlane.f32.xlu0 %v2050
        %v2052 = vpop.xlane.xlu0 %2051
        %v2053 = vsel %vm1838, %v2049, 0.0
        %2054 = vadd.xlane.f32.xlu0 %v2053
        %v2055 = vpop.xlane.xlu0 %2054
        %v2056 = vrcp.pop %v2052
        %v2057 = vmul.f32 %v2047, %v2056
        %v2058 = vrcp.pop %v2055
        %v2059 = vmul.f32 %v2049, %v2058
        %v2060 = vsel %vm1838, %v2032, -inf
        %2061 = vmax.xlane.f32.xlu0 %v2060
        %v2062 = vpop.xlane.xlu0 %2061
        %v2063 = vsel %vm1838, %v2035, -inf
        %2064 = vmax.xlane.f32.xlu0 %v2063
        %v2065 = vpop.xlane.xlu0 %2064
        %v2066 = vsub.f32 %v2032, %v2062
        %v2067 = vsub.f32 %v2035, %v2065
        %v2068 = vmul.f32 %v2066, 1.442695
        %v2069 = vpow.pop %v2068
        %v2070 = vmul.f32 %v2067, 1.442695
        %v2071 = vpow.pop %v2070
        %v2072 = vsel %vm1838, %v2069, 0.0
        %2073 = vadd.xlane.f32.xlu0 %v2072
        %v2074 = vpop.xlane.xlu0 %2073
        %v2075 = vsel %vm1838, %v2071, 0.0
        %2076 = vadd.xlane.f32.xlu0 %v2075
        %v2077 = vpop.xlane.xlu0 %2076
        %v2078 = vrcp.pop %v2074
        %v2079 = vmul.f32 %v2069, %v2078
        %v2080 = vrcp.pop %v2077
        %v2081 = vmul.f32 %v2071, %v2080
        %v2082 = vsub.f32 %v2057, %v2079
        %v2083 = vsub.f32 %v2059, %v2081
        %v2084 = vpack.c.bf16 %v2083, %v2082
        %2086 = vrot.lane.b32.xlu0 %v1742, 96
        %v2087 = vpop.permute.xlu0 %2086
        %v2090 = vsel %vm1838, %v2084, 0
        %2092 = vmatprep.subr.bf16.mxu0 0
        %2093 = vmatpush1.bf16.msra.mxu0 %v2087
        %2094 = vmatprep.subr.bf16.mxu0 0
        %2095 = vmatpush1.bf16.msra.mxu0 0
        %2096 = vmatprep.subr.bf16.mxu0 0
        %2097 = vmatpush1.bf16.msra.mxu0 0
        %2098 = vmatprep.subr.bf16.mxu0 0
        %2099 = vmatpush1.bf16.msra.mxu0 0
        %2100 = vmatprep.subr.bf16.mxu0 0
        %2101 = vmatpush1.bf16.msra.mxu0 0
        %2102 = vmatprep.subr.bf16.mxu0 0
        %2103 = vmatpush1.bf16.msra.mxu0 0
        %2104 = vmatprep.subr.bf16.mxu0 0
        %2105 = vmatpush1.bf16.msra.mxu0 0
        %2106 = vmatprep.subr.bf16.mxu0 0
        %2107 = vmatpush1.bf16.msra.mxu0 0
        %2108 = vmatprep.subr.bf16.mxu0 0
        %2109 = vmatpush1.bf16.msra.mxu0 0
        %2110 = vmatprep.subr.bf16.mxu0 0
        %2111 = vmatpush1.bf16.msra.mxu0 0
        %2112 = vmatprep.subr.bf16.mxu0 0
        %2113 = vmatpush1.bf16.msra.mxu0 0
        %2114 = vmatprep.subr.bf16.mxu0 0
        %2115 = vmatpush1.bf16.msra.mxu0 0
        %2116 = vmatprep.subr.bf16.mxu0 0
        %2117 = vmatpush1.bf16.msra.mxu0 0
        %2118 = vmatprep.subr.bf16.mxu0 0
        %2119 = vmatpush1.bf16.msra.mxu0 0
        %2120 = vmatprep.subr.bf16.mxu0 0
        %2121 = vmatpush1.bf16.msra.mxu0 0
        %2122 = vmatprep.subr.bf16.mxu0 0
        %2123 = vmatpush1.bf16.msra.mxu0 0
        %2124 = vmatprep.mubr.bf16.mxu0 0
        %2125 = vmatmul.mubr.bf16.gmra.mrb[0].mxu0 %v2090
        %v2126 = vpop.f32.mrb[0].mxu0
        %v2127 = vadd.f32 0.0, %v2126
        %v2128 = vpop.f32.mrb[0].mxu0
        %v2129 = vpop.f32.mrb[0].mxu0
        %v2130 = vadd.f32 0.0, %v2129
        %v2131 = vpop.f32.mrb[0].mxu0
        %2132 = vdwg.mxu0
        %v2133 = vpack.c.bf16 %v2130, %v2127
        %2135 = vrot.lane.b32.xlu0 %v2133, 32
        %v2136 = vpop.permute.xlu0 %2135
        %vm2138 = vcmask 523520
        %2139 = vst.msk [vmem:[#allocation2] sm:$0xff] %vm2138, %v2136
        %2140 = vrot.lane.b32.xlu0 %v1211, 64
        %v2141 = vpop.permute.xlu0 %2140
        %2142 = vrot.lane.b32.xlu0 %v1317, 64
        %v2143 = vpop.permute.xlu0 %2142
        %v2145 = vsel %vm1743, %v2141, 0
        %v2148 = vsel %vm1743, %v2143, 0
        %2150 = vmatprep.subr.bf16.mxu0 0
        %2151 = vmatpush1.bf16.xpose.msra.mxu0 %v2148
        %2152 = vmatprep.subr.bf16.mxu0 0
        %2153 = vmatpush1.bf16.xpose.msra.mxu0 0
        %2154 = vmatprep.subr.bf16.mxu0 0
        %2155 = vmatpush1.bf16.xpose.msra.mxu0 0
        %2156 = vmatprep.subr.bf16.mxu0 0
        %2157 = vmatpush1.bf16.xpose.msra.mxu0 0
        %2158 = vmatprep.subr.bf16.mxu0 0
        %2159 = vmatpush1.bf16.xpose.msra.mxu0 0
        %2160 = vmatprep.subr.bf16.mxu0 0
        %2161 = vmatpush1.bf16.xpose.msra.mxu0 0
        %2162 = vmatprep.subr.bf16.mxu0 0
        %2163 = vmatpush1.bf16.xpose.msra.mxu0 0
        %2164 = vmatprep.subr.bf16.mxu0 0
        %2165 = vmatpush1.bf16.xpose.msra.mxu0 0
        %2166 = vmatprep.subr.bf16.mxu0 0
        %2167 = vmatpush1.bf16.xpose.msra.mxu0 0
        %2168 = vmatprep.subr.bf16.mxu0 0
        %2169 = vmatpush1.bf16.xpose.msra.mxu0 0
        %2170 = vmatprep.subr.bf16.mxu0 0
        %2171 = vmatpush1.bf16.xpose.msra.mxu0 0
        %2172 = vmatprep.subr.bf16.mxu0 0
        %2173 = vmatpush1.bf16.xpose.msra.mxu0 0
        %2174 = vmatprep.subr.bf16.mxu0 0
        %2175 = vmatpush1.bf16.xpose.msra.mxu0 0
        %2176 = vmatprep.subr.bf16.mxu0 0
        %2177 = vmatpush1.bf16.xpose.msra.mxu0 0
        %2178 = vmatprep.subr.bf16.mxu0 0
        %2179 = vmatpush1.bf16.xpose.msra.mxu0 0
        %2180 = vmatprep.subr.bf16.mxu0 0
        %2181 = vmatpush1.bf16.xpose.msra.mxu0 0
        %2182 = vmatprep.mubr.bf16.mxu0 0
        %2183 = vmatmul.mubr.bf16.gmra.mrb[0].mxu0 %v2145
        %v2184 = vpop.f32.mrb[0].mxu0
        %v2185 = vadd.f32 0.0, %v2184
        %v2186 = vpop.f32.mrb[0].mxu0
        %v2187 = vpop.f32.mrb[0].mxu0
        %v2188 = vadd.f32 0.0, %v2187
        %v2189 = vpop.f32.mrb[0].mxu0
        %2190 = vdwg.mxu0
        %2191 = vrot.lane.b32.xlu0 %v1439, 64
        %v2192 = vpop.permute.xlu0 %2191
        %2193 = vrot.lane.b32.xlu0 %v1545, 64
        %v2194 = vpop.permute.xlu0 %2193
        %v2196 = vsel %vm1743, %v2192, 0
        %v2199 = vsel %vm1743, %v2194, 0
        %2201 = vmatprep.subr.bf16.mxu0 0
        %2202 = vmatpush1.bf16.xpose.msra.mxu0 %v2199
        %2203 = vmatprep.subr.bf16.mxu0 0
        %2204 = vmatpush1.bf16.xpose.msra.mxu0 0
        %2205 = vmatprep.subr.bf16.mxu0 0
        %2206 = vmatpush1.bf16.xpose.msra.mxu0 0
        %2207 = vmatprep.subr.bf16.mxu0 0
        %2208 = vmatpush1.bf16.xpose.msra.mxu0 0
        %2209 = vmatprep.subr.bf16.mxu0 0
        %2210 = vmatpush1.bf16.xpose.msra.mxu0 0
        %2211 = vmatprep.subr.bf16.mxu0 0
        %2212 = vmatpush1.bf16.xpose.msra.mxu0 0
        %2213 = vmatprep.subr.bf16.mxu0 0
        %2214 = vmatpush1.bf16.xpose.msra.mxu0 0
        %2215 = vmatprep.subr.bf16.mxu0 0
        %2216 = vmatpush1.bf16.xpose.msra.mxu0 0
        %2217 = vmatprep.subr.bf16.mxu0 0
        %2218 = vmatpush1.bf16.xpose.msra.mxu0 0
        %2219 = vmatprep.subr.bf16.mxu0 0
        %2220 = vmatpush1.bf16.xpose.msra.mxu0 0
        %2221 = vmatprep.subr.bf16.mxu0 0
        %2222 = vmatpush1.bf16.xpose.msra.mxu0 0
        %2223 = vmatprep.subr.bf16.mxu0 0
        %2224 = vmatpush1.bf16.xpose.msra.mxu0 0
        %2225 = vmatprep.subr.bf16.mxu0 0
        %2226 = vmatpush1.bf16.xpose.msra.mxu0 0
        %2227 = vmatprep.subr.bf16.mxu0 0
        %2228 = vmatpush1.bf16.xpose.msra.mxu0 0
        %2229 = vmatprep.subr.bf16.mxu0 0
        %2230 = vmatpush1.bf16.xpose.msra.mxu0 0
        %2231 = vmatprep.subr.bf16.mxu0 0
        %2232 = vmatpush1.bf16.xpose.msra.mxu0 0
        %2233 = vmatprep.mubr.bf16.mxu0 0
        %2234 = vmatmul.mubr.bf16.gmra.mrb[0].mxu0 %v2196
        %v2235 = vpop.f32.mrb[0].mxu0
        %v2236 = vadd.f32 0.0, %v2235
        %v2237 = vpop.f32.mrb[0].mxu0
        %v2238 = vpop.f32.mrb[0].mxu0
        %v2239 = vadd.f32 0.0, %v2238
        %v2240 = vpop.f32.mrb[0].mxu0
        %2241 = vdwg.mxu0
        %v2242 = vsel %vm1838, %v2185, -inf
        %2243 = vmax.xlane.f32.xlu0 %v2242
        %v2244 = vpop.xlane.xlu0 %2243
        %v2245 = vsel %vm1838, %v2188, -inf
        %2246 = vmax.xlane.f32.xlu0 %v2245
        %v2247 = vpop.xlane.xlu0 %2246
        %v2248 = vsub.f32 %v2185, %v2244
        %v2249 = vsub.f32 %v2188, %v2247
        %v2250 = vmul.f32 %v2248, 1.442695
        %v2251 = vpow.pop %v2250
        %v2252 = vmul.f32 %v2249, 1.442695
        %v2253 = vpow.pop %v2252
        %v2254 = vsel %vm1838, %v2251, 0.0
        %2255 = vadd.xlane.f32.xlu0 %v2254
        %v2256 = vpop.xlane.xlu0 %2255
        %v2257 = vsel %vm1838, %v2253, 0.0
        %2258 = vadd.xlane.f32.xlu0 %v2257
        %v2259 = vpop.xlane.xlu0 %2258
        %v2260 = vrcp.pop %v2256
        %v2261 = vmul.f32 %v2251, %v2260
        %v2262 = vrcp.pop %v2259
        %v2263 = vmul.f32 %v2253, %v2262
        %v2264 = vsel %vm1838, %v2236, -inf
        %2265 = vmax.xlane.f32.xlu0 %v2264
        %v2266 = vpop.xlane.xlu0 %2265
        %v2267 = vsel %vm1838, %v2239, -inf
        %2268 = vmax.xlane.f32.xlu0 %v2267
        %v2269 = vpop.xlane.xlu0 %2268
        %v2270 = vsub.f32 %v2236, %v2266
        %v2271 = vsub.f32 %v2239, %v2269
        %v2272 = vmul.f32 %v2270, 1.442695
        %v2273 = vpow.pop %v2272
        %v2274 = vmul.f32 %v2271, 1.442695
        %v2275 = vpow.pop %v2274
        %v2276 = vsel %vm1838, %v2273, 0.0
        %2277 = vadd.xlane.f32.xlu0 %v2276
        %v2278 = vpop.xlane.xlu0 %2277
        %v2279 = vsel %vm1838, %v2275, 0.0
        %2280 = vadd.xlane.f32.xlu0 %v2279
        %v2281 = vpop.xlane.xlu0 %2280
        %v2282 = vrcp.pop %v2278
        %v2283 = vmul.f32 %v2273, %v2282
        %v2284 = vrcp.pop %v2281
        %v2285 = vmul.f32 %v2275, %v2284
        %v2286 = vsub.f32 %v2261, %v2283
        %v2287 = vsub.f32 %v2263, %v2285
        %v2288 = vpack.c.bf16 %v2287, %v2286
        %2289 = vrot.lane.b32.xlu0 %v1742, 64
        %v2290 = vpop.permute.xlu0 %2289
        %v2293 = vsel %vm1838, %v2288, 0
        %2295 = vmatprep.subr.bf16.mxu0 0
        %2296 = vmatpush1.bf16.msra.mxu0 %v2290
        %2297 = vmatprep.subr.bf16.mxu0 0
        %2298 = vmatpush1.bf16.msra.mxu0 0
        %2299 = vmatprep.subr.bf16.mxu0 0
        %2300 = vmatpush1.bf16.msra.mxu0 0
        %2301 = vmatprep.subr.bf16.mxu0 0
        %2302 = vmatpush1.bf16.msra.mxu0 0
        %2303 = vmatprep.subr.bf16.mxu0 0
        %2304 = vmatpush1.bf16.msra.mxu0 0
        %2305 = vmatprep.subr.bf16.mxu0 0
        %2306 = vmatpush1.bf16.msra.mxu0 0
        %2307 = vmatprep.subr.bf16.mxu0 0
        %2308 = vmatpush1.bf16.msra.mxu0 0
        %2309 = vmatprep.subr.bf16.mxu0 0
        %2310 = vmatpush1.bf16.msra.mxu0 0
        %2311 = vmatprep.subr.bf16.mxu0 0
        %2312 = vmatpush1.bf16.msra.mxu0 0
        %2313 = vmatprep.subr.bf16.mxu0 0
        %2314 = vmatpush1.bf16.msra.mxu0 0
        %2315 = vmatprep.subr.bf16.mxu0 0
        %2316 = vmatpush1.bf16.msra.mxu0 0
        %2317 = vmatprep.subr.bf16.mxu0 0
        %2318 = vmatpush1.bf16.msra.mxu0 0
        %2319 = vmatprep.subr.bf16.mxu0 0
        %2320 = vmatpush1.bf16.msra.mxu0 0
        %2321 = vmatprep.subr.bf16.mxu0 0
        %2322 = vmatpush1.bf16.msra.mxu0 0
        %2323 = vmatprep.subr.bf16.mxu0 0
        %2324 = vmatpush1.bf16.msra.mxu0 0
        %2325 = vmatprep.subr.bf16.mxu0 0
        %2326 = vmatpush1.bf16.msra.mxu0 0
        %2327 = vmatprep.mubr.bf16.mxu0 0
        %2328 = vmatmul.mubr.bf16.gmra.mrb[0].mxu0 %v2293
        %v2329 = vpop.f32.mrb[0].mxu0
        %v2330 = vadd.f32 0.0, %v2329
        %v2331 = vpop.f32.mrb[0].mxu0
        %v2332 = vpop.f32.mrb[0].mxu0
        %v2333 = vadd.f32 0.0, %v2332
        %v2334 = vpop.f32.mrb[0].mxu0
        %2335 = vdwg.mxu0
        %v2336 = vpack.c.bf16 %v2333, %v2330
        %2338 = vrot.lane.b32.xlu0 %v2336, 64
        %v2339 = vpop.permute.xlu0 %2338
        %vm2341 = vcmask 785920
        %2342 = vst.msk [vmem:[#allocation2] sm:$0xff] %vm2341, %v2339
        %2343 = vrot.lane.b32.xlu0 %v1211, 32
        %v2344 = vpop.permute.xlu0 %2343
        %2345 = vrot.lane.b32.xlu0 %v1317, 32
        %v2346 = vpop.permute.xlu0 %2345
        %v2348 = vsel %vm1743, %v2344, 0
        %v2351 = vsel %vm1743, %v2346, 0
        %2353 = vmatprep.subr.bf16.mxu0 0
        %2354 = vmatpush1.bf16.xpose.msra.mxu0 %v2351
        %2355 = vmatprep.subr.bf16.mxu0 0
        %2356 = vmatpush1.bf16.xpose.msra.mxu0 0
        %2357 = vmatprep.subr.bf16.mxu0 0
        %2358 = vmatpush1.bf16.xpose.msra.mxu0 0
        %2359 = vmatprep.subr.bf16.mxu0 0
        %2360 = vmatpush1.bf16.xpose.msra.mxu0 0
        %2361 = vmatprep.subr.bf16.mxu0 0
        %2362 = vmatpush1.bf16.xpose.msra.mxu0 0
        %2363 = vmatprep.subr.bf16.mxu0 0
        %2364 = vmatpush1.bf16.xpose.msra.mxu0 0
        %2365 = vmatprep.subr.bf16.mxu0 0
        %2366 = vmatpush1.bf16.xpose.msra.mxu0 0
        %2367 = vmatprep.subr.bf16.mxu0 0
        %2368 = vmatpush1.bf16.xpose.msra.mxu0 0
        %2369 = vmatprep.subr.bf16.mxu0 0
        %2370 = vmatpush1.bf16.xpose.msra.mxu0 0
        %2371 = vmatprep.subr.bf16.mxu0 0
        %2372 = vmatpush1.bf16.xpose.msra.mxu0 0
        %2373 = vmatprep.subr.bf16.mxu0 0
        %2374 = vmatpush1.bf16.xpose.msra.mxu0 0
        %2375 = vmatprep.subr.bf16.mxu0 0
        %2376 = vmatpush1.bf16.xpose.msra.mxu0 0
        %2377 = vmatprep.subr.bf16.mxu0 0
        %2378 = vmatpush1.bf16.xpose.msra.mxu0 0
        %2379 = vmatprep.subr.bf16.mxu0 0
        %2380 = vmatpush1.bf16.xpose.msra.mxu0 0
        %2381 = vmatprep.subr.bf16.mxu0 0
        %2382 = vmatpush1.bf16.xpose.msra.mxu0 0
        %2383 = vmatprep.subr.bf16.mxu0 0
        %2384 = vmatpush1.bf16.xpose.msra.mxu0 0
        %2385 = vmatprep.mubr.bf16.mxu0 0
        %2386 = vmatmul.mubr.bf16.gmra.mrb[0].mxu0 %v2348
        %v2387 = vpop.f32.mrb[0].mxu0
        %v2388 = vadd.f32 0.0, %v2387
        %v2389 = vpop.f32.mrb[0].mxu0
        %v2390 = vpop.f32.mrb[0].mxu0
        %v2391 = vadd.f32 0.0, %v2390
        %v2392 = vpop.f32.mrb[0].mxu0
        %2393 = vdwg.mxu0
        %2394 = vrot.lane.b32.xlu0 %v1439, 32
        %v2395 = vpop.permute.xlu0 %2394
        %2396 = vrot.lane.b32.xlu0 %v1545, 32
        %v2397 = vpop.permute.xlu0 %2396
        %v2399 = vsel %vm1743, %v2395, 0
        %v2402 = vsel %vm1743, %v2397, 0
        %2404 = vmatprep.subr.bf16.mxu0 0
        %2405 = vmatpush1.bf16.xpose.msra.mxu0 %v2402
        %2406 = vmatprep.subr.bf16.mxu0 0
        %2407 = vmatpush1.bf16.xpose.msra.mxu0 0
        %2408 = vmatprep.subr.bf16.mxu0 0
        %2409 = vmatpush1.bf16.xpose.msra.mxu0 0
        %2410 = vmatprep.subr.bf16.mxu0 0
        %2411 = vmatpush1.bf16.xpose.msra.mxu0 0
        %2412 = vmatprep.subr.bf16.mxu0 0
        %2413 = vmatpush1.bf16.xpose.msra.mxu0 0
        %2414 = vmatprep.subr.bf16.mxu0 0
        %2415 = vmatpush1.bf16.xpose.msra.mxu0 0
        %2416 = vmatprep.subr.bf16.mxu0 0
        %2417 = vmatpush1.bf16.xpose.msra.mxu0 0
        %2418 = vmatprep.subr.bf16.mxu0 0
        %2419 = vmatpush1.bf16.xpose.msra.mxu0 0
        %2420 = vmatprep.subr.bf16.mxu0 0
        %2421 = vmatpush1.bf16.xpose.msra.mxu0 0
        %2422 = vmatprep.subr.bf16.mxu0 0
        %2423 = vmatpush1.bf16.xpose.msra.mxu0 0
        %2424 = vmatprep.subr.bf16.mxu0 0
        %2425 = vmatpush1.bf16.xpose.msra.mxu0 0
        %2426 = vmatprep.subr.bf16.mxu0 0
        %2427 = vmatpush1.bf16.xpose.msra.mxu0 0
        %2428 = vmatprep.subr.bf16.mxu0 0
        %2429 = vmatpush1.bf16.xpose.msra.mxu0 0
        %2430 = vmatprep.subr.bf16.mxu0 0
        %2431 = vmatpush1.bf16.xpose.msra.mxu0 0
        %2432 = vmatprep.subr.bf16.mxu0 0
        %2433 = vmatpush1.bf16.xpose.msra.mxu0 0
        %2434 = vmatprep.subr.bf16.mxu0 0
        %2435 = vmatpush1.bf16.xpose.msra.mxu0 0
        %2436 = vmatprep.mubr.bf16.mxu0 0
        %2437 = vmatmul.mubr.bf16.gmra.mrb[0].mxu0 %v2399
        %v2438 = vpop.f32.mrb[0].mxu0
        %v2439 = vadd.f32 0.0, %v2438
        %v2440 = vpop.f32.mrb[0].mxu0
        %v2441 = vpop.f32.mrb[0].mxu0
        %v2442 = vadd.f32 0.0, %v2441
        %v2443 = vpop.f32.mrb[0].mxu0
        %2444 = vdwg.mxu0
        %v2445 = vsel %vm1838, %v2388, -inf
        %2446 = vmax.xlane.f32.xlu0 %v2445
        %v2447 = vpop.xlane.xlu0 %2446
        %v2448 = vsel %vm1838, %v2391, -inf
        %2449 = vmax.xlane.f32.xlu0 %v2448
        %v2450 = vpop.xlane.xlu0 %2449
        %v2451 = vsub.f32 %v2388, %v2447
        %v2452 = vsub.f32 %v2391, %v2450
        %v2453 = vmul.f32 %v2451, 1.442695
        %v2454 = vpow.pop %v2453
        %v2455 = vmul.f32 %v2452, 1.442695
        %v2456 = vpow.pop %v2455
        %v2457 = vsel %vm1838, %v2454, 0.0
        %2458 = vadd.xlane.f32.xlu0 %v2457
        %v2459 = vpop.xlane.xlu0 %2458
        %v2460 = vsel %vm1838, %v2456, 0.0
        %2461 = vadd.xlane.f32.xlu0 %v2460
        %v2462 = vpop.xlane.xlu0 %2461
        %v2463 = vrcp.pop %v2459
        %v2464 = vmul.f32 %v2454, %v2463
        %v2465 = vrcp.pop %v2462
        %v2466 = vmul.f32 %v2456, %v2465
        %v2467 = vsel %vm1838, %v2439, -inf
        %2468 = vmax.xlane.f32.xlu0 %v2467
        %v2469 = vpop.xlane.xlu0 %2468
        %v2470 = vsel %vm1838, %v2442, -inf
        %2471 = vmax.xlane.f32.xlu0 %v2470
        %v2472 = vpop.xlane.xlu0 %2471
        %v2473 = vsub.f32 %v2439, %v2469
        %v2474 = vsub.f32 %v2442, %v2472
        %v2475 = vmul.f32 %v2473, 1.442695
        %v2476 = vpow.pop %v2475
        %v2477 = vmul.f32 %v2474, 1.442695
        %v2478 = vpow.pop %v2477
        %v2479 = vsel %vm1838, %v2476, 0.0
        %2480 = vadd.xlane.f32.xlu0 %v2479
        %v2481 = vpop.xlane.xlu0 %2480
        %v2482 = vsel %vm1838, %v2478, 0.0
        %2483 = vadd.xlane.f32.xlu0 %v2482
        %v2484 = vpop.xlane.xlu0 %2483
        %v2485 = vrcp.pop %v2481
        %v2486 = vmul.f32 %v2476, %v2485
        %v2487 = vrcp.pop %v2484
        %v2488 = vmul.f32 %v2478, %v2487
        %v2489 = vsub.f32 %v2464, %v2486
        %v2490 = vsub.f32 %v2466, %v2488
        %v2491 = vpack.c.bf16 %v2490, %v2489
        %2492 = vrot.lane.b32.xlu0 %v1742, 32
        %v2493 = vpop.permute.xlu0 %2492
        %v2496 = vsel %vm1838, %v2491, 0
        %2498 = vmatprep.subr.bf16.mxu0 0
        %2499 = vmatpush1.bf16.msra.mxu0 %v2493
        %2500 = vmatprep.subr.bf16.mxu0 0
        %2501 = vmatpush1.bf16.msra.mxu0 0
        %2502 = vmatprep.subr.bf16.mxu0 0
        %2503 = vmatpush1.bf16.msra.mxu0 0
        %2504 = vmatprep.subr.bf16.mxu0 0
        %2505 = vmatpush1.bf16.msra.mxu0 0
        %2506 = vmatprep.subr.bf16.mxu0 0
        %2507 = vmatpush1.bf16.msra.mxu0 0
        %2508 = vmatprep.subr.bf16.mxu0 0
        %2509 = vmatpush1.bf16.msra.mxu0 0
        %2510 = vmatprep.subr.bf16.mxu0 0
        %2511 = vmatpush1.bf16.msra.mxu0 0
        %2512 = vmatprep.subr.bf16.mxu0 0
        %2513 = vmatpush1.bf16.msra.mxu0 0
        %2514 = vmatprep.subr.bf16.mxu0 0
        %2515 = vmatpush1.bf16.msra.mxu0 0
        %2516 = vmatprep.subr.bf16.mxu0 0
        %2517 = vmatpush1.bf16.msra.mxu0 0
        %2518 = vmatprep.subr.bf16.mxu0 0
        %2519 = vmatpush1.bf16.msra.mxu0 0
        %2520 = vmatprep.subr.bf16.mxu0 0
        %2521 = vmatpush1.bf16.msra.mxu0 0
        %2522 = vmatprep.subr.bf16.mxu0 0
        %2523 = vmatpush1.bf16.msra.mxu0 0
        %2524 = vmatprep.subr.bf16.mxu0 0
        %2525 = vmatpush1.bf16.msra.mxu0 0
        %2526 = vmatprep.subr.bf16.mxu0 0
        %2527 = vmatpush1.bf16.msra.mxu0 0
        %2528 = vmatprep.subr.bf16.mxu0 0
        %2529 = vmatpush1.bf16.msra.mxu0 0
        %2530 = vmatprep.mubr.bf16.mxu0 0
        %2531 = vmatmul.mubr.bf16.gmra.mrb[0].mxu0 %v2496
        %v2532 = vpop.f32.mrb[0].mxu0
        %v2533 = vadd.f32 0.0, %v2532
        %v2534 = vpop.f32.mrb[0].mxu0
        %v2535 = vpop.f32.mrb[0].mxu0
        %v2536 = vadd.f32 0.0, %v2535
        %v2537 = vpop.f32.mrb[0].mxu0
        %2538 = vdwg.mxu0
        %v2539 = vpack.c.bf16 %v2536, %v2533
        %2541 = vrot.lane.b32.xlu0 %v2539, 96
        %v2542 = vpop.permute.xlu0 %2541
        %vm2544 = vcmask 1048320
        %2545 = vst.msk [vmem:[#allocation2] sm:$0xff] %vm2544, %v2542
        %v2546 = vld [vmem:[#allocation2] sm:$0xff]
        %v2547 = vld [vmem:[#allocation18] sm:$0xf]
        %v2548 = vld [vmem:[#allocation18 + $0x4] sm:$0xf]
        %v2549 = vld [vmem:[#allocation18 + $0x8] sm:$0xf]
        %v2550 = vld [vmem:[#allocation18 + $0xc] sm:$0xf]
        %v2551 = vld [vmem:[#allocation18 + $0x10] sm:$0xf]
        %v2552 = vld [vmem:[#allocation18 + $0x14] sm:$0xf]
        %v2553 = vld [vmem:[#allocation18 + $0x18] sm:$0xf]
        %v2554 = vld [vmem:[#allocation18 + $0x1c] sm:$0xf]
        %v2555 = vld [vmem:[#allocation18 + $0x20] sm:$0xf]
        %v2556 = vld [vmem:[#allocation18 + $0x24] sm:$0xf]
        %v2557 = vld [vmem:[#allocation18 + $0x28] sm:$0xf]
        %v2558 = vld [vmem:[#allocation18 + $0x2c] sm:$0xf]
        %v2559 = vld [vmem:[#allocation18 + $0x30] sm:$0xf]
        %v2560 = vld [vmem:[#allocation18 + $0x34] sm:$0xf]
        %v2561 = vld [vmem:[#allocation18 + $0x38] sm:$0xf]
        %v2562 = vld [vmem:[#allocation18 + $0x3c] sm:$0xf]
        %v2563 = vld [vmem:[%s14] sm:$0x1]
        %v2565 = vlaneseq
        %v2566 = vshrl.u32 %v2565, 7
        %v2567 = vsub.s32 0, %v2566
        %v2568 = vrot.slane %v2563, %v2567
        %v2586 = vunpack.c.l.b16 %v2547
        %v2587 = vunpack.c.l.b16 %v2548
        %v2588 = vunpack.c.l.b16 %v2549
        %v2589 = vunpack.c.l.b16 %v2550
        %v2590 = vunpack.c.l.b16 %v2551
        %v2591 = vunpack.c.l.b16 %v2552
        %v2592 = vunpack.c.l.b16 %v2553
        %v2593 = vunpack.c.l.b16 %v2554
        %v2594 = vunpack.c.l.b16 %v2555
        %v2595 = vunpack.c.l.b16 %v2556
        %v2596 = vunpack.c.l.b16 %v2557
        %v2597 = vunpack.c.l.b16 %v2558
        %v2598 = vunpack.c.l.b16 %v2559
        %v2599 = vunpack.c.l.b16 %v2560
        %v2600 = vunpack.c.l.b16 %v2561
        %v2601 = vunpack.c.l.b16 %v2562
        %v2602 = vpack.c.b16 %v2587, %v2586
        %v2603 = vpack.c.b16 %v2589, %v2588
        %v2604 = vpack.c.b16 %v2591, %v2590
        %v2605 = vpack.c.b16 %v2593, %v2592
        %v2606 = vpack.c.b16 %v2595, %v2594
        %v2607 = vpack.c.b16 %v2597, %v2596
        %v2608 = vpack.c.b16 %v2599, %v2598
        %v2609 = vpack.c.b16 %v2601, %v2600
        %2618 = vmatprep.subr.bf16.mxu0 0
        %2619 = vmatpush1.bf16.msra.mxu0 %v2602
        %2620 = vmatprep.subr.bf16.mxu0 0
        %2621 = vmatpush1.bf16.msra.mxu0 %v2603
        %2622 = vmatprep.subr.bf16.mxu0 0
        %2623 = vmatpush1.bf16.msra.mxu0 %v2604
        %2624 = vmatprep.subr.bf16.mxu0 0
        %2625 = vmatpush1.bf16.msra.mxu0 %v2605
        %2626 = vmatprep.subr.bf16.mxu0 0
        %2627 = vmatpush1.bf16.msra.mxu0 %v2606
        %2628 = vmatprep.subr.bf16.mxu0 0
        %2629 = vmatpush1.bf16.msra.mxu0 %v2607
        %2630 = vmatprep.subr.bf16.mxu0 0
        %2631 = vmatpush1.bf16.msra.mxu0 %v2608
        %2632 = vmatprep.subr.bf16.mxu0 0
        %2633 = vmatpush1.bf16.msra.mxu0 %v2609
        %2634 = vmatprep.subr.bf16.mxu0 0
        %2635 = vmatpush1.bf16.msra.mxu0 0
        %2636 = vmatprep.subr.bf16.mxu0 0
        %2637 = vmatpush1.bf16.msra.mxu0 0
        %2638 = vmatprep.subr.bf16.mxu0 0
        %2639 = vmatpush1.bf16.msra.mxu0 0
        %2640 = vmatprep.subr.bf16.mxu0 0
        %2641 = vmatpush1.bf16.msra.mxu0 0
        %2642 = vmatprep.subr.bf16.mxu0 0
        %2643 = vmatpush1.bf16.msra.mxu0 0
        %2644 = vmatprep.subr.bf16.mxu0 0
        %2645 = vmatpush1.bf16.msra.mxu0 0
        %2646 = vmatprep.subr.bf16.mxu0 0
        %2647 = vmatpush1.bf16.msra.mxu0 0
        %2648 = vmatprep.subr.bf16.mxu0 0
        %2649 = vmatpush1.bf16.msra.mxu0 0
        %2650 = vmatprep.mubr.bf16.mxu0 0
        %2651 = vmatmul.mubr.bf16.gmra.mrb[0].mxu0 %v2546
        %v2652 = vpop.f32.mrb[0].mxu0
        %v2653 = vadd.f32 %v2568, %v2652
        %v2654 = vpop.f32.mrb[0].mxu0
        %v2655 = vpop.f32.mrb[0].mxu0
        %v2656 = vadd.f32 %v2568, %v2655
        %v2657 = vpop.f32.mrb[0].mxu0
        %2658 = vdwg.mxu0
        %v2659 = vld [vmem:[%s15] sm:$0x1]
        %v2660 = vld [vmem:[%s16] sm:$0x1]
        %2661 = vadd.xlane.f32.xlu0 %v2653
        %v2662 = vpop.xlane.xlu0 %2661
        %2663 = vadd.xlane.f32.xlu0 %v2656
        %v2664 = vpop.xlane.xlu0 %2663
        %v2665 = vmul.f32 %v2662, %v898
        %v2666 = vmul.f32 %v2664, %v898
        %v2667 = vsub.f32 %v2653, %v2665
        %v2668 = vsub.f32 %v2656, %v2666
        %v2669 = vmul.f32 %v2667, %v2667
        %v2670 = vmul.f32 %v2668, %v2668
        %2671 = vadd.xlane.f32.xlu0 %v2669
        %v2672 = vpop.xlane.xlu0 %2671
        %2673 = vadd.xlane.f32.xlu0 %v2670
        %v2674 = vpop.xlane.xlu0 %2673
        %v2675 = vmul.f32 %v2672, %v898
        %v2676 = vmul.f32 %v2674, %v898
        %v2677 = vadd.f32 %v2675, 1e-05
        %v2678 = vadd.f32 %v2676, 1e-05
        %v2679 = vrsqrt.pop %v2677
        %v2680 = vrsqrt.pop %v2678
        %v2681 = vmul.f32 %v2667, %v2679
        %v2682 = vmul.f32 %v2668, %v2680
        %v2684 = vlaneseq
        %v2685 = vshrl.u32 %v2684, 7
        %v2686 = vsub.s32 0, %v2685
        %v2687 = vrot.slane %v2659, %v2686
        %v2689 = vmul.f32 %v2681, %v2687
        %v2690 = vmul.f32 %v2682, %v2687
        %v2692 = vlaneseq
        %v2693 = vshrl.u32 %v2692, 7
        %v2694 = vsub.s32 0, %v2693
        %v2695 = vrot.slane %v2660, %v2694
        %v2697 = vadd.f32 %v2689, %v2695
        %v2698 = vadd.f32 %v2690, %v2695
        %v2699 = vadd.f32 %v890, %v2697
        %v2700 = vadd.f32 %v891, %v2698
        %v2701 = vld [vmem:[%s17] sm:$0x1]
        %v2702 = vld [vmem:[%s18] sm:$0x1]
        %2703 = vadd.xlane.f32.xlu0 %v2699
        %v2704 = vpop.xlane.xlu0 %2703
        %2705 = vadd.xlane.f32.xlu0 %v2700
        %v2706 = vpop.xlane.xlu0 %2705
        %v2707 = vmul.f32 %v2704, %v898
        %v2708 = vmul.f32 %v2706, %v898
        %v2709 = vsub.f32 %v2699, %v2707
        %v2710 = vsub.f32 %v2700, %v2708
        %v2711 = vmul.f32 %v2709, %v2709
        %v2712 = vmul.f32 %v2710, %v2710
        %2713 = vadd.xlane.f32.xlu0 %v2711
        %v2714 = vpop.xlane.xlu0 %2713
        %2715 = vadd.xlane.f32.xlu0 %v2712
        %v2716 = vpop.xlane.xlu0 %2715
        %v2717 = vmul.f32 %v2714, %v898
        %v2718 = vmul.f32 %v2716, %v898
        %v2719 = vadd.f32 %v2717, 1e-05
        %v2720 = vadd.f32 %v2718, 1e-05
        %v2721 = vrsqrt.pop %v2719
        %v2722 = vrsqrt.pop %v2720
        %v2723 = vmul.f32 %v2709, %v2721
        %v2724 = vmul.f32 %v2710, %v2722
        %v2726 = vlaneseq
        %v2727 = vshrl.u32 %v2726, 7
        %v2728 = vsub.s32 0, %v2727
        %v2729 = vrot.slane %v2701, %v2728
        %v2731 = vmul.f32 %v2723, %v2729
        %v2732 = vmul.f32 %v2724, %v2729
        %v2734 = vlaneseq
        %v2735 = vshrl.u32 %v2734, 7
        %v2736 = vsub.s32 0, %v2735
        %v2737 = vrot.slane %v2702, %v2736
        %v2739 = vadd.f32 %v2731, %v2737
        %v2740 = vadd.f32 %v2732, %v2737
        %v2741 = vpack.c.bf16 %v2740, %v2739
        %v2742 = vld [vmem:[#allocation20] sm:$0xff]
        %v2743 = vld [vmem:[#allocation20 + $0x8] sm:$0xff]
        %v2744 = vld [vmem:[#allocation20 + $0x10] sm:$0xff]
        %v2745 = vld [vmem:[#allocation20 + $0x18] sm:$0xff]
        %v2746 = vld [vmem:[#allocation20 + $0x20] sm:$0xff]
        %v2747 = vld [vmem:[#allocation20 + $0x28] sm:$0xff]
        %v2748 = vld [vmem:[#allocation20 + $0x30] sm:$0xff]
        %v2749 = vld [vmem:[#allocation20 + $0x38] sm:$0xff]
        %v2750 = vld [vmem:[#allocation20 + $0x40] sm:$0xff]
        %v2751 = vld [vmem:[#allocation20 + $0x48] sm:$0xff]
        %v2752 = vld [vmem:[#allocation20 + $0x50] sm:$0xff]
        %v2753 = vld [vmem:[#allocation20 + $0x58] sm:$0xff]
        %v2754 = vld [vmem:[#allocation20 + $0x60] sm:$0xff]
        %v2755 = vld [vmem:[#allocation20 + $0x68] sm:$0xff]
        %v2756 = vld [vmem:[#allocation20 + $0x70] sm:$0xff]
        %v2757 = vld [vmem:[#allocation20 + $0x78] sm:$0xff]
        %v2758 = vld [vmem:[#allocation20 + $0x80] sm:$0xff]
        %v2759 = vld [vmem:[#allocation20 + $0x88] sm:$0xff]
        %v2760 = vld [vmem:[#allocation20 + $0x90] sm:$0xff]
        %v2761 = vld [vmem:[#allocation20 + $0x98] sm:$0xff]
        %v2762 = vld [vmem:[#allocation20 + $0xa0] sm:$0xff]
        %v2763 = vld [vmem:[#allocation20 + $0xa8] sm:$0xff]
        %v2764 = vld [vmem:[#allocation20 + $0xb0] sm:$0xff]
        %v2765 = vld [vmem:[#allocation20 + $0xb8] sm:$0xff]
        %v2766 = vld [vmem:[#allocation20 + $0xc0] sm:$0xff]
        %v2767 = vld [vmem:[#allocation20 + $0xc8] sm:$0xff]
        %v2768 = vld [vmem:[#allocation20 + $0xd0] sm:$0xff]
        %v2769 = vld [vmem:[#allocation20 + $0xd8] sm:$0xff]
        %v2770 = vld [vmem:[#allocation20 + $0xe0] sm:$0xff]
        %v2771 = vld [vmem:[#allocation20 + $0xe8] sm:$0xff]
        %v2772 = vld [vmem:[#allocation20 + $0xf0] sm:$0xff]
        %v2773 = vld [vmem:[#allocation20 + $0xf8] sm:$0xff]
        %v2774 = vld [vmem:[%s20] sm:$0xf]
        %v2776 = vlaneseq
        %v2777 = vshrl.u32 %v2776, 7
        %v2778 = vsub.s32 0, %v2777
        %v2779 = vrot.slane %v2774, %v2778
        %v2780 = vlaneseq
        %v2781 = vshrl.u32 %v2780, 7
        %v2782 = vsub.s32 1, %v2781
        %v2783 = vrot.slane %v2774, %v2782
        %v2784 = vlaneseq
        %v2785 = vshrl.u32 %v2784, 7
        %v2786 = vsub.s32 2, %v2785
        %v2787 = vrot.slane %v2774, %v2786
        %v2788 = vlaneseq
        %v2789 = vshrl.u32 %v2788, 7
        %v2790 = vsub.s32 3, %v2789
        %v2791 = vrot.slane %v2774, %v2790
        %v2828 = vunpack.c.l.b16 %v2742
        %v2829 = vunpack.c.h.b16 %v2742
        %v2830 = vunpack.c.l.b16 %v2743
        %v2831 = vunpack.c.h.b16 %v2743
        %v2832 = vunpack.c.l.b16 %v2744
        %v2833 = vunpack.c.h.b16 %v2744
        %v2834 = vunpack.c.l.b16 %v2745
        %v2835 = vunpack.c.h.b16 %v2745
        %v2836 = vunpack.c.l.b16 %v2746
        %v2837 = vunpack.c.h.b16 %v2746
        %v2838 = vunpack.c.l.b16 %v2747
        %v2839 = vunpack.c.h.b16 %v2747
        %v2840 = vunpack.c.l.b16 %v2748
        %v2841 = vunpack.c.h.b16 %v2748
        %v2842 = vunpack.c.l.b16 %v2749
        %v2843 = vunpack.c.h.b16 %v2749
        %v2844 = vunpack.c.l.b16 %v2750
        %v2845 = vunpack.c.h.b16 %v2750
        %v2846 = vunpack.c.l.b16 %v2751
        %v2847 = vunpack.c.h.b16 %v2751
        %v2848 = vunpack.c.l.b16 %v2752
        %v2849 = vunpack.c.h.b16 %v2752
        %v2850 = vunpack.c.l.b16 %v2753
        %v2851 = vunpack.c.h.b16 %v2753
        %v2852 = vunpack.c.l.b16 %v2754
        %v2853 = vunpack.c.h.b16 %v2754
        %v2854 = vunpack.c.l.b16 %v2755
        %v2855 = vunpack.c.h.b16 %v2755
        %v2856 = vunpack.c.l.b16 %v2756
        %v2857 = vunpack.c.h.b16 %v2756
        %v2858 = vunpack.c.l.b16 %v2757
        %v2859 = vunpack.c.h.b16 %v2757
        %v2860 = vunpack.c.l.b16 %v2758
        %v2861 = vunpack.c.h.b16 %v2758
        %v2862 = vunpack.c.l.b16 %v2759
        %v2863 = vunpack.c.h.b16 %v2759
        %v2864 = vunpack.c.l.b16 %v2760
        %v2865 = vunpack.c.h.b16 %v2760
        %v2866 = vunpack.c.l.b16 %v2761
        %v2867 = vunpack.c.h.b16 %v2761
        %v2868 = vunpack.c.l.b16 %v2762
        %v2869 = vunpack.c.h.b16 %v2762
        %v2870 = vunpack.c.l.b16 %v2763
        %v2871 = vunpack.c.h.b16 %v2763
        %v2872 = vunpack.c.l.b16 %v2764
        %v2873 = vunpack.c.h.b16 %v2764
        %v2874 = vunpack.c.l.b16 %v2765
        %v2875 = vunpack.c.h.b16 %v2765
        %v2876 = vunpack.c.l.b16 %v2766
        %v2877 = vunpack.c.h.b16 %v2766
        %v2878 = vunpack.c.l.b16 %v2767
        %v2879 = vunpack.c.h.b16 %v2767
        %v2880 = vunpack.c.l.b16 %v2768
        %v2881 = vunpack.c.h.b16 %v2768
        %v2882 = vunpack.c.l.b16 %v2769
        %v2883 = vunpack.c.h.b16 %v2769
        %v2884 = vunpack.c.l.b16 %v2770
        %v2885 = vunpack.c.h.b16 %v2770
        %v2886 = vunpack.c.l.b16 %v2771
        %v2887 = vunpack.c.h.b16 %v2771
        %v2888 = vunpack.c.l.b16 %v2772
        %v2889 = vunpack.c.h.b16 %v2772
        %v2890 = vunpack.c.l.b16 %v2773
        %v2891 = vunpack.c.h.b16 %v2773
        %v2892 = vpack.c.b16 %v2832, %v2828
        %v2893 = vpack.c.b16 %v2833, %v2829
        %v2894 = vpack.c.b16 %v2834, %v2830
        %v2895 = vpack.c.b16 %v2835, %v2831
        %v2896 = vpack.c.b16 %v2840, %v2836
        %v2897 = vpack.c.b16 %v2841, %v2837
        %v2898 = vpack.c.b16 %v2842, %v2838
        %v2899 = vpack.c.b16 %v2843, %v2839
        %v2900 = vpack.c.b16 %v2848, %v2844
        %v2901 = vpack.c.b16 %v2849, %v2845
        %v2902 = vpack.c.b16 %v2850, %v2846
        %v2903 = vpack.c.b16 %v2851, %v2847
        %v2904 = vpack.c.b16 %v2856, %v2852
        %v2905 = vpack.c.b16 %v2857, %v2853
        %v2906 = vpack.c.b16 %v2858, %v2854
        %v2907 = vpack.c.b16 %v2859, %v2855
        %v2908 = vpack.c.b16 %v2864, %v2860
        %v2909 = vpack.c.b16 %v2865, %v2861
        %v2910 = vpack.c.b16 %v2866, %v2862
        %v2911 = vpack.c.b16 %v2867, %v2863
        %v2912 = vpack.c.b16 %v2872, %v2868
        %v2913 = vpack.c.b16 %v2873, %v2869
        %v2914 = vpack.c.b16 %v2874, %v2870
        %v2915 = vpack.c.b16 %v2875, %v2871
        %v2916 = vpack.c.b16 %v2880, %v2876
        %v2917 = vpack.c.b16 %v2881, %v2877
        %v2918 = vpack.c.b16 %v2882, %v2878
        %v2919 = vpack.c.b16 %v2883, %v2879
        %v2920 = vpack.c.b16 %v2888, %v2884
        %v2921 = vpack.c.b16 %v2889, %v2885
        %v2922 = vpack.c.b16 %v2890, %v2886
        %v2923 = vpack.c.b16 %v2891, %v2887
        %2956 = vmatprep.subr.bf16.mxu0 %v2893
        %2957 = vmatpush1.bf16.msra.mxu0 %v2892
        %2958 = vmatprep.subr.bf16.mxu0 %v2897
        %2959 = vmatpush1.bf16.msra.mxu0 %v2896
        %2960 = vmatprep.subr.bf16.mxu0 %v2901
        %2961 = vmatpush1.bf16.msra.mxu0 %v2900
        %2962 = vmatprep.subr.bf16.mxu0 %v2905
        %2963 = vmatpush1.bf16.msra.mxu0 %v2904
        %2964 = vmatprep.subr.bf16.mxu0 %v2909
        %2965 = vmatpush1.bf16.msra.mxu0 %v2908
        %2966 = vmatprep.subr.bf16.mxu0 %v2913
        %2967 = vmatpush1.bf16.msra.mxu0 %v2912
        %2968 = vmatprep.subr.bf16.mxu0 %v2917
        %2969 = vmatpush1.bf16.msra.mxu0 %v2916
        %2970 = vmatprep.subr.bf16.mxu0 %v2921
        %2971 = vmatpush1.bf16.msra.mxu0 %v2920
        %2972 = vmatprep.subr.bf16.mxu0 0
        %2973 = vmatpush1.bf16.msra.mxu0 0
        %2974 = vmatprep.subr.bf16.mxu0 0
        %2975 = vmatpush1.bf16.msra.mxu0 0
        %2976 = vmatprep.subr.bf16.mxu0 0
        %2977 = vmatpush1.bf16.msra.mxu0 0
        %2978 = vmatprep.subr.bf16.mxu0 0
        %2979 = vmatpush1.bf16.msra.mxu0 0
        %2980 = vmatprep.subr.bf16.mxu0 0
        %2981 = vmatpush1.bf16.msra.mxu0 0
        %2982 = vmatprep.subr.bf16.mxu0 0
        %2983 = vmatpush1.bf16.msra.mxu0 0
        %2984 = vmatprep.subr.bf16.mxu0 0
        %2985 = vmatpush1.bf16.msra.mxu0 0
        %2986 = vmatprep.subr.bf16.mxu0 0
        %2987 = vmatpush1.bf16.msra.mxu0 0
        %2988 = vmatprep.mubr.bf16.mxu0 0
        %2989 = vmatmul.mubr.bf16.gmra.mrb[0].mxu0 %v2741
        %v2990 = vpop.f32.mrb[0].mxu0
        %v2991 = vadd.f32 %v2779, %v2990
        %v2992 = vpop.f32.mrb[0].mxu0
        %v2993 = vadd.f32 %v2783, %v2992
        %v2994 = vpop.f32.mrb[0].mxu0
        %v2995 = vadd.f32 %v2779, %v2994
        %v2996 = vpop.f32.mrb[0].mxu0
        %v2997 = vadd.f32 %v2783, %v2996
        %2998 = vdwg.mxu0
        %2999 = vmatprep.subr.bf16.mxu0 %v2895
        %3000 = vmatpush1.bf16.msra.mxu0 %v2894
        %3001 = vmatprep.subr.bf16.mxu0 %v2899
        %3002 = vmatpush1.bf16.msra.mxu0 %v2898
        %3003 = vmatprep.subr.bf16.mxu0 %v2903
        %3004 = vmatpush1.bf16.msra.mxu0 %v2902
        %3005 = vmatprep.subr.bf16.mxu0 %v2907
        %3006 = vmatpush1.bf16.msra.mxu0 %v2906
        %3007 = vmatprep.subr.bf16.mxu0 %v2911
        %3008 = vmatpush1.bf16.msra.mxu0 %v2910
        %3009 = vmatprep.subr.bf16.mxu0 %v2915
        %3010 = vmatpush1.bf16.msra.mxu0 %v2914
        %3011 = vmatprep.subr.bf16.mxu0 %v2919
        %3012 = vmatpush1.bf16.msra.mxu0 %v2918
        %3013 = vmatprep.subr.bf16.mxu0 %v2923
        %3014 = vmatpush1.bf16.msra.mxu0 %v2922
        %3015 = vmatprep.subr.bf16.mxu0 0
        %3016 = vmatpush1.bf16.msra.mxu0 0
        %3017 = vmatprep.subr.bf16.mxu0 0
        %3018 = vmatpush1.bf16.msra.mxu0 0
        %3019 = vmatprep.subr.bf16.mxu0 0
        %3020 = vmatpush1.bf16.msra.mxu0 0
        %3021 = vmatprep.subr.bf16.mxu0 0
        %3022 = vmatpush1.bf16.msra.mxu0 0
        %3023 = vmatprep.subr.bf16.mxu0 0
        %3024 = vmatpush1.bf16.msra.mxu0 0
        %3025 = vmatprep.subr.bf16.mxu0 0
        %3026 = vmatpush1.bf16.msra.mxu0 0
        %3027 = vmatprep.subr.bf16.mxu0 0
        %3028 = vmatpush1.bf16.msra.mxu0 0
        %3029 = vmatprep.subr.bf16.mxu0 0
        %3030 = vmatpush1.bf16.msra.mxu0 0
        %3031 = vmatprep.mubr.bf16.mxu0 0
        %3032 = vmatmul.mubr.bf16.gmra.mrb[0].mxu0 %v2741
        %v3033 = vpop.f32.mrb[0].mxu0
        %v3034 = vadd.f32 %v2787, %v3033
        %v3035 = vpop.f32.mrb[0].mxu0
        %v3036 = vadd.f32 %v2791, %v3035
        %v3037 = vpop.f32.mrb[0].mxu0
        %v3038 = vadd.f32 %v2787, %v3037
        %v3039 = vpop.f32.mrb[0].mxu0
        %v3040 = vadd.f32 %v2791, %v3039
        %3041 = vdwg.mxu0
        %v3042 = vmul.f32 %v2991, 0.5
        %v3043 = vmul.f32 %v2993, 0.5
        %v3044 = vmul.f32 %v3034, 0.5
        %v3045 = vmul.f32 %v3036, 0.5
        %v3046 = vmul.f32 %v2995, 0.5
        %v3047 = vmul.f32 %v2997, 0.5
        %v3048 = vmul.f32 %v3038, 0.5
        %v3049 = vmul.f32 %v3040, 0.5
        %v3050 = vmul.f32 %v2991, 0.70710677
        %v3051 = vmul.f32 %v2993, 0.70710677
        %v3052 = vmul.f32 %v3034, 0.70710677
        %v3053 = vmul.f32 %v3036, 0.70710677
        %v3054 = vmul.f32 %v2995, 0.70710677
        %v3055 = vmul.f32 %v2997, 0.70710677
        %v3056 = vmul.f32 %v3038, 0.70710677
        %v3057 = vmul.f32 %v3040, 0.70710677
        %vm3058 = vcmp.ge.f32.partialorder %v3050, 0.0
        %vm3059 = vcmp.ge.f32.partialorder %v3051, 0.0
        %vm3060 = vcmp.ge.f32.partialorder %v3052, 0.0
        %vm3061 = vcmp.ge.f32.partialorder %v3053, 0.0
        %vm3062 = vcmp.ge.f32.partialorder %v3054, 0.0
        %vm3063 = vcmp.ge.f32.partialorder %v3055, 0.0
        %vm3064 = vcmp.ge.f32.partialorder %v3056, 0.0
        %vm3065 = vcmp.ge.f32.partialorder %v3057, 0.0
        %v3066 = vsub.f32 0.0, %v3050
        %v3067 = vsub.f32 0.0, %v3051
        %v3068 = vsub.f32 0.0, %v3052
        %v3069 = vsub.f32 0.0, %v3053
        %v3070 = vsub.f32 0.0, %v3054
        %v3071 = vsub.f32 0.0, %v3055
        %v3072 = vsub.f32 0.0, %v3056
        %v3073 = vsub.f32 0.0, %v3057
        %v3074 = vsel %vm3058, %v3050, %v3066
        %v3075 = vsel %vm3059, %v3051, %v3067
        %v3076 = vsel %vm3060, %v3052, %v3068
        %v3077 = vsel %vm3061, %v3053, %v3069
        %v3078 = vsel %vm3062, %v3054, %v3070
        %v3079 = vsel %vm3063, %v3055, %v3071
        %v3080 = vsel %vm3064, %v3056, %v3072
        %v3081 = vsel %vm3065, %v3057, %v3073
        %v3082 = vmul.f32 %v3074, 0.3275911
        %v3083 = vmul.f32 %v3075, 0.3275911
        %v3084 = vmul.f32 %v3076, 0.3275911
        %v3085 = vmul.f32 %v3077, 0.3275911
        %v3086 = vmul.f32 %v3078, 0.3275911
        %v3087 = vmul.f32 %v3079, 0.3275911
        %v3088 = vmul.f32 %v3080, 0.3275911
        %v3089 = vmul.f32 %v3081, 0.3275911
        %v3090 = vadd.f32 %v3082, 1.0
        %v3091 = vadd.f32 %v3083, 1.0
        %v3092 = vadd.f32 %v3084, 1.0
        %v3093 = vadd.f32 %v3085, 1.0
        %v3094 = vadd.f32 %v3086, 1.0
        %v3095 = vadd.f32 %v3087, 1.0
        %v3096 = vadd.f32 %v3088, 1.0
        %v3097 = vadd.f32 %v3089, 1.0
        %v3098 = vrcp.pop %v3090
        %v3099 = vmul.f32 1.0, %v3098
        %v3100 = vrcp.pop %v3091
        %v3101 = vmul.f32 1.0, %v3100
        %v3102 = vrcp.pop %v3092
        %v3103 = vmul.f32 1.0, %v3102
        %v3104 = vrcp.pop %v3093
        %v3105 = vmul.f32 1.0, %v3104
        %v3106 = vrcp.pop %v3094
        %v3107 = vmul.f32 1.0, %v3106
        %v3108 = vrcp.pop %v3095
        %v3109 = vmul.f32 1.0, %v3108
        %v3110 = vrcp.pop %v3096
        %v3111 = vmul.f32 1.0, %v3110
        %v3112 = vrcp.pop %v3097
        %v3113 = vmul.f32 1.0, %v3112
        %v3114 = vmul.f32 %v3099, 1.0614054
        %v3115 = vmul.f32 %v3101, 1.0614054
        %v3116 = vmul.f32 %v3103, 1.0614054
        %v3117 = vmul.f32 %v3105, 1.0614054
        %v3118 = vmul.f32 %v3107, 1.0614054
        %v3119 = vmul.f32 %v3109, 1.0614054
        %v3120 = vmul.f32 %v3111, 1.0614054
        %v3121 = vmul.f32 %v3113, 1.0614054
        %v3122 = vadd.f32 %v3114, -1.4531521
        %v3123 = vadd.f32 %v3115, -1.4531521
        %v3124 = vadd.f32 %v3116, -1.4531521
        %v3125 = vadd.f32 %v3117, -1.4531521
        %v3126 = vadd.f32 %v3118, -1.4531521
        %v3127 = vadd.f32 %v3119, -1.4531521
        %v3128 = vadd.f32 %v3120, -1.4531521
        %v3129 = vadd.f32 %v3121, -1.4531521
        %v3130 = vmul.f32 %v3122, %v3099
        %v3131 = vmul.f32 %v3123, %v3101
        %v3132 = vmul.f32 %v3124, %v3103
        %v3133 = vmul.f32 %v3125, %v3105
        %v3134 = vmul.f32 %v3126, %v3107
        %v3135 = vmul.f32 %v3127, %v3109
        %v3136 = vmul.f32 %v3128, %v3111
        %v3137 = vmul.f32 %v3129, %v3113
        %v3138 = vadd.f32 %v3130, 1.4214138
        %v3139 = vadd.f32 %v3131, 1.4214138
        %v3140 = vadd.f32 %v3132, 1.4214138
        %v3141 = vadd.f32 %v3133, 1.4214138
        %v3142 = vadd.f32 %v3134, 1.4214138
        %v3143 = vadd.f32 %v3135, 1.4214138
        %v3144 = vadd.f32 %v3136, 1.4214138
        %v3145 = vadd.f32 %v3137, 1.4214138
        %v3146 = vmul.f32 %v3138, %v3099
        %v3147 = vmul.f32 %v3139, %v3101
        %v3148 = vmul.f32 %v3140, %v3103
        %v3149 = vmul.f32 %v3141, %v3105
        %v3150 = vmul.f32 %v3142, %v3107
        %v3151 = vmul.f32 %v3143, %v3109
        %v3152 = vmul.f32 %v3144, %v3111
        %v3153 = vmul.f32 %v3145, %v3113
        %v3154 = vadd.f32 %v3146, -0.28449672
        %v3155 = vadd.f32 %v3147, -0.28449672
        %v3156 = vadd.f32 %v3148, -0.28449672
        %v3157 = vadd.f32 %v3149, -0.28449672
        %v3158 = vadd.f32 %v3150, -0.28449672
        %v3159 = vadd.f32 %v3151, -0.28449672
        %v3160 = vadd.f32 %v3152, -0.28449672
        %v3161 = vadd.f32 %v3153, -0.28449672
        %v3162 = vmul.f32 %v3154, %v3099
        %v3163 = vmul.f32 %v3155, %v3101
        %v3164 = vmul.f32 %v3156, %v3103
        %v3165 = vmul.f32 %v3157, %v3105
        %v3166 = vmul.f32 %v3158, %v3107
        %v3167 = vmul.f32 %v3159, %v3109
        %v3168 = vmul.f32 %v3160, %v3111
        %v3169 = vmul.f32 %v3161, %v3113
        %v3170 = vadd.f32 %v3162, 0.2548296
        %v3171 = vadd.f32 %v3163, 0.2548296
        %v3172 = vadd.f32 %v3164, 0.2548296
        %v3173 = vadd.f32 %v3165, 0.2548296
        %v3174 = vadd.f32 %v3166, 0.2548296
        %v3175 = vadd.f32 %v3167, 0.2548296
        %v3176 = vadd.f32 %v3168, 0.2548296
        %v3177 = vadd.f32 %v3169, 0.2548296
        %v3178 = vmul.f32 %v3170, %v3099
        %v3179 = vmul.f32 %v3171, %v3101
        %v3180 = vmul.f32 %v3172, %v3103
        %v3181 = vmul.f32 %v3173, %v3105
        %v3182 = vmul.f32 %v3174, %v3107
        %v3183 = vmul.f32 %v3175, %v3109
        %v3184 = vmul.f32 %v3176, %v3111
        %v3185 = vmul.f32 %v3177, %v3113
        %v3186 = vsub.f32 0.0, %v3074
        %v3187 = vsub.f32 0.0, %v3075
        %v3188 = vsub.f32 0.0, %v3076
        %v3189 = vsub.f32 0.0, %v3077
        %v3190 = vsub.f32 0.0, %v3078
        %v3191 = vsub.f32 0.0, %v3079
        %v3192 = vsub.f32 0.0, %v3080
        %v3193 = vsub.f32 0.0, %v3081
        %v3194 = vmul.f32 %v3186, %v3074
        %v3195 = vmul.f32 %v3187, %v3075
        %v3196 = vmul.f32 %v3188, %v3076
        %v3197 = vmul.f32 %v3189, %v3077
        %v3198 = vmul.f32 %v3190, %v3078
        %v3199 = vmul.f32 %v3191, %v3079
        %v3200 = vmul.f32 %v3192, %v3080
        %v3201 = vmul.f32 %v3193, %v3081
        %v3202 = vmul.f32 %v3194, 1.442695
        %v3203 = vpow.pop %v3202
        %v3204 = vmul.f32 %v3195, 1.442695
        %v3205 = vpow.pop %v3204
        %v3206 = vmul.f32 %v3196, 1.442695
        %v3207 = vpow.pop %v3206
        %v3208 = vmul.f32 %v3197, 1.442695
        %v3209 = vpow.pop %v3208
        %v3210 = vmul.f32 %v3198, 1.442695
        %v3211 = vpow.pop %v3210
        %v3212 = vmul.f32 %v3199, 1.442695
        %v3213 = vpow.pop %v3212
        %v3214 = vmul.f32 %v3200, 1.442695
        %v3215 = vpow.pop %v3214
        %v3216 = vmul.f32 %v3201, 1.442695
        %v3217 = vpow.pop %v3216
        %v3218 = vmul.f32 %v3178, %v3203
        %v3219 = vmul.f32 %v3179, %v3205
        %v3220 = vmul.f32 %v3180, %v3207
        %v3221 = vmul.f32 %v3181, %v3209
        %v3222 = vmul.f32 %v3182, %v3211
        %v3223 = vmul.f32 %v3183, %v3213
        %v3224 = vmul.f32 %v3184, %v3215
        %v3225 = vmul.f32 %v3185, %v3217
        %v3226 = vsub.f32 1.0, %v3218
        %v3227 = vsub.f32 1.0, %v3219
        %v3228 = vsub.f32 1.0, %v3220
        %v3229 = vsub.f32 1.0, %v3221
        %v3230 = vsub.f32 1.0, %v3222
        %v3231 = vsub.f32 1.0, %v3223
        %v3232 = vsub.f32 1.0, %v3224
        %v3233 = vsub.f32 1.0, %v3225
        %v3234 = vsub.f32 0.0, %v3226
        %v3235 = vsub.f32 0.0, %v3227
        %v3236 = vsub.f32 0.0, %v3228
        %v3237 = vsub.f32 0.0, %v3229
        %v3238 = vsub.f32 0.0, %v3230
        %v3239 = vsub.f32 0.0, %v3231
        %v3240 = vsub.f32 0.0, %v3232
        %v3241 = vsub.f32 0.0, %v3233
        %v3242 = vsel %vm3058, %v3226, %v3234
        %v3243 = vsel %vm3059, %v3227, %v3235
        %v3244 = vsel %vm3060, %v3228, %v3236
        %v3245 = vsel %vm3061, %v3229, %v3237
        %v3246 = vsel %vm3062, %v3230, %v3238
        %v3247 = vsel %vm3063, %v3231, %v3239
        %v3248 = vsel %vm3064, %v3232, %v3240
        %v3249 = vsel %vm3065, %v3233, %v3241
        %v3250 = vadd.f32 %v3242, 1.0
        %v3251 = vadd.f32 %v3243, 1.0
        %v3252 = vadd.f32 %v3244, 1.0
        %v3253 = vadd.f32 %v3245, 1.0
        %v3254 = vadd.f32 %v3246, 1.0
        %v3255 = vadd.f32 %v3247, 1.0
        %v3256 = vadd.f32 %v3248, 1.0
        %v3257 = vadd.f32 %v3249, 1.0
        %v3258 = vmul.f32 %v3042, %v3250
        %v3259 = vmul.f32 %v3043, %v3251
        %v3260 = vmul.f32 %v3044, %v3252
        %v3261 = vmul.f32 %v3045, %v3253
        %v3262 = vmul.f32 %v3046, %v3254
        %v3263 = vmul.f32 %v3047, %v3255
        %v3264 = vmul.f32 %v3048, %v3256
        %v3265 = vmul.f32 %v3049, %v3257
        %v3266 = vpack.c.bf16 %v3262, %v3258
        %v3267 = vpack.c.bf16 %v3263, %v3259
        %v3268 = vpack.c.bf16 %v3264, %v3260
        %v3269 = vpack.c.bf16 %v3265, %v3261
        %v3270 = vld [vmem:[#allocation21] sm:$0xf]
        %v3271 = vld [vmem:[#allocation21 + $0x4] sm:$0xf]
        %v3272 = vld [vmem:[#allocation21 + $0x8] sm:$0xf]
        %v3273 = vld [vmem:[#allocation21 + $0xc] sm:$0xf]
        %v3274 = vld [vmem:[#allocation21 + $0x10] sm:$0xf]
        %v3275 = vld [vmem:[#allocation21 + $0x14] sm:$0xf]
        %v3276 = vld [vmem:[#allocation21 + $0x18] sm:$0xf]
        %v3277 = vld [vmem:[#allocation21 + $0x1c] sm:$0xf]
        %v3278 = vld [vmem:[#allocation21 + $0x20] sm:$0xf]
        %v3279 = vld [vmem:[#allocation21 + $0x24] sm:$0xf]
        %v3280 = vld [vmem:[#allocation21 + $0x28] sm:$0xf]
        %v3281 = vld [vmem:[#allocation21 + $0x2c] sm:$0xf]
        %v3282 = vld [vmem:[#allocation21 + $0x30] sm:$0xf]
        %v3283 = vld [vmem:[#allocation21 + $0x34] sm:$0xf]
        %v3284 = vld [vmem:[#allocation21 + $0x38] sm:$0xf]
        %v3285 = vld [vmem:[#allocation21 + $0x3c] sm:$0xf]
        %v3286 = vld [vmem:[#allocation21 + $0x40] sm:$0xf]
        %v3287 = vld [vmem:[#allocation21 + $0x44] sm:$0xf]
        %v3288 = vld [vmem:[#allocation21 + $0x48] sm:$0xf]
        %v3289 = vld [vmem:[#allocation21 + $0x4c] sm:$0xf]
        %v3290 = vld [vmem:[#allocation21 + $0x50] sm:$0xf]
        %v3291 = vld [vmem:[#allocation21 + $0x54] sm:$0xf]
        %v3292 = vld [vmem:[#allocation21 + $0x58] sm:$0xf]
        %v3293 = vld [vmem:[#allocation21 + $0x5c] sm:$0xf]
        %v3294 = vld [vmem:[#allocation21 + $0x60] sm:$0xf]
        %v3295 = vld [vmem:[#allocation21 + $0x64] sm:$0xf]
        %v3296 = vld [vmem:[#allocation21 + $0x68] sm:$0xf]
        %v3297 = vld [vmem:[#allocation21 + $0x6c] sm:$0xf]
        %v3298 = vld [vmem:[#allocation21 + $0x70] sm:$0xf]
        %v3299 = vld [vmem:[#allocation21 + $0x74] sm:$0xf]
        %v3300 = vld [vmem:[#allocation21 + $0x78] sm:$0xf]
        %v3301 = vld [vmem:[#allocation21 + $0x7c] sm:$0xf]
        %v3302 = vld [vmem:[#allocation21 + $0x80] sm:$0xf]
        %v3303 = vld [vmem:[#allocation21 + $0x84] sm:$0xf]
        %v3304 = vld [vmem:[#allocation21 + $0x88] sm:$0xf]
        %v3305 = vld [vmem:[#allocation21 + $0x8c] sm:$0xf]
        %v3306 = vld [vmem:[#allocation21 + $0x90] sm:$0xf]
        %v3307 = vld [vmem:[#allocation21 + $0x94] sm:$0xf]
        %v3308 = vld [vmem:[#allocation21 + $0x98] sm:$0xf]
        %v3309 = vld [vmem:[#allocation21 + $0x9c] sm:$0xf]
        %v3310 = vld [vmem:[#allocation21 + $0xa0] sm:$0xf]
        %v3311 = vld [vmem:[#allocation21 + $0xa4] sm:$0xf]
        %v3312 = vld [vmem:[#allocation21 + $0xa8] sm:$0xf]
        %v3313 = vld [vmem:[#allocation21 + $0xac] sm:$0xf]
        %v3314 = vld [vmem:[#allocation21 + $0xb0] sm:$0xf]
        %v3315 = vld [vmem:[#allocation21 + $0xb4] sm:$0xf]
        %v3316 = vld [vmem:[#allocation21 + $0xb8] sm:$0xf]
        %v3317 = vld [vmem:[#allocation21 + $0xbc] sm:$0xf]
        %v3318 = vld [vmem:[#allocation21 + $0xc0] sm:$0xf]
        %v3319 = vld [vmem:[#allocation21 + $0xc4] sm:$0xf]
        %v3320 = vld [vmem:[#allocation21 + $0xc8] sm:$0xf]
        %v3321 = vld [vmem:[#allocation21 + $0xcc] sm:$0xf]
        %v3322 = vld [vmem:[#allocation21 + $0xd0] sm:$0xf]
        %v3323 = vld [vmem:[#allocation21 + $0xd4] sm:$0xf]
        %v3324 = vld [vmem:[#allocation21 + $0xd8] sm:$0xf]
        %v3325 = vld [vmem:[#allocation21 + $0xdc] sm:$0xf]
        %v3326 = vld [vmem:[#allocation21 + $0xe0] sm:$0xf]
        %v3327 = vld [vmem:[#allocation21 + $0xe4] sm:$0xf]
        %v3328 = vld [vmem:[#allocation21 + $0xe8] sm:$0xf]
        %v3329 = vld [vmem:[#allocation21 + $0xec] sm:$0xf]
        %v3330 = vld [vmem:[#allocation21 + $0xf0] sm:$0xf]
        %v3331 = vld [vmem:[#allocation21 + $0xf4] sm:$0xf]
        %v3332 = vld [vmem:[#allocation21 + $0xf8] sm:$0xf]
        %v3333 = vld [vmem:[#allocation21 + $0xfc] sm:$0xf]
        %v3334 = vld [vmem:[%s22] sm:$0x1]
        %v3336 = vlaneseq
        %v3337 = vshrl.u32 %v3336, 7
        %v3338 = vsub.s32 0, %v3337
        %v3339 = vrot.slane %v3334, %v3338
        %v3405 = vunpack.c.l.b16 %v3270
        %v3406 = vunpack.c.l.b16 %v3271
        %v3407 = vunpack.c.l.b16 %v3272
        %v3408 = vunpack.c.l.b16 %v3273
        %v3409 = vunpack.c.l.b16 %v3274
        %v3410 = vunpack.c.l.b16 %v3275
        %v3411 = vunpack.c.l.b16 %v3276
        %v3412 = vunpack.c.l.b16 %v3277
        %v3413 = vunpack.c.l.b16 %v3278
        %v3414 = vunpack.c.l.b16 %v3279
        %v3415 = vunpack.c.l.b16 %v3280
        %v3416 = vunpack.c.l.b16 %v3281
        %v3417 = vunpack.c.l.b16 %v3282
        %v3418 = vunpack.c.l.b16 %v3283
        %v3419 = vunpack.c.l.b16 %v3284
        %v3420 = vunpack.c.l.b16 %v3285
        %v3421 = vunpack.c.l.b16 %v3286
        %v3422 = vunpack.c.l.b16 %v3287
        %v3423 = vunpack.c.l.b16 %v3288
        %v3424 = vunpack.c.l.b16 %v3289
        %v3425 = vunpack.c.l.b16 %v3290
        %v3426 = vunpack.c.l.b16 %v3291
        %v3427 = vunpack.c.l.b16 %v3292
        %v3428 = vunpack.c.l.b16 %v3293
        %v3429 = vunpack.c.l.b16 %v3294
        %v3430 = vunpack.c.l.b16 %v3295
        %v3431 = vunpack.c.l.b16 %v3296
        %v3432 = vunpack.c.l.b16 %v3297
        %v3433 = vunpack.c.l.b16 %v3298
        %v3434 = vunpack.c.l.b16 %v3299
        %v3435 = vunpack.c.l.b16 %v3300
        %v3436 = vunpack.c.l.b16 %v3301
        %v3437 = vunpack.c.l.b16 %v3302
        %v3438 = vunpack.c.l.b16 %v3303
        %v3439 = vunpack.c.l.b16 %v3304
        %v3440 = vunpack.c.l.b16 %v3305
        %v3441 = vunpack.c.l.b16 %v3306
        %v3442 = vunpack.c.l.b16 %v3307
        %v3443 = vunpack.c.l.b16 %v3308
        %v3444 = vunpack.c.l.b16 %v3309
        %v3445 = vunpack.c.l.b16 %v3310
        %v3446 = vunpack.c.l.b16 %v3311
        %v3447 = vunpack.c.l.b16 %v3312
        %v3448 = vunpack.c.l.b16 %v3313
        %v3449 = vunpack.c.l.b16 %v3314
        %v3450 = vunpack.c.l.b16 %v3315
        %v3451 = vunpack.c.l.b16 %v3316
        %v3452 = vunpack.c.l.b16 %v3317
        %v3453 = vunpack.c.l.b16 %v3318
        %v3454 = vunpack.c.l.b16 %v3319
        %v3455 = vunpack.c.l.b16 %v3320
        %v3456 = vunpack.c.l.b16 %v3321
        %v3457 = vunpack.c.l.b16 %v3322
        %v3458 = vunpack.c.l.b16 %v3323
        %v3459 = vunpack.c.l.b16 %v3324
        %v3460 = vunpack.c.l.b16 %v3325
        %v3461 = vunpack.c.l.b16 %v3326
        %v3462 = vunpack.c.l.b16 %v3327
        %v3463 = vunpack.c.l.b16 %v3328
        %v3464 = vunpack.c.l.b16 %v3329
        %v3465 = vunpack.c.l.b16 %v3330
        %v3466 = vunpack.c.l.b16 %v3331
        %v3467 = vunpack.c.l.b16 %v3332
        %v3468 = vunpack.c.l.b16 %v3333
        %v3469 = vpack.c.b16 %v3406, %v3405
        %v3470 = vpack.c.b16 %v3408, %v3407
        %v3471 = vpack.c.b16 %v3410, %v3409
        %v3472 = vpack.c.b16 %v3412, %v3411
        %v3473 = vpack.c.b16 %v3414, %v3413
        %v3474 = vpack.c.b16 %v3416, %v3415
        %v3475 = vpack.c.b16 %v3418, %v3417
        %v3476 = vpack.c.b16 %v3420, %v3419
        %v3477 = vpack.c.b16 %v3422, %v3421
        %v3478 = vpack.c.b16 %v3424, %v3423
        %v3479 = vpack.c.b16 %v3426, %v3425
        %v3480 = vpack.c.b16 %v3428, %v3427
        %v3481 = vpack.c.b16 %v3430, %v3429
        %v3482 = vpack.c.b16 %v3432, %v3431
        %v3483 = vpack.c.b16 %v3434, %v3433
        %v3484 = vpack.c.b16 %v3436, %v3435
        %v3485 = vpack.c.b16 %v3438, %v3437
        %v3486 = vpack.c.b16 %v3440, %v3439
        %v3487 = vpack.c.b16 %v3442, %v3441
        %v3488 = vpack.c.b16 %v3444, %v3443
        %v3489 = vpack.c.b16 %v3446, %v3445
        %v3490 = vpack.c.b16 %v3448, %v3447
        %v3491 = vpack.c.b16 %v3450, %v3449
        %v3492 = vpack.c.b16 %v3452, %v3451
        %v3493 = vpack.c.b16 %v3454, %v3453
        %v3494 = vpack.c.b16 %v3456, %v3455
        %v3495 = vpack.c.b16 %v3458, %v3457
        %v3496 = vpack.c.b16 %v3460, %v3459
        %v3497 = vpack.c.b16 %v3462, %v3461
        %v3498 = vpack.c.b16 %v3464, %v3463
        %v3499 = vpack.c.b16 %v3466, %v3465
        %v3500 = vpack.c.b16 %v3468, %v3467
        %3533 = vmatprep.subr.bf16.mxu0 0
        %3534 = vmatpush1.bf16.msra.mxu0 %v3469
        %3535 = vmatprep.subr.bf16.mxu0 0
        %3536 = vmatpush1.bf16.msra.mxu0 %v3470
        %3537 = vmatprep.subr.bf16.mxu0 0
        %3538 = vmatpush1.bf16.msra.mxu0 %v3471
        %3539 = vmatprep.subr.bf16.mxu0 0
        %3540 = vmatpush1.bf16.msra.mxu0 %v3472
        %3541 = vmatprep.subr.bf16.mxu0 0
        %3542 = vmatpush1.bf16.msra.mxu0 %v3473
        %3543 = vmatprep.subr.bf16.mxu0 0
        %3544 = vmatpush1.bf16.msra.mxu0 %v3474
        %3545 = vmatprep.subr.bf16.mxu0 0
        %3546 = vmatpush1.bf16.msra.mxu0 %v3475
        %3547 = vmatprep.subr.bf16.mxu0 0
        %3548 = vmatpush1.bf16.msra.mxu0 %v3476
        %3549 = vmatprep.subr.bf16.mxu0 0
        %3550 = vmatpush1.bf16.msra.mxu0 %v3477
        %3551 = vmatprep.subr.bf16.mxu0 0
        %3552 = vmatpush1.bf16.msra.mxu0 %v3478
        %3553 = vmatprep.subr.bf16.mxu0 0
        %3554 = vmatpush1.bf16.msra.mxu0 %v3479
        %3555 = vmatprep.subr.bf16.mxu0 0
        %3556 = vmatpush1.bf16.msra.mxu0 %v3480
        %3557 = vmatprep.subr.bf16.mxu0 0
        %3558 = vmatpush1.bf16.msra.mxu0 %v3481
        %3559 = vmatprep.subr.bf16.mxu0 0
        %3560 = vmatpush1.bf16.msra.mxu0 %v3482
        %3561 = vmatprep.subr.bf16.mxu0 0
        %3562 = vmatpush1.bf16.msra.mxu0 %v3483
        %3563 = vmatprep.subr.bf16.mxu0 0
        %3564 = vmatpush1.bf16.msra.mxu0 %v3484
        %3565 = vmatprep.mubr.bf16.mxu0 %v3267
        %3566 = vmatmul.mubr.bf16.gmra.mrb[0].mxu0 %v3266
        %v3567 = vpop.f32.mrb[0].mxu0
        %v3568 = vadd.f32 %v3339, %v3567
        %v3569 = vpop.f32.mrb[0].mxu0
        %v3570 = vpop.f32.mrb[0].mxu0
        %v3571 = vadd.f32 %v3339, %v3570
        %v3572 = vpop.f32.mrb[0].mxu0
        %3573 = vdwg.mxu0
        %3574 = vmatprep.subr.bf16.mxu0 0
        %3575 = vmatpush1.bf16.msra.mxu0 %v3485
        %3576 = vmatprep.subr.bf16.mxu0 0
        %3577 = vmatpush1.bf16.msra.mxu0 %v3486
        %3578 = vmatprep.subr.bf16.mxu0 0
        %3579 = vmatpush1.bf16.msra.mxu0 %v3487
        %3580 = vmatprep.subr.bf16.mxu0 0
        %3581 = vmatpush1.bf16.msra.mxu0 %v3488
        %3582 = vmatprep.subr.bf16.mxu0 0
        %3583 = vmatpush1.bf16.msra.mxu0 %v3489
        %3584 = vmatprep.subr.bf16.mxu0 0
        %3585 = vmatpush1.bf16.msra.mxu0 %v3490
        %3586 = vmatprep.subr.bf16.mxu0 0
        %3587 = vmatpush1.bf16.msra.mxu0 %v3491
        %3588 = vmatprep.subr.bf16.mxu0 0
        %3589 = vmatpush1.bf16.msra.mxu0 %v3492
        %3590 = vmatprep.subr.bf16.mxu0 0
        %3591 = vmatpush1.bf16.msra.mxu0 %v3493
        %3592 = vmatprep.subr.bf16.mxu0 0
        %3593 = vmatpush1.bf16.msra.mxu0 %v3494
        %3594 = vmatprep.subr.bf16.mxu0 0
        %3595 = vmatpush1.bf16.msra.mxu0 %v3495
        %3596 = vmatprep.subr.bf16.mxu0 0
        %3597 = vmatpush1.bf16.msra.mxu0 %v3496
        %3598 = vmatprep.subr.bf16.mxu0 0
        %3599 = vmatpush1.bf16.msra.mxu0 %v3497
        %3600 = vmatprep.subr.bf16.mxu0 0
        %3601 = vmatpush1.bf16.msra.mxu0 %v3498
        %3602 = vmatprep.subr.bf16.mxu0 0
        %3603 = vmatpush1.bf16.msra.mxu0 %v3499
        %3604 = vmatprep.subr.bf16.mxu0 0
        %3605 = vmatpush1.bf16.msra.mxu0 %v3500
        %3606 = vmatprep.mubr.bf16.mxu0 %v3269
        %3607 = vmatmul.mubr.bf16.gmra.mrb[0].mxu0 %v3268
        %v3608 = vpop.f32.mrb[0].mxu0
        %v3609 = vadd.f32 %v3568, %v3608
        %v3610 = vpop.f32.mrb[0].mxu0
        %v3611 = vpop.f32.mrb[0].mxu0
        %v3612 = vadd.f32 %v3571, %v3611
        %v3613 = vpop.f32.mrb[0].mxu0
        %3614 = vdwg.mxu0
        %v3615 = vadd.f32 %v2699, %v3609
        %v3616 = vadd.f32 %v2700, %v3612
        %v3617 = vpack.c.bf16 %v3616, %v3615
        %v3619 = vunpack.c.l.b16 %v3617
        %v3620 = vunpack.c.h.b16 %v3617
        %v3621 = vpack.c.b16 %v3619, %v3619
        %v3622 = vpack.c.b16 %v3620, %v3620
        %3625 = vst [vmem:[%s888] sm:$0xf] %v3621
        %3626 = vst [vmem:[%s888 + $0x4] sm:$0xf] %v3622
        %s3627 = sand.u32 %s542, 1
        %s3628 = scalar_lea.sflag [#allocation5], %s3627
        %s3629 = sand.u32 %s542, 1
        %s3630 = smul.addr %s3629, 8
        %s3631 = scalar_lea.vmem [#allocation23], %s3630
        // Predicated region
        $region161: #{tpu_custom_call.1} parent=111 // pred_check
          %p3632 = pneg %p552
        $region162: #{tpu_custom_call.1} parent=111 // pred_check_branch
          %3634 = sbr.rel (%p3632) target = $region164
        $region163: #{tpu_custom_call.1} parent=111 // pred_region
          %s3636 = ssub.s32 128, 128
          %3637 = vsyncadd %s3628, %s3636
          %s3638 = smul.addr %s46, 2
          %s3639 = smul.addr %s3638, 64
          %s3640 = scalar_lea.hbm %s23, %s3639
          %s3641 = sshll.u32 %s3631, 4
          %s3642 = int_to_ptr.vmem [resolvable:$true] %s3641
          %3647 = dma.vmem_to_hbm [thread:$0]  %s3642, 128, %s3640, %s3628, 64, 64, 4
        $region164: #{tpu_custom_call.1} parent=111 // pred_fallthru
          _
      $region112: #{tpu_custom_call.1} parent=5 // pred_fallthru
        _
      %p3648 = scmp.le.s32.totalorder 2, %s41
      // Predicated region
      $region165: #{tpu_custom_call.1} parent=5 // pred_check
        %p3649 = pneg %p3648
      $region166: #{tpu_custom_call.1} parent=5 // pred_check_branch
        %3651 = sbr.rel (%p3649) target = $region168
      $region167: #{tpu_custom_call.1} parent=5 // pred_region
        %s3652 = ssub.s32 %s41, 2
        // Predicated region
        $region169: #{tpu_custom_call.1} parent=167 // pred_check
          %p3653 = pneg %p558
        $region170: #{tpu_custom_call.1} parent=167 // pred_check_branch
          %3655 = sbr.rel (%p3653) target = $region172
        $region171: #{tpu_custom_call.1} parent=167 // pred_region
          %s3656 = sand.u32 %s543, 1
          %s3657 = scalar_lea.sflag [#allocation5], %s3656
          %s3658 = sand.u32 %s543, 1
          %s3659 = smul.addr %s3658, 8
          %s3660 = scalar_lea.vmem [#allocation23], %s3659
          %3661 = dma.done %s3657, 128
        $region172: #{tpu_custom_call.1} parent=167 // pred_fallthru
          _
      $region168: #{tpu_custom_call.1} parent=5 // pred_fallthru
        _
    $region6: #{tpu_custom_call.1} parent=1 // loop_footer
      %s45 = sadd.s32 1, %s41
    $region7: #{tpu_custom_call.1} parent=1 // loop_footer_branch
      %40 = sbr.rel target = $region3
    $region8: #{tpu_custom_call.1} parent=1 // loop_exit
      _
    %3662 = vsyncpa [#allocation4], 1
    %s3663 = scalar_lea.sflag [#allocation4], 1
    %3664 = vsyncpa %s3663, 1
    %3665 = vsyncpa [#allocation7], 1
    %3666 = vsyncpa [#allocation10], 1
    %3667 = vsyncpa [#allocation13], 1
    %3668 = vsyncpa [#allocation16], 1
    %3669 = vsyncpa [#allocation19], 1
    %3670 = vsyncpa [#allocation22], 1
    %3671 = vsyncpa [#allocation5], 1
    %s3672 = scalar_lea.sflag [#allocation5], 1
    %3673 = vsyncpa %s3672, 1

</llo_original>
